<compile_context>
chip_gen: v5e
topology: v5e:2x2
jax: 0.10.0
libtpu: 0.0.40
codegen_flags: <defaults>
</compile_context>

<pallas_src>
import functools

import numpy as np

import jax
import jax.numpy as jnp
from jax.experimental import pallas as pl
from jax.experimental.pallas import tpu as pltpu


# ----------------------------------------------------------------------------
# Synthetic model dimensions (lane-dense by construction)
# ----------------------------------------------------------------------------
B = 2                       # batch
C, H, W = 4, 16, 16         # image NCHW (PyTorch convention)
PATCH = 4
NP_TOK = (H // PATCH) * (W // PATCH)   # 16 modality tokens per sample
PFEAT = C * PATCH * PATCH              # 64 patch features
E = 128                     # encoder dim
D = 128                     # LLM hidden dim
FF = 256                    # MLP hidden
V = 128                     # vocab size
EPS = 1e-5

# special token ids (stand-ins for the tokenizer's bos/eos/role tokens)
BOS, EOS, NL, USER_TOK, SYS_TOK, ASST_TOK = 1, 2, 3, 4, 5, 6
SYS_START = (BOS, SYS_TOK)
USER_START = (BOS, USER_TOK)
ASST_START = (BOS, ASST_TOK)
END = (EOS, NL)
SYS_PROMPT = (10, 11, 12, 13)
# fixed row offset of the modality tokens inside every sequence
IMG_OFF = len(SYS_START) + len(SYS_PROMPT) + len(END) + len(USER_START)   # = 10


# ----------------------------------------------------------------------------
# Static (trace-time) sequence / label / mask assembly — numpy, zero runtime cost.
# Mirrors the reference's per-sample concat loop.
# ----------------------------------------------------------------------------
def _build_sequences(text_ids, instruction_ids):
    b = len(text_ids)
    seq_ids, labels, lengths = [], [], []
    for i in range(b):
        text = tuple(text_ids[i]) + (EOS,)            # text + decoded eos token
        ids = (SYS_START + SYS_PROMPT + END + USER_START
               + (EOS,) * NP_TOK                      # image rows: placeholder, kernel overwrites
               + END + USER_START + tuple(instruction_ids[i]) + END
               + ASST_START + text + END)
        L_i = len(ids)
        # label_sequence: -100 everywhere except the last len(text) positions
        lab = (-100,) * (L_i - len(text)) + text
        seq_ids.append(ids)
        labels.append(lab)
        lengths.append(L_i)

    max_len = max(lengths)
    Lp = ((max_len + 15) // 16) * 16                  # bf16-sublane-friendly pad
    ids_m = np.full((b, Lp), EOS, np.int32)           # pad with eos embedding, like the reference
    lab_m = np.full((b, Lp), -100, np.int32)
    mask_m = np.zeros((b, 1, Lp), np.float32)
    for i in range(b):
        ids_m[i, :lengths[i]] = seq_ids[i]
        lab_m[i, :lengths[i]] = labels[i]
        mask_m[i, 0, :lengths[i]] = 1.0

    # HF causal-LM shift: position t predicts label at t+1
    shifted = np.concatenate([lab_m[:, 1:], np.full((b, 1), -100, np.int32)], axis=1)
    valid = shifted != -100
    onehot = (shifted[:, :, None] == np.arange(V, dtype=np.int32)[None, None, :])
    onehot = (onehot & valid[:, :, None]).astype(np.float32)   # (B, Lp, V), lane-dense
    n_valid = float(valid.sum())
    return ids_m, onehot, mask_m, max_len, Lp, n_valid


# ----------------------------------------------------------------------------
# ONE fused kernel: vision encoder+tokenizer -> transformer layer -> LM head ->
# shifted cross-entropy partials.
# ----------------------------------------------------------------------------
def _fused_mm_kernel(p_ref, x_ref, mask_ref, oh_ref,
                     enc_w_ref, enc_b_ref, tok_w_ref, tok_b_ref,
                     ln1g_ref, ln1b_ref, wqkv_ref, bqkv_ref, wo_ref, bo_ref,
                     ln2g_ref, ln2b_ref, w1_ref, b1_ref, w2_ref, b2_ref,
                     lnfg_ref, lnfb_ref, lmw_ref, lmb_ref,
                     logits_ref, nll_ref, x_scr, *, scale):
    # ---- vision path: patch Linear+GELU fused with tokenizer Linear ----
    patches = p_ref[0].astype(jnp.bfloat16)                           # (NP_TOK, PFEAT)
    h_enc = jnp.dot(patches, enc_w_ref[...],
                    preferred_element_type=jnp.float32) + enc_b_ref[...]
    h_enc = jax.nn.gelu(h_enc)
    img_tok = jnp.dot(h_enc.astype(jnp.bfloat16), tok_w_ref[...],
                      preferred_element_type=jnp.float32) + tok_b_ref[...]   # (NP_TOK, D)

    # drop the modality tokens into their fixed rows of the sequence, in VMEM
    x_scr[...] = x_ref[0]                                              # (Lp, D) f32
    x_scr[pl.ds(IMG_OFF, NP_TOK), :] = img_tok
    x = x_scr[...]

    mask = mask_ref[0]                                                 # (1, Lp)
    L = x.shape[0]

    def ln(h, g_ref, b_ref):
        mu = jnp.mean(h, axis=-1, keepdims=True)
        d = h - mu
        var = jnp.mean(d * d, axis=-1, keepdims=True)
        return d * jax.lax.rsqrt(var + EPS) * g_ref[...] + b_ref[...]

    def mm(a, w_ref, b_ref):     # bf16 MXU inputs, f32 accumulation
        return jnp.dot(a.astype(jnp.bfloat16), w_ref[...],
                       preferred_element_type=jnp.float32) + b_ref[...]

    # ---- attention block (fused QKV projection) ----
    h = ln(x, ln1g_ref, ln1b_ref)
    qkv = mm(h, wqkv_ref, bqkv_ref)                                    # (L, 3D)
    q, k, v = qkv[:, :D], qkv[:, D:2 * D], qkv[:, 2 * D:]
    s = jax.lax.dot_general(q.astype(jnp.bfloat16), k.astype(jnp.bfloat16),
                            (((1,), (1,)), ((), ())),
                            preferred_element_type=jnp.float32) * scale   # (L, L)
    row = jax.lax.broadcasted_iota(jnp.int32, (L, L), 0)
    col = jax.lax.broadcasted_iota(jnp.int32, (L, L), 1)
    keep = jnp.logical_and(col <= row, mask > 0.5)
    s = jnp.where(keep, s, jnp.float32(-1e30))
    s = s - jnp.max(s, axis=-1, keepdims=True)
    p = jnp.exp(s)
    p = p * pl.reciprocal(jnp.sum(p, axis=-1, keepdims=True), approx=False)
    a = jnp.dot(p.astype(jnp.bfloat16), v.astype(jnp.bfloat16),
                preferred_element_type=jnp.float32)
    x = x + mm(a, wo_ref, bo_ref)

    # ---- MLP block ----
    h = ln(x, ln2g_ref, ln2b_ref)
    m = jax.nn.gelu(mm(h, w1_ref, b1_ref))
    x = x + mm(m, w2_ref, b2_ref)

    # ---- LM head ----
    hf = ln(x, lnfg_ref, lnfb_ref)
    logits = mm(hf, lmw_ref, lmb_ref)                                  # (L, V) lane-dense
    logits_ref[0] = logits

    # ---- fused shifted cross-entropy partial (ignore_index = -100) ----
    # oh_ref already encodes the one-hot target AND the valid mask (zero rows for
    # ignored positions), so a single lane-dense multiply-reduce gives the NLL sum.
    lmax = jnp.max(logits, axis=-1, keepdims=True)
    lse = lmax + jnp.log(jnp.sum(jnp.exp(logits - lmax), axis=-1, keepdims=True))
    nll_sum = jnp.sum(oh_ref[0] * (lse - logits))
    nll_ref[0] = jnp.broadcast_to(nll_sum, (1, 128)).astype(jnp.float32)


def fused_forward(params, patches, input_embeddings, mask, onehot, Lp):
    b = patches.shape[0]
    scale = 1.0 / (D ** 0.5)

    def rep2(shape):
        return pl.BlockSpec(shape, lambda i: (0, 0))

    in_specs = [
        pl.BlockSpec((1, NP_TOK, PFEAT), lambda i: (i, 0, 0)),   # patches
        pl.BlockSpec((1, Lp, D), lambda i: (i, 0, 0)),           # sequence embeddings
        pl.BlockSpec((1, 1, Lp), lambda i: (i, 0, 0)),           # attention mask (lane-dense)
        pl.BlockSpec((1, Lp, V), lambda i: (i, 0, 0)),           # shifted-label one-hot*valid
        rep2((PFEAT, E)), rep2((1, E)),          # encoder
        rep2((E, D)), rep2((1, D)),              # input tokenizer
        rep2((1, D)), rep2((1, D)),              # ln1 gamma/beta
        rep2((D, 3 * D)), rep2((1, 3 * D)),      # fused qkv
        rep2((D, D)), rep2((1, D)),              # o-proj
        rep2((1, D)), rep2((1, D)),              # ln2 gamma/beta
        rep2((D, FF)), rep2((1, FF)),            # mlp up
        rep2((FF, D)), rep2((1, D)),             # mlp down
        rep2((1, D)), rep2((1, D)),              # lnf gamma/beta
        rep2((D, V)), rep2((1, V)),              # lm head
    ]
    out_specs = (
        pl.BlockSpec((1, Lp, V), lambda i: (i, 0, 0)),
        pl.BlockSpec((1, 1, 128), lambda i: (i, 0, 0)),
    )
    logits, nll = pl.pallas_call(
        functools.partial(_fused_mm_kernel, scale=scale),
        out_shape=(jax.ShapeDtypeStruct((b, Lp, V), jnp.float32),
                   jax.ShapeDtypeStruct((b, 1, 128), jnp.float32)),
        grid=(b,),
        in_specs=in_specs,
        out_specs=out_specs,
        scratch_shapes=[pltpu.VMEM((Lp, D), jnp.float32)],
        compiler_params=pltpu.CompilerParams(dimension_semantics=("parallel",)),
    )(patches, input_embeddings, mask, onehot,
      params["enc_w"], params["enc_b"], params["tok_w"], params["tok_b"],
      params["ln1_g"], params["ln1_b"], params["w_qkv"], params["b_qkv"],
      params["wo"], params["bo"], params["ln2_g"], params["ln2_b"],
      params["w1"], params["b1"], params["w2"], params["b2"],
      params["lnf_g"], params["lnf_b"], params["lm_w"], params["lm_b"])
    return logits, nll


# ----------------------------------------------------------------------------
# Parameters (matmul weights stored bf16 for the MXU; biases/LN/embeddings f32)
# ----------------------------------------------------------------------------
def init_params(key):
    ks = jax.random.split(key, 10)
    s = 0.02

    def w(k, shape):
        return (s * jax.random.normal(k, shape, dtype=jnp.float32)).astype(jnp.bfloat16)

    def zeros(n):
        return jnp.zeros((1, n), jnp.float32)

    return dict(
        enc_w=w(ks[0], (PFEAT, E)), enc_b=zeros(E),
        tok_w=w(ks[1], (E, D)), tok_b=zeros(D),
        emb=s * jax.random.normal(ks[2], (V, D), dtype=jnp.float32),
        ln1_g=jnp.ones((1, D), jnp.float32), ln1_b=zeros(D),
        ln2_g=jnp.ones((1, D), jnp.float32), ln2_b=zeros(D),
        lnf_g=jnp.ones((1, D), jnp.float32), lnf_b=zeros(D),
        w_qkv=w(ks[3], (D, 3 * D)), b_qkv=zeros(3 * D),
        wo=w(ks[4], (D, D)), bo=zeros(D),
        w1=w(ks[5], (D, FF)), b1=zeros(FF),
        w2=w(ks[6], (FF, D)), b2=zeros(D),
        lm_w=w(ks[7], (D, V)), lm_b=zeros(V),
    )


# ----------------------------------------------------------------------------
# Full forward (mirrors MultiModalModel.forward), jitted with static token lists.
# Runtime glue is one embedding gather + one patchify reshape; everything else
# (sequence ids, labels one-hot, masks) is trace-time numpy constants.
# ----------------------------------------------------------------------------
@functools.partial(jax.jit, static_argnames=("text_ids", "instruction_ids"))
def multimodal_forward(params, images, text_ids, instruction_ids):
    b = images.shape[0]
    ids_m, onehot, mask_m, max_len, Lp, n_valid = _build_sequences(
        text_ids, instruction_ids)

    # input_processor: NCHW -> (B, NP_TOK, PFEAT) patches
    p = images.reshape(b, C, H // PATCH, PATCH, W // PATCH, PATCH)
    p = jnp.transpose(p, (0, 2, 4, 1, 3, 5)).reshape(b, NP_TOK, PFEAT)

    # single gather builds the whole padded sequence of embeddings; the image-token
    # rows hold a placeholder that the kernel overwrites in VMEM.
    input_embeddings = params["emb"][jnp.asarray(ids_m)]               # (B, Lp, D)

    logits, nll = fused_forward(params, p, input_embeddings,
                                jnp.asarray(mask_m), jnp.asarray(onehot), Lp)

    # mean NLL over valid (shifted label != -100) positions, like
    # nn.CrossEntropyLoss(ignore_index=-100); the denominator is static.
    loss = jnp.sum(nll[:, 0, 0]) / jnp.float32(max(n_valid, 1.0))
    return logits[:, :max_len, :], loss


# ----------------------------------------------------------------------------
if __name__ == "__main__":
    key = jax.random.PRNGKey(0)
    k_params, k_img = jax.random.split(key)
    params = init_params(k_params)

    images = jax.random.normal(k_img, (B, C, H, W), dtype=jnp.float32)  # NCHW like PyTorch
    # synthetic tokenizer output (static token-id tuples stand in for strings)
    # TODO(synk): real HF string tokenization has no Pallas equivalent; ids are synthetic.
    text_ids = ((20, 21, 22, 23, 24), (30, 31, 32))
    instruction_ids = ((40, 41, 42), (43, 44, 45))

    logits, loss = multimodal_forward(params, images, text_ids, instruction_ids)
    jax.block_until_ready((logits, loss))
    assert logits.ndim == 3 and logits.shape[0] == B and logits.shape[2] == V
    assert bool(jnp.isfinite(loss))
    print("KERNEL_OK")
</pallas_src>

<mosaic_0001>
module attributes {stable_mosaic.version = 11 : i64} {
  func.func @_fused_mm_kernel(%arg0: i32, %arg1: memref<1x16x64xf32, #tpu.memory_space<vmem>>, %arg2: memref<1x48x128xf32, #tpu.memory_space<vmem>>, %arg3: memref<1x1x48xf32, #tpu.memory_space<vmem>>, %arg4: memref<1x48x128xf32, #tpu.memory_space<vmem>>, %arg5: memref<64x128xbf16, #tpu.memory_space<vmem>>, %arg6: memref<1x128xf32, #tpu.memory_space<vmem>>, %arg7: memref<128x128xbf16, #tpu.memory_space<vmem>>, %arg8: memref<1x128xf32, #tpu.memory_space<vmem>>, %arg9: memref<1x128xf32, #tpu.memory_space<vmem>>, %arg10: memref<1x128xf32, #tpu.memory_space<vmem>>, %arg11: memref<128x384xbf16, #tpu.memory_space<vmem>>, %arg12: memref<1x384xf32, #tpu.memory_space<vmem>>, %arg13: memref<128x128xbf16, #tpu.memory_space<vmem>>, %arg14: memref<1x128xf32, #tpu.memory_space<vmem>>, %arg15: memref<1x128xf32, #tpu.memory_space<vmem>>, %arg16: memref<1x128xf32, #tpu.memory_space<vmem>>, %arg17: memref<128x256xbf16, #tpu.memory_space<vmem>>, %arg18: memref<1x256xf32, #tpu.memory_space<vmem>>, %arg19: memref<256x128xbf16, #tpu.memory_space<vmem>>, %arg20: memref<1x128xf32, #tpu.memory_space<vmem>>, %arg21: memref<1x128xf32, #tpu.memory_space<vmem>>, %arg22: memref<1x128xf32, #tpu.memory_space<vmem>>, %arg23: memref<128x128xbf16, #tpu.memory_space<vmem>>, %arg24: memref<1x128xf32, #tpu.memory_space<vmem>>, %arg25: memref<1x48x128xf32, #tpu.memory_space<vmem>>, %arg26: memref<1x1x128xf32, #tpu.memory_space<vmem>>, %arg27: memref<48x128xf32, #tpu.memory_space<vmem>>) attributes {dimension_semantics = [#tpu.dimension_semantics<parallel>], iteration_bounds = array<i64: 2>, scalar_prefetch = 0 : i64, scratch_operands = 1 : i64, tpu.core_type = #tpu.core_type<tc>, window_params = [{transform_indices = @transform_0, window_bounds = array<i64: 1, 16, 64>}, {transform_indices = @transform_1, window_bounds = array<i64: 1, 48, 128>}, {transform_indices = @transform_2, window_bounds = array<i64: 1, 1, 48>}, {transform_indices = @transform_3, window_bounds = array<i64: 1, 48, 128>}, {pipeline_mode = #tpu.pipeline_mode<synchronous>, transform_indices = @transform_4, window_bounds = array<i64: 64, 128>}, {pipeline_mode = #tpu.pipeline_mode<synchronous>, transform_indices = @transform_5, window_bounds = array<i64: 1, 128>}, {pipeline_mode = #tpu.pipeline_mode<synchronous>, transform_indices = @transform_6, window_bounds = array<i64: 128, 128>}, {pipeline_mode = #tpu.pipeline_mode<synchronous>, transform_indices = @transform_7, window_bounds = array<i64: 1, 128>}, {pipeline_mode = #tpu.pipeline_mode<synchronous>, transform_indices = @transform_8, window_bounds = array<i64: 1, 128>}, {pipeline_mode = #tpu.pipeline_mode<synchronous>, transform_indices = @transform_9, window_bounds = array<i64: 1, 128>}, {pipeline_mode = #tpu.pipeline_mode<synchronous>, transform_indices = @transform_10, window_bounds = array<i64: 128, 384>}, {pipeline_mode = #tpu.pipeline_mode<synchronous>, transform_indices = @transform_11, window_bounds = array<i64: 1, 384>}, {pipeline_mode = #tpu.pipeline_mode<synchronous>, transform_indices = @transform_12, window_bounds = array<i64: 128, 128>}, {pipeline_mode = #tpu.pipeline_mode<synchronous>, transform_indices = @transform_13, window_bounds = array<i64: 1, 128>}, {pipeline_mode = #tpu.pipeline_mode<synchronous>, transform_indices = @transform_14, window_bounds = array<i64: 1, 128>}, {pipeline_mode = #tpu.pipeline_mode<synchronous>, transform_indices = @transform_15, window_bounds = array<i64: 1, 128>}, {pipeline_mode = #tpu.pipeline_mode<synchronous>, transform_indices = @transform_16, window_bounds = array<i64: 128, 256>}, {pipeline_mode = #tpu.pipeline_mode<synchronous>, transform_indices = @transform_17, window_bounds = array<i64: 1, 256>}, {pipeline_mode = #tpu.pipeline_mode<synchronous>, transform_indices = @transform_18, window_bounds = array<i64: 256, 128>}, {pipeline_mode = #tpu.pipeline_mode<synchronous>, transform_indices = @transform_19, window_bounds = array<i64: 1, 128>}, {pipeline_mode = #tpu.pipeline_mode<synchronous>, transform_indices = @transform_20, window_bounds = array<i64: 1, 128>}, {pipeline_mode = #tpu.pipeline_mode<synchronous>, transform_indices = @transform_21, window_bounds = array<i64: 1, 128>}, {pipeline_mode = #tpu.pipeline_mode<synchronous>, transform_indices = @transform_22, window_bounds = array<i64: 128, 128>}, {pipeline_mode = #tpu.pipeline_mode<synchronous>, transform_indices = @transform_23, window_bounds = array<i64: 1, 128>}, {transform_indices = @transform_24, window_bounds = array<i64: 1, 48, 128>}, {transform_indices = @transform_25, window_bounds = array<i64: 1, 1, 128>}]} {
    %c0 = arith.constant 0 : index
    %c0_0 = arith.constant 0 : index
    %c0_1 = arith.constant 0 : index
    %0 = vector.load %arg1[%c0, %c0_0, %c0_1] : memref<1x16x64xf32, #tpu.memory_space<vmem>>, vector<1x16x64xf32>
    %1 = vector.shape_cast %0 : vector<1x16x64xf32> to vector<16x64xf32>
    %2 = arith.truncf %1 : vector<16x64xf32> to vector<16x64xbf16>
    %c0_2 = arith.constant 0 : index
    %c0_3 = arith.constant 0 : index
    %3 = vector.load %arg5[%c0_2, %c0_3] : memref<64x128xbf16, #tpu.memory_space<vmem>>, vector<64x128xbf16>
    %cst = arith.constant dense<0.000000e+00> : vector<16x128xf32>
    %4 = tpu.matmul %2, %3, %cst {dimension_numbers = #tpu.dot_dimension_numbers<[1], [0], [0], [1], [0, 0, 1, 1], [], []>} : vector<16x64xbf16>, vector<64x128xbf16>, vector<16x128xf32> -> vector<16x128xf32>
    %c0_4 = arith.constant 0 : index
    %c0_5 = arith.constant 0 : index
    %5 = vector.load %arg6[%c0_4, %c0_5] : memref<1x128xf32, #tpu.memory_space<vmem>>, vector<1x128xf32>
    %6 = vector.broadcast %5 : vector<1x128xf32> to vector<16x128xf32>
    %7 = arith.addf %4, %6 : vector<16x128xf32>
    %8 = arith.mulf %7, %7 : vector<16x128xf32>
    %9 = arith.mulf %7, %8 : vector<16x128xf32>
    %cst_6 = arith.constant 4.471500e-02 : f32
    %10 = vector.broadcast %cst_6 : f32 to vector<16x128xf32>
    %11 = arith.mulf %10, %9 : vector<16x128xf32>
    %12 = arith.addf %7, %11 : vector<16x128xf32>
    %cst_7 = arith.constant 0.797884583 : f32
    %13 = vector.broadcast %cst_7 : f32 to vector<16x128xf32>
    %14 = arith.mulf %13, %12 : vector<16x128xf32>
    %15 = math.tanh %14 : vector<16x128xf32>
    %cst_8 = arith.constant 1.000000e+00 : f32
    %16 = vector.broadcast %cst_8 : f32 to vector<16x128xf32>
    %17 = arith.addf %16, %15 : vector<16x128xf32>
    %cst_9 = arith.constant 5.000000e-01 : f32
    %18 = vector.broadcast %cst_9 : f32 to vector<16x128xf32>
    %19 = arith.mulf %18, %17 : vector<16x128xf32>
    %20 = arith.mulf %7, %19 : vector<16x128xf32>
    %21 = arith.truncf %20 : vector<16x128xf32> to vector<16x128xbf16>
    %c0_10 = arith.constant 0 : index
    %c0_11 = arith.constant 0 : index
    %22 = vector.load %arg7[%c0_10, %c0_11] : memref<128x128xbf16, #tpu.memory_space<vmem>>, vector<128x128xbf16>
    %cst_12 = arith.constant dense<0.000000e+00> : vector<16x128xf32>
    %23 = tpu.matmul %21, %22, %cst_12 {dimension_numbers = #tpu.dot_dimension_numbers<[1], [0], [0], [1], [0, 0, 1, 1], [], []>} : vector<16x128xbf16>, vector<128x128xbf16>, vector<16x128xf32> -> vector<16x128xf32>
    %c0_13 = arith.constant 0 : index
    %c0_14 = arith.constant 0 : index
    %24 = vector.load %arg8[%c0_13, %c0_14] : memref<1x128xf32, #tpu.memory_space<vmem>>, vector<1x128xf32>
    %25 = vector.broadcast %24 : vector<1x128xf32> to vector<16x128xf32>
    %26 = arith.addf %23, %25 : vector<16x128xf32>
    %c0_15 = arith.constant 0 : index
    %c0_16 = arith.constant 0 : index
    %c0_17 = arith.constant 0 : index
    %27 = vector.load %arg2[%c0_15, %c0_16, %c0_17] : memref<1x48x128xf32, #tpu.memory_space<vmem>>, vector<1x48x128xf32>
    %28 = vector.shape_cast %27 : vector<1x48x128xf32> to vector<48x128xf32>
    %c0_18 = arith.constant 0 : index
    %c0_19 = arith.constant 0 : index
    %29 = vector.load %arg27[%c0_18, %c0_19] : memref<48x128xf32, #tpu.memory_space<vmem>>, vector<48x128xf32>
    tpu.vector_store %arg27[%c0_18, %c0_19], %28 {strides = array<i32>} : memref<48x128xf32, #tpu.memory_space<vmem>>, vector<48x128xf32>,
    %c10 = arith.constant 10 : index
    %c0_20 = arith.constant 0 : index
    %30 = vector.load %arg27[%c10, %c0_20] : memref<48x128xf32, #tpu.memory_space<vmem>>, vector<16x128xf32>
    tpu.vector_store %arg27[%c10, %c0_20], %26 {strides = array<i32>} : memref<48x128xf32, #tpu.memory_space<vmem>>, vector<16x128xf32>,
    %c0_21 = arith.constant 0 : index
    %c0_22 = arith.constant 0 : index
    %31 = vector.load %arg27[%c0_21, %c0_22] : memref<48x128xf32, #tpu.memory_space<vmem>>, vector<48x128xf32>
    %c0_23 = arith.constant 0 : index
    %c0_24 = arith.constant 0 : index
    %c0_25 = arith.constant 0 : index
    %32 = vector.load %arg3[%c0_23, %c0_24, %c0_25] : memref<1x1x48xf32, #tpu.memory_space<vmem>>, vector<1x1x48xf32>
    %33 = vector.shape_cast %32 : vector<1x1x48xf32> to vector<1x48xf32>
    %cst_26 = arith.constant dense<0.000000e+00> : vector<48xf32>
    %34 = vector.multi_reduction <add>, %31, %cst_26 [1] : vector<48x128xf32> to vector<48xf32>
    %35 = vector.shape_cast %34 : vector<48xf32> to vector<48x1xf32>
    %cst_27 = arith.constant 1.280000e+02 : f32
    %36 = vector.broadcast %cst_27 : f32 to vector<48x1xf32>
    %37 = arith.divf %35, %36 : vector<48x1xf32>
    %38 = vector.broadcast %37 : vector<48x1xf32> to vector<48x128xf32>
    %39 = arith.subf %31, %38 : vector<48x128xf32>
    %40 = arith.mulf %39, %39 : vector<48x128xf32>
    %cst_28 = arith.constant dense<0.000000e+00> : vector<48xf32>
    %41 = vector.multi_reduction <add>, %40, %cst_28 [1] : vector<48x128xf32> to vector<48xf32>
    %42 = vector.shape_cast %41 : vector<48xf32> to vector<48x1xf32>
    %cst_29 = arith.constant 1.280000e+02 : f32
    %43 = vector.broadcast %cst_29 : f32 to vector<48x1xf32>
    %44 = arith.divf %42, %43 : vector<48x1xf32>
    %cst_30 = arith.constant 9.99999974E-6 : f32
    %45 = vector.broadcast %cst_30 : f32 to vector<48x1xf32>
    %46 = arith.addf %44, %45 : vector<48x1xf32>
    %47 = math.rsqrt %46 : vector<48x1xf32>
    %48 = vector.broadcast %47 : vector<48x1xf32> to vector<48x128xf32>
    %49 = arith.mulf %39, %48 : vector<48x128xf32>
    %c0_31 = arith.constant 0 : index
    %c0_32 = arith.constant 0 : index
    %50 = vector.load %arg9[%c0_31, %c0_32] : memref<1x128xf32, #tpu.memory_space<vmem>>, vector<1x128xf32>
    %51 = vector.broadcast %50 : vector<1x128xf32> to vector<48x128xf32>
    %52 = arith.mulf %49, %51 : vector<48x128xf32>
    %c0_33 = arith.constant 0 : index
    %c0_34 = arith.constant 0 : index
    %53 = vector.load %arg10[%c0_33, %c0_34] : memref<1x128xf32, #tpu.memory_space<vmem>>, vector<1x128xf32>
    %54 = vector.broadcast %53 : vector<1x128xf32> to vector<48x128xf32>
    %55 = arith.addf %52, %54 : vector<48x128xf32>
    %56 = arith.truncf %55 : vector<48x128xf32> to vector<48x128xbf16>
    %c0_35 = arith.constant 0 : index
    %c0_36 = arith.constant 0 : index
    %57 = vector.load %arg11[%c0_35, %c0_36] : memref<128x384xbf16, #tpu.memory_space<vmem>>, vector<128x384xbf16>
    %cst_37 = arith.constant dense<0.000000e+00> : vector<48x384xf32>
    %58 = tpu.matmul %56, %57, %cst_37 {dimension_numbers = #tpu.dot_dimension_numbers<[1], [0], [0], [1], [0, 0, 1, 1], [], []>} : vector<48x128xbf16>, vector<128x384xbf16>, vector<48x384xf32> -> vector<48x384xf32>
    %c0_38 = arith.constant 0 : index
    %c0_39 = arith.constant 0 : index
    %59 = vector.load %arg12[%c0_38, %c0_39] : memref<1x384xf32, #tpu.memory_space<vmem>>, vector<1x384xf32>
    %60 = vector.broadcast %59 : vector<1x384xf32> to vector<48x384xf32>
    %61 = arith.addf %58, %60 : vector<48x384xf32>
    %62 = vector.extract_strided_slice %61 {offsets = [0, 0], sizes = [48, 128], strides = [1, 1]} : vector<48x384xf32> to vector<48x128xf32>
    %63 = vector.extract_strided_slice %61 {offsets = [0, 128], sizes = [48, 128], strides = [1, 1]} : vector<48x384xf32> to vector<48x128xf32>
    %64 = vector.extract_strided_slice %61 {offsets = [0, 256], sizes = [48, 128], strides = [1, 1]} : vector<48x384xf32> to vector<48x128xf32>
    %65 = arith.truncf %62 : vector<48x128xf32> to vector<48x128xbf16>
    %66 = arith.truncf %63 : vector<48x128xf32> to vector<48x128xbf16>
    %cst_40 = arith.constant dense<0.000000e+00> : vector<48x48xf32>
    %67 = tpu.matmul %65, %66, %cst_40 {dimension_numbers = #tpu.dot_dimension_numbers<[1], [1], [0], [0], [0, 0, 1, 0], [], []>} : vector<48x128xbf16>, vector<48x128xbf16>, vector<48x48xf32> -> vector<48x48xf32>
    %cst_41 = arith.constant 0.0883883461 : f32
    %68 = vector.broadcast %cst_41 : f32 to vector<48x48xf32>
    %69 = arith.mulf %67, %68 : vector<48x48xf32>
    %70 = tpu.iota {dimensions = array<i32: 0>} : vector<48x48xi32>
    %71 = tpu.iota {dimensions = array<i32: 1>} : vector<48x48xi32>
    %72 = arith.cmpi sle, %71, %70 : vector<48x48xi32>
    %cst_42 = arith.constant 5.000000e-01 : f32
    %73 = vector.broadcast %cst_42 : f32 to vector<1x48xf32>
    %74 = arith.cmpf ogt, %33, %73 : vector<1x48xf32>
    %75 = vector.broadcast %74 : vector<1x48xi1> to vector<48x48xi1>
    %76 = arith.andi %72, %75 : vector<48x48xi1>
    %cst_43 = arith.constant -1.000000e+30 : f32
    %77 = vector.broadcast %cst_43 : f32 to vector<48x48xf32>
    %78 = arith.select %76, %69, %77 : vector<48x48xi1>, vector<48x48xf32>
    %cst_44 = arith.constant dense<0xFF800000> : vector<48xf32>
    %79 = vector.multi_reduction <maximumf>, %78, %cst_44 [1] : vector<48x48xf32> to vector<48xf32>
    %80 = vector.shape_cast %79 : vector<48xf32> to vector<48x1xf32>
    %81 = vector.broadcast %80 : vector<48x1xf32> to vector<48x48xf32>
    %82 = arith.subf %78, %81 : vector<48x48xf32>
    %83 = math.exp %82 : vector<48x48xf32>
    %cst_45 = arith.constant dense<0.000000e+00> : vector<48xf32>
    %84 = vector.multi_reduction <add>, %83, %cst_45 [1] : vector<48x48xf32> to vector<48xf32>
    %85 = vector.shape_cast %84 : vector<48xf32> to vector<48x1xf32>
    %86 = tpu.reciprocal %85 : vector<48x1xf32> -> vector<48x1xf32>
    %87 = vector.broadcast %86 : vector<48x1xf32> to vector<48x48xf32>
    %88 = arith.mulf %83, %87 : vector<48x48xf32>
    %89 = arith.truncf %88 : vector<48x48xf32> to vector<48x48xbf16>
    %90 = arith.truncf %64 : vector<48x128xf32> to vector<48x128xbf16>
    %cst_46 = arith.constant dense<0.000000e+00> : vector<48x128xf32>
    %91 = tpu.matmul %89, %90, %cst_46 {dimension_numbers = #tpu.dot_dimension_numbers<[1], [0], [0], [1], [0, 0, 1, 1], [], []>} : vector<48x48xbf16>, vector<48x128xbf16>, vector<48x128xf32> -> vector<48x128xf32>
    %92 = arith.truncf %91 : vector<48x128xf32> to vector<48x128xbf16>
    %c0_47 = arith.constant 0 : index
    %c0_48 = arith.constant 0 : index
    %93 = vector.load %arg13[%c0_47, %c0_48] : memref<128x128xbf16, #tpu.memory_space<vmem>>, vector<128x128xbf16>
    %cst_49 = arith.constant dense<0.000000e+00> : vector<48x128xf32>
    %94 = tpu.matmul %92, %93, %cst_49 {dimension_numbers = #tpu.dot_dimension_numbers<[1], [0], [0], [1], [0, 0, 1, 1], [], []>} : vector<48x128xbf16>, vector<128x128xbf16>, vector<48x128xf32> -> vector<48x128xf32>
    %c0_50 = arith.constant 0 : index
    %c0_51 = arith.constant 0 : index
    %95 = vector.load %arg14[%c0_50, %c0_51] : memref<1x128xf32, #tpu.memory_space<vmem>>, vector<1x128xf32>
    %96 = vector.broadcast %95 : vector<1x128xf32> to vector<48x128xf32>
    %97 = arith.addf %94, %96 : vector<48x128xf32>
    %98 = arith.addf %31, %97 : vector<48x128xf32>
    %cst_52 = arith.constant dense<0.000000e+00> : vector<48xf32>
    %99 = vector.multi_reduction <add>, %98, %cst_52 [1] : vector<48x128xf32> to vector<48xf32>
    %100 = vector.shape_cast %99 : vector<48xf32> to vector<48x1xf32>
    %cst_53 = arith.constant 1.280000e+02 : f32
    %101 = vector.broadcast %cst_53 : f32 to vector<48x1xf32>
    %102 = arith.divf %100, %101 : vector<48x1xf32>
    %103 = vector.broadcast %102 : vector<48x1xf32> to vector<48x128xf32>
    %104 = arith.subf %98, %103 : vector<48x128xf32>
    %105 = arith.mulf %104, %104 : vector<48x128xf32>
    %cst_54 = arith.constant dense<0.000000e+00> : vector<48xf32>
    %106 = vector.multi_reduction <add>, %105, %cst_54 [1] : vector<48x128xf32> to vector<48xf32>
    %107 = vector.shape_cast %106 : vector<48xf32> to vector<48x1xf32>
    %cst_55 = arith.constant 1.280000e+02 : f32
    %108 = vector.broadcast %cst_55 : f32 to vector<48x1xf32>
    %109 = arith.divf %107, %108 : vector<48x1xf32>
    %cst_56 = arith.constant 9.99999974E-6 : f32
    %110 = vector.broadcast %cst_56 : f32 to vector<48x1xf32>
    %111 = arith.addf %109, %110 : vector<48x1xf32>
    %112 = math.rsqrt %111 : vector<48x1xf32>
    %113 = vector.broadcast %112 : vector<48x1xf32> to vector<48x128xf32>
    %114 = arith.mulf %104, %113 : vector<48x128xf32>
    %c0_57 = arith.constant 0 : index
    %c0_58 = arith.constant 0 : index
    %115 = vector.load %arg15[%c0_57, %c0_58] : memref<1x128xf32, #tpu.memory_space<vmem>>, vector<1x128xf32>
    %116 = vector.broadcast %115 : vector<1x128xf32> to vector<48x128xf32>
    %117 = arith.mulf %114, %116 : vector<48x128xf32>
    %c0_59 = arith.constant 0 : index
    %c0_60 = arith.constant 0 : index
    %118 = vector.load %arg16[%c0_59, %c0_60] : memref<1x128xf32, #tpu.memory_space<vmem>>, vector<1x128xf32>
    %119 = vector.broadcast %118 : vector<1x128xf32> to vector<48x128xf32>
    %120 = arith.addf %117, %119 : vector<48x128xf32>
    %121 = arith.truncf %120 : vector<48x128xf32> to vector<48x128xbf16>
    %c0_61 = arith.constant 0 : index
    %c0_62 = arith.constant 0 : index
    %122 = vector.load %arg17[%c0_61, %c0_62] : memref<128x256xbf16, #tpu.memory_space<vmem>>, vector<128x256xbf16>
    %cst_63 = arith.constant dense<0.000000e+00> : vector<48x256xf32>
    %123 = tpu.matmul %121, %122, %cst_63 {dimension_numbers = #tpu.dot_dimension_numbers<[1], [0], [0], [1], [0, 0, 1, 1], [], []>} : vector<48x128xbf16>, vector<128x256xbf16>, vector<48x256xf32> -> vector<48x256xf32>
    %c0_64 = arith.constant 0 : index
    %c0_65 = arith.constant 0 : index
    %124 = vector.load %arg18[%c0_64, %c0_65] : memref<1x256xf32, #tpu.memory_space<vmem>>, vector<1x256xf32>
    %125 = vector.broadcast %124 : vector<1x256xf32> to vector<48x256xf32>
    %126 = arith.addf %123, %125 : vector<48x256xf32>
    %127 = arith.mulf %126, %126 : vector<48x256xf32>
    %128 = arith.mulf %126, %127 : vector<48x256xf32>
    %cst_66 = arith.constant 4.471500e-02 : f32
    %129 = vector.broadcast %cst_66 : f32 to vector<48x256xf32>
    %130 = arith.mulf %129, %128 : vector<48x256xf32>
    %131 = arith.addf %126, %130 : vector<48x256xf32>
    %cst_67 = arith.constant 0.797884583 : f32
    %132 = vector.broadcast %cst_67 : f32 to vector<48x256xf32>
    %133 = arith.mulf %132, %131 : vector<48x256xf32>
    %134 = math.tanh %133 : vector<48x256xf32>
    %cst_68 = arith.constant 1.000000e+00 : f32
    %135 = vector.broadcast %cst_68 : f32 to vector<48x256xf32>
    %136 = arith.addf %135, %134 : vector<48x256xf32>
    %cst_69 = arith.constant 5.000000e-01 : f32
    %137 = vector.broadcast %cst_69 : f32 to vector<48x256xf32>
    %138 = arith.mulf %137, %136 : vector<48x256xf32>
    %139 = arith.mulf %126, %138 : vector<48x256xf32>
    %140 = arith.truncf %139 : vector<48x256xf32> to vector<48x256xbf16>
    %c0_70 = arith.constant 0 : index
    %c0_71 = arith.constant 0 : index
    %141 = vector.load %arg19[%c0_70, %c0_71] : memref<256x128xbf16, #tpu.memory_space<vmem>>, vector<256x128xbf16>
    %cst_72 = arith.constant dense<0.000000e+00> : vector<48x128xf32>
    %142 = tpu.matmul %140, %141, %cst_72 {dimension_numbers = #tpu.dot_dimension_numbers<[1], [0], [0], [1], [0, 0, 1, 1], [], []>} : vector<48x256xbf16>, vector<256x128xbf16>, vector<48x128xf32> -> vector<48x128xf32>
    %c0_73 = arith.constant 0 : index
    %c0_74 = arith.constant 0 : index
    %143 = vector.load %arg20[%c0_73, %c0_74] : memref<1x128xf32, #tpu.memory_space<vmem>>, vector<1x128xf32>
    %144 = vector.broadcast %143 : vector<1x128xf32> to vector<48x128xf32>
    %145 = arith.addf %142, %144 : vector<48x128xf32>
    %146 = arith.addf %98, %145 : vector<48x128xf32>
    %cst_75 = arith.constant dense<0.000000e+00> : vector<48xf32>
    %147 = vector.multi_reduction <add>, %146, %cst_75 [1] : vector<48x128xf32> to vector<48xf32>
    %148 = vector.shape_cast %147 : vector<48xf32> to vector<48x1xf32>
    %cst_76 = arith.constant 1.280000e+02 : f32
    %149 = vector.broadcast %cst_76 : f32 to vector<48x1xf32>
    %150 = arith.divf %148, %149 : vector<48x1xf32>
    %151 = vector.broadcast %150 : vector<48x1xf32> to vector<48x128xf32>
    %152 = arith.subf %146, %151 : vector<48x128xf32>
    %153 = arith.mulf %152, %152 : vector<48x128xf32>
    %cst_77 = arith.constant dense<0.000000e+00> : vector<48xf32>
    %154 = vector.multi_reduction <add>, %153, %cst_77 [1] : vector<48x128xf32> to vector<48xf32>
    %155 = vector.shape_cast %154 : vector<48xf32> to vector<48x1xf32>
    %cst_78 = arith.constant 1.280000e+02 : f32
    %156 = vector.broadcast %cst_78 : f32 to vector<48x1xf32>
    %157 = arith.divf %155, %156 : vector<48x1xf32>
    %cst_79 = arith.constant 9.99999974E-6 : f32
    %158 = vector.broadcast %cst_79 : f32 to vector<48x1xf32>
    %159 = arith.addf %157, %158 : vector<48x1xf32>
    %160 = math.rsqrt %159 : vector<48x1xf32>
    %161 = vector.broadcast %160 : vector<48x1xf32> to vector<48x128xf32>
    %162 = arith.mulf %152, %161 : vector<48x128xf32>
    %c0_80 = arith.constant 0 : index
    %c0_81 = arith.constant 0 : index
    %163 = vector.load %arg21[%c0_80, %c0_81] : memref<1x128xf32, #tpu.memory_space<vmem>>, vector<1x128xf32>
    %164 = vector.broadcast %163 : vector<1x128xf32> to vector<48x128xf32>
    %165 = arith.mulf %162, %164 : vector<48x128xf32>
    %c0_82 = arith.constant 0 : index
    %c0_83 = arith.constant 0 : index
    %166 = vector.load %arg22[%c0_82, %c0_83] : memref<1x128xf32, #tpu.memory_space<vmem>>, vector<1x128xf32>
    %167 = vector.broadcast %166 : vector<1x128xf32> to vector<48x128xf32>
    %168 = arith.addf %165, %167 : vector<48x128xf32>
    %169 = arith.truncf %168 : vector<48x128xf32> to vector<48x128xbf16>
    %c0_84 = arith.constant 0 : index
    %c0_85 = arith.constant 0 : index
    %170 = vector.load %arg23[%c0_84, %c0_85] : memref<128x128xbf16, #tpu.memory_space<vmem>>, vector<128x128xbf16>
    %cst_86 = arith.constant dense<0.000000e+00> : vector<48x128xf32>
    %171 = tpu.matmul %169, %170, %cst_86 {dimension_numbers = #tpu.dot_dimension_numbers<[1], [0], [0], [1], [0, 0, 1, 1], [], []>} : vector<48x128xbf16>, vector<128x128xbf16>, vector<48x128xf32> -> vector<48x128xf32>
    %c0_87 = arith.constant 0 : index
    %c0_88 = arith.constant 0 : index
    %172 = vector.load %arg24[%c0_87, %c0_88] : memref<1x128xf32, #tpu.memory_space<vmem>>, vector<1x128xf32>
    %173 = vector.broadcast %172 : vector<1x128xf32> to vector<48x128xf32>
    %174 = arith.addf %171, %173 : vector<48x128xf32>
    %c0_89 = arith.constant 0 : index
    %c0_90 = arith.constant 0 : index
    %c0_91 = arith.constant 0 : index
    %175 = vector.load %arg25[%c0_89, %c0_90, %c0_91] : memref<1x48x128xf32, #tpu.memory_space<vmem>>, vector<1x48x128xf32>
    %176 = vector.shape_cast %175 : vector<1x48x128xf32> to vector<48x128xf32>
    %177 = vector.shape_cast %174 : vector<48x128xf32> to vector<1x48x128xf32>
    tpu.vector_store %arg25[%c0_89, %c0_90, %c0_91], %177 {strides = array<i32>} : memref<1x48x128xf32, #tpu.memory_space<vmem>>, vector<1x48x128xf32>,
    %cst_92 = arith.constant dense<0xFF800000> : vector<48xf32>
    %178 = vector.multi_reduction <maximumf>, %174, %cst_92 [1] : vector<48x128xf32> to vector<48xf32>
    %179 = vector.shape_cast %178 : vector<48xf32> to vector<48x1xf32>
    %180 = vector.broadcast %179 : vector<48x1xf32> to vector<48x128xf32>
    %181 = arith.subf %174, %180 : vector<48x128xf32>
    %182 = math.exp %181 : vector<48x128xf32>
    %cst_93 = arith.constant dense<0.000000e+00> : vector<48xf32>
    %183 = vector.multi_reduction <add>, %182, %cst_93 [1] : vector<48x128xf32> to vector<48xf32>
    %184 = vector.shape_cast %183 : vector<48xf32> to vector<48x1xf32>
    %185 = math.log %184 : vector<48x1xf32>
    %186 = arith.addf %179, %185 : vector<48x1xf32>
    %c0_94 = arith.constant 0 : index
    %c0_95 = arith.constant 0 : index
    %c0_96 = arith.constant 0 : index
    %187 = vector.load %arg4[%c0_94, %c0_95, %c0_96] : memref<1x48x128xf32, #tpu.memory_space<vmem>>, vector<1x48x128xf32>
    %188 = vector.shape_cast %187 : vector<1x48x128xf32> to vector<48x128xf32>
    %189 = vector.broadcast %186 : vector<48x1xf32> to vector<48x128xf32>
    %190 = arith.subf %189, %174 : vector<48x128xf32>
    %191 = arith.mulf %188, %190 : vector<48x128xf32>
    %192 = vector.shape_cast %191 : vector<48x128xf32> to vector<1x48x128xf32>
    %cst_97 = arith.constant dense<0.000000e+00> : vector<1xf32>
    %193 = vector.multi_reduction <add>, %192, %cst_97 [1, 2] : vector<1x48x128xf32> to vector<1xf32>
    %194 = vector.shape_cast %193 : vector<1xf32> to vector<1x1x1xf32>
    %195 = vector.extract %194[0, 0, 0] : f32 from vector<1x1x1xf32>
    %196 = vector.broadcast %195 : f32 to vector<1x128xf32>
    %c0_98 = arith.constant 0 : index
    %c0_99 = arith.constant 0 : index
    %c0_100 = arith.constant 0 : index
    %197 = vector.load %arg26[%c0_98, %c0_99, %c0_100] : memref<1x1x128xf32, #tpu.memory_space<vmem>>, vector<1x1x128xf32>
    %198 = vector.shape_cast %197 : vector<1x1x128xf32> to vector<1x128xf32>
    %199 = vector.shape_cast %196 : vector<1x128xf32> to vector<1x1x128xf32>
    tpu.vector_store %arg26[%c0_98, %c0_99, %c0_100], %199 {strides = array<i32>} : memref<1x1x128xf32, #tpu.memory_space<vmem>>, vector<1x1x128xf32>,
    return
  }
  func.func @transform_0(%arg0: i32) -> (i32, i32, i32) {
    %c0_i32 = arith.constant 0 : i32
    %c0_i32_0 = arith.constant 0 : i32
    %c0_i32_1 = arith.constant 0 : i32
    return %arg0, %c0_i32, %c0_i32_0 : i32, i32, i32
  }
  func.func @transform_1(%arg0: i32) -> (i32, i32, i32) {
    %c0_i32 = arith.constant 0 : i32
    %c0_i32_0 = arith.constant 0 : i32
    %c0_i32_1 = arith.constant 0 : i32
    return %arg0, %c0_i32, %c0_i32_0 : i32, i32, i32
  }
  func.func @transform_2(%arg0: i32) -> (i32, i32, i32) {
    %c0_i32 = arith.constant 0 : i32
    %c0_i32_0 = arith.constant 0 : i32
    %c0_i32_1 = arith.constant 0 : i32
    return %arg0, %c0_i32, %c0_i32_0 : i32, i32, i32
  }
  func.func @transform_3(%arg0: i32) -> (i32, i32, i32) {
    %c0_i32 = arith.constant 0 : i32
    %c0_i32_0 = arith.constant 0 : i32
    %c0_i32_1 = arith.constant 0 : i32
    return %arg0, %c0_i32, %c0_i32_0 : i32, i32, i32
  }
  func.func @transform_4(%arg0: i32) -> (i32, i32) {
    %c0_i32 = arith.constant 0 : i32
    %c0_i32_0 = arith.constant 0 : i32
    %c0_i32_1 = arith.constant 0 : i32
    return %c0_i32, %c0_i32_0 : i32, i32
  }
  func.func @transform_5(%arg0: i32) -> (i32, i32) {
    %c0_i32 = arith.constant 0 : i32
    %c0_i32_0 = arith.constant 0 : i32
    %c0_i32_1 = arith.constant 0 : i32
    return %c0_i32, %c0_i32_0 : i32, i32
  }
  func.func @transform_6(%arg0: i32) -> (i32, i32) {
    %c0_i32 = arith.constant 0 : i32
    %c0_i32_0 = arith.constant 0 : i32
    %c0_i32_1 = arith.constant 0 : i32
    return %c0_i32, %c0_i32_0 : i32, i32
  }
  func.func @transform_7(%arg0: i32) -> (i32, i32) {
    %c0_i32 = arith.constant 0 : i32
    %c0_i32_0 = arith.constant 0 : i32
    %c0_i32_1 = arith.constant 0 : i32
    return %c0_i32, %c0_i32_0 : i32, i32
  }
  func.func @transform_8(%arg0: i32) -> (i32, i32) {
    %c0_i32 = arith.constant 0 : i32
    %c0_i32_0 = arith.constant 0 : i32
    %c0_i32_1 = arith.constant 0 : i32
    return %c0_i32, %c0_i32_0 : i32, i32
  }
  func.func @transform_9(%arg0: i32) -> (i32, i32) {
    %c0_i32 = arith.constant 0 : i32
    %c0_i32_0 = arith.constant 0 : i32
    %c0_i32_1 = arith.constant 0 : i32
    return %c0_i32, %c0_i32_0 : i32, i32
  }
  func.func @transform_10(%arg0: i32) -> (i32, i32) {
    %c0_i32 = arith.constant 0 : i32
    %c0_i32_0 = arith.constant 0 : i32
    %c0_i32_1 = arith.constant 0 : i32
    return %c0_i32, %c0_i32_0 : i32, i32
  }
  func.func @transform_11(%arg0: i32) -> (i32, i32) {
    %c0_i32 = arith.constant 0 : i32
    %c0_i32_0 = arith.constant 0 : i32
    %c0_i32_1 = arith.constant 0 : i32
    return %c0_i32, %c0_i32_0 : i32, i32
  }
  func.func @transform_12(%arg0: i32) -> (i32, i32) {
    %c0_i32 = arith.constant 0 : i32
    %c0_i32_0 = arith.constant 0 : i32
    %c0_i32_1 = arith.constant 0 : i32
    return %c0_i32, %c0_i32_0 : i32, i32
  }
  func.func @transform_13(%arg0: i32) -> (i32, i32) {
    %c0_i32 = arith.constant 0 : i32
    %c0_i32_0 = arith.constant 0 : i32
    %c0_i32_1 = arith.constant 0 : i32
    return %c0_i32, %c0_i32_0 : i32, i32
  }
  func.func @transform_14(%arg0: i32) -> (i32, i32) {
    %c0_i32 = arith.constant 0 : i32
    %c0_i32_0 = arith.constant 0 : i32
    %c0_i32_1 = arith.constant 0 : i32
    return %c0_i32, %c0_i32_0 : i32, i32
  }
  func.func @transform_15(%arg0: i32) -> (i32, i32) {
    %c0_i32 = arith.constant 0 : i32
    %c0_i32_0 = arith.constant 0 : i32
    %c0_i32_1 = arith.constant 0 : i32
    return %c0_i32, %c0_i32_0 : i32, i32
  }
  func.func @transform_16(%arg0: i32) -> (i32, i32) {
    %c0_i32 = arith.constant 0 : i32
    %c0_i32_0 = arith.constant 0 : i32
    %c0_i32_1 = arith.constant 0 : i32
    return %c0_i32, %c0_i32_0 : i32, i32
  }
  func.func @transform_17(%arg0: i32) -> (i32, i32) {
    %c0_i32 = arith.constant 0 : i32
    %c0_i32_0 = arith.constant 0 : i32
    %c0_i32_1 = arith.constant 0 : i32
    return %c0_i32, %c0_i32_0 : i32, i32
  }
  func.func @transform_18(%arg0: i32) -> (i32, i32) {
    %c0_i32 = arith.constant 0 : i32
    %c0_i32_0 = arith.constant 0 : i32
    %c0_i32_1 = arith.constant 0 : i32
    return %c0_i32, %c0_i32_0 : i32, i32
  }
  func.func @transform_19(%arg0: i32) -> (i32, i32) {
    %c0_i32 = arith.constant 0 : i32
    %c0_i32_0 = arith.constant 0 : i32
    %c0_i32_1 = arith.constant 0 : i32
    return %c0_i32, %c0_i32_0 : i32, i32
  }
  func.func @transform_20(%arg0: i32) -> (i32, i32) {
    %c0_i32 = arith.constant 0 : i32
    %c0_i32_0 = arith.constant 0 : i32
    %c0_i32_1 = arith.constant 0 : i32
    return %c0_i32, %c0_i32_0 : i32, i32
  }
  func.func @transform_21(%arg0: i32) -> (i32, i32) {
    %c0_i32 = arith.constant 0 : i32
    %c0_i32_0 = arith.constant 0 : i32
    %c0_i32_1 = arith.constant 0 : i32
    return %c0_i32, %c0_i32_0 : i32, i32
  }
  func.func @transform_22(%arg0: i32) -> (i32, i32) {
    %c0_i32 = arith.constant 0 : i32
    %c0_i32_0 = arith.constant 0 : i32
    %c0_i32_1 = arith.constant 0 : i32
    return %c0_i32, %c0_i32_0 : i32, i32
  }
  func.func @transform_23(%arg0: i32) -> (i32, i32) {
    %c0_i32 = arith.constant 0 : i32
    %c0_i32_0 = arith.constant 0 : i32
    %c0_i32_1 = arith.constant 0 : i32
    return %c0_i32, %c0_i32_0 : i32, i32
  }
  func.func @transform_24(%arg0: i32) -> (i32, i32, i32) {
    %c0_i32 = arith.constant 0 : i32
    %c0_i32_0 = arith.constant 0 : i32
    %c0_i32_1 = arith.constant 0 : i32
    return %arg0, %c0_i32, %c0_i32_0 : i32, i32, i32
  }
  func.func @transform_25(%arg0: i32) -> (i32, i32, i32) {
    %c0_i32 = arith.constant 0 : i32
    %c0_i32_0 = arith.constant 0 : i32
    %c0_i32_1 = arith.constant 0 : i32
    return %arg0, %c0_i32, %c0_i32_0 : i32, i32, i32
  }
}

</mosaic_0001>

<llo_original>
// kernel: multimodal_forward.1
$region0: #{multimodal_forward.1}
  #allocation0 [shape = 'u32[]', space=smem, size = 0x4, offset = 0x4, fixed_abs, tag = 'smem constant byte address 0x4 - core index']
  #allocation1 [shape = 'u32[72,128]{1,0:T(1,128)}', space=vmem, size = 0x9000, scoped, tag = 'internal scratch']
  #allocation2 [shape = 'f32[48,128]{1,0:T(8,128)}', space=vmem, size = 0x6000, scoped, tag = 'scratch operand']
  %s0 = inlined_call_operand.vmem [shape: f32[2,16,64], index: 0, kind: input, shape index: {}]
  %s1 = inlined_call_operand.vmem [shape: f32[2,48,128], index: 1, kind: input, shape index: {}]
  %s2 = inlined_call_operand.vmem [shape: f32[2,1,48], index: 2, kind: input, shape index: {}]
  %s3 = inlined_call_operand.vmem [shape: f32[2,48,128], index: 3, kind: input, shape index: {}]
  %s4 = inlined_call_operand.vmem [shape: bf16[64,128], index: 4, kind: input, shape index: {}]
  %s5 = inlined_call_operand.vmem [shape: f32[1,128], index: 5, kind: input, shape index: {}]
  %s6 = inlined_call_operand.vmem [shape: bf16[128,128], index: 6, kind: input, shape index: {}]
  %s7 = inlined_call_operand.vmem [shape: f32[1,128], index: 7, kind: input, shape index: {}]
  %s8 = inlined_call_operand.vmem [shape: f32[1,128], index: 8, kind: input, shape index: {}]
  %s9 = inlined_call_operand.vmem [shape: f32[1,128], index: 9, kind: input, shape index: {}]
  %s10 = inlined_call_operand.vmem [shape: bf16[128,384], index: 10, kind: input, shape index: {}]
  %s11 = inlined_call_operand.vmem [shape: f32[1,384], index: 11, kind: input, shape index: {}]
  %s12 = inlined_call_operand.vmem [shape: bf16[128,128], index: 12, kind: input, shape index: {}]
  %s13 = inlined_call_operand.vmem [shape: f32[1,128], index: 13, kind: input, shape index: {}]
  %s14 = inlined_call_operand.vmem [shape: f32[1,128], index: 14, kind: input, shape index: {}]
  %s15 = inlined_call_operand.vmem [shape: f32[1,128], index: 15, kind: input, shape index: {}]
  %s16 = inlined_call_operand.vmem [shape: bf16[128,256], index: 16, kind: input, shape index: {}]
  %s17 = inlined_call_operand.vmem [shape: f32[1,256], index: 17, kind: input, shape index: {}]
  %s18 = inlined_call_operand.vmem [shape: bf16[256,128], index: 18, kind: input, shape index: {}]
  %s19 = inlined_call_operand.vmem [shape: f32[1,128], index: 19, kind: input, shape index: {}]
  %s20 = inlined_call_operand.vmem [shape: f32[1,128], index: 20, kind: input, shape index: {}]
  %s21 = inlined_call_operand.vmem [shape: f32[1,128], index: 21, kind: input, shape index: {}]
  %s22 = inlined_call_operand.vmem [shape: bf16[128,128], index: 22, kind: input, shape index: {}]
  %s23 = inlined_call_operand.vmem [shape: f32[1,128], index: 23, kind: input, shape index: {}]
  %s24 = inlined_call_operand.vmem [shape: f32[2,48,128], index: 24, kind: output, shape index: {0}]
  %s25 = inlined_call_operand.vmem [shape: f32[2,1,128], index: 25, kind: output, shape index: {1}]
  %26 = xla_tuple %s24, %s25
  %s27 = sld [smem:[#allocation0]]
  $region137: #{multimodal_forward.1} parent=0
    _
  %s29 = ssub.s32 1, %s27
  %s30 = scalar_select 0, %s29, %s27
  loop: start=0, step=1, limit=4
  $region2: #{multimodal_forward.1} parent=0 // loop_pre_header
    _
  $region3: #{multimodal_forward.1} parent=0 // loop_header
    %s32 = sphi 0, %s36
    %p33 = scmp.ge.s32.totalorder %s32, 4
    %s42 = sphi 0, %s44
    %s45 = sphi 0, %s42
    %s46 = sphi 0, %s45
    %s62 = sphi 0, %s46
    %s68 = sphi 0, %s70
    %s71 = sphi 0, %s68
    %s72 = sphi 0, %s71
    %s88 = sphi 0, %s72
    %s94 = sphi 0, %s96
    %s97 = sphi 0, %s94
    %s98 = sphi 0, %s97
    %s114 = sphi 0, %s98
    %s120 = sphi 0, %s122
    %s123 = sphi 0, %s120
    %s124 = sphi 0, %s123
    %s140 = sphi 0, %s124
    %s144 = sphi 0, %s144
    %s146 = sphi 0, %s144
    %s147 = sphi 0, %s146
    %s161 = sphi 0, %s147
    %s165 = sphi 0, %s165
    %s167 = sphi 0, %s165
    %s168 = sphi 0, %s167
    %s182 = sphi 0, %s168
    %s186 = sphi 0, %s186
    %s188 = sphi 0, %s186
    %s189 = sphi 0, %s188
    %s203 = sphi 0, %s189
    %s207 = sphi 0, %s207
    %s209 = sphi 0, %s207
    %s210 = sphi 0, %s209
    %s224 = sphi 0, %s210
    %s228 = sphi 0, %s228
    %s230 = sphi 0, %s228
    %s231 = sphi 0, %s230
    %s245 = sphi 0, %s231
    %s249 = sphi 0, %s249
    %s251 = sphi 0, %s249
    %s252 = sphi 0, %s251
    %s266 = sphi 0, %s252
    %s270 = sphi 0, %s270
    %s272 = sphi 0, %s270
    %s273 = sphi 0, %s272
    %s287 = sphi 0, %s273
    %s291 = sphi 0, %s291
    %s293 = sphi 0, %s291
    %s294 = sphi 0, %s293
    %s308 = sphi 0, %s294
    %s312 = sphi 0, %s312
    %s314 = sphi 0, %s312
    %s315 = sphi 0, %s314
    %s329 = sphi 0, %s315
    %s333 = sphi 0, %s333
    %s335 = sphi 0, %s333
    %s336 = sphi 0, %s335
    %s350 = sphi 0, %s336
    %s354 = sphi 0, %s354
    %s356 = sphi 0, %s354
    %s357 = sphi 0, %s356
    %s371 = sphi 0, %s357
    %s375 = sphi 0, %s375
    %s377 = sphi 0, %s375
    %s378 = sphi 0, %s377
    %s392 = sphi 0, %s378
    %s396 = sphi 0, %s396
    %s398 = sphi 0, %s396
    %s399 = sphi 0, %s398
    %s413 = sphi 0, %s399
    %s417 = sphi 0, %s417
    %s419 = sphi 0, %s417
    %s420 = sphi 0, %s419
    %s434 = sphi 0, %s420
    %s438 = sphi 0, %s438
    %s440 = sphi 0, %s438
    %s441 = sphi 0, %s440
    %s455 = sphi 0, %s441
    %s459 = sphi 0, %s459
    %s461 = sphi 0, %s459
    %s462 = sphi 0, %s461
    %s476 = sphi 0, %s462
    %s480 = sphi 0, %s480
    %s482 = sphi 0, %s480
    %s483 = sphi 0, %s482
    %s497 = sphi 0, %s483
    %s501 = sphi 0, %s501
    %s503 = sphi 0, %s501
    %s504 = sphi 0, %s503
    %s518 = sphi 0, %s504
    %s522 = sphi 0, %s522
    %s524 = sphi 0, %s522
    %s525 = sphi 0, %s524
    %s539 = sphi 0, %s525
    %s543 = sphi 0, %s543
    %s545 = sphi 0, %s543
    %s546 = sphi 0, %s545
    %s560 = sphi 0, %s546
    %s566 = sphi 0, %s568
    %s569 = sphi 0, %s566
    %s570 = sphi 0, %s569
    %s586 = sphi 0, %s570
    %s592 = sphi 0, %s594
    %s595 = sphi 0, %s592
    %s596 = sphi 0, %s595
    %s612 = sphi 0, %s596
  $region4: #{multimodal_forward.1} parent=0 // loop_header_branch
    %35 = sbr.rel (%p33) target = $region8
  $region5: #{multimodal_forward.1} parent=0 // loop_body
    %s37 = ssub.s32 %s32, 1
    %s38 = ssub.s32 %s32, 2
    %s39 = sadd.s32 %s32, 1
    %s40 = ssub.s32 %s32, %s39
    %p41 = scmp.eq.s32.totalorder %s40, 0
    %s43 = sadd.s32 %s42, 1
    %s44 = scalar_select %p41, %s42, %s43
    %p47 = pneg %p41
    %p48 = scmp.eq.s32.totalorder %s32, 1
    %p49 = por %p47, %p48
    %p50 = scmp.ne.s32.totalorder %s42, %s45
    %p51 = scmp.eq.s32.totalorder %s32, 0
    %p52 = por %p50, %p51
    %p53 = scmp.ne.s32.totalorder %s42, %s45
    %p54 = scmp.eq.s32.totalorder %s37, 1
    %p55 = por %p53, %p54
    %p56 = scmp.ne.s32.totalorder %s45, %s46
    %p57 = scmp.eq.s32.totalorder %s37, 0
    %p58 = por %p56, %p57
    %p59 = scmp.ne.s32.totalorder %s45, %s46
    %p60 = scmp.eq.s32.totalorder %s38, 1
    %p61 = por %p59, %p60
    %p63 = scmp.ne.s32.totalorder %s46, %s62
    %p64 = scmp.eq.s32.totalorder %s38, 0
    %p65 = por %p63, %p64
    %s66 = ssub.s32 %s32, %s39
    %p67 = scmp.eq.s32.totalorder %s66, 0
    %s69 = sadd.s32 %s68, 1
    %s70 = scalar_select %p67, %s68, %s69
    %p73 = pneg %p67
    %p74 = scmp.eq.s32.totalorder %s32, 1
    %p75 = por %p73, %p74
    %p76 = scmp.ne.s32.totalorder %s68, %s71
    %p77 = scmp.eq.s32.totalorder %s32, 0
    %p78 = por %p76, %p77
    %p79 = scmp.ne.s32.totalorder %s68, %s71
    %p80 = scmp.eq.s32.totalorder %s37, 1
    %p81 = por %p79, %p80
    %p82 = scmp.ne.s32.totalorder %s71, %s72
    %p83 = scmp.eq.s32.totalorder %s37, 0
    %p84 = por %p82, %p83
    %p85 = scmp.ne.s32.totalorder %s71, %s72
    %p86 = scmp.eq.s32.totalorder %s38, 1
    %p87 = por %p85, %p86
    %p89 = scmp.ne.s32.totalorder %s72, %s88
    %p90 = scmp.eq.s32.totalorder %s38, 0
    %p91 = por %p89, %p90
    %s92 = ssub.s32 %s32, %s39
    %p93 = scmp.eq.s32.totalorder %s92, 0
    %s95 = sadd.s32 %s94, 1
    %s96 = scalar_select %p93, %s94, %s95
    %p99 = pneg %p93
    %p100 = scmp.eq.s32.totalorder %s32, 1
    %p101 = por %p99, %p100
    %p102 = scmp.ne.s32.totalorder %s94, %s97
    %p103 = scmp.eq.s32.totalorder %s32, 0
    %p104 = por %p102, %p103
    %p105 = scmp.ne.s32.totalorder %s94, %s97
    %p106 = scmp.eq.s32.totalorder %s37, 1
    %p107 = por %p105, %p106
    %p108 = scmp.ne.s32.totalorder %s97, %s98
    %p109 = scmp.eq.s32.totalorder %s37, 0
    %p110 = por %p108, %p109
    %p111 = scmp.ne.s32.totalorder %s97, %s98
    %p112 = scmp.eq.s32.totalorder %s38, 1
    %p113 = por %p111, %p112
    %p115 = scmp.ne.s32.totalorder %s98, %s114
    %p116 = scmp.eq.s32.totalorder %s38, 0
    %p117 = por %p115, %p116
    %s118 = ssub.s32 %s32, %s39
    %p119 = scmp.eq.s32.totalorder %s118, 0
    %s121 = sadd.s32 %s120, 1
    %s122 = scalar_select %p119, %s120, %s121
    %p125 = pneg %p119
    %p126 = scmp.eq.s32.totalorder %s32, 1
    %p127 = por %p125, %p126
    %p128 = scmp.ne.s32.totalorder %s120, %s123
    %p129 = scmp.eq.s32.totalorder %s32, 0
    %p130 = por %p128, %p129
    %p131 = scmp.ne.s32.totalorder %s120, %s123
    %p132 = scmp.eq.s32.totalorder %s37, 1
    %p133 = por %p131, %p132
    %p134 = scmp.ne.s32.totalorder %s123, %s124
    %p135 = scmp.eq.s32.totalorder %s37, 0
    %p136 = por %p134, %p135
    %p137 = scmp.ne.s32.totalorder %s123, %s124
    %p138 = scmp.eq.s32.totalorder %s38, 1
    %p139 = por %p137, %p138
    %p141 = scmp.ne.s32.totalorder %s124, %s140
    %p142 = scmp.eq.s32.totalorder %s38, 0
    %p143 = por %p141, %p142
    %s145 = sadd.s32 %s144, 1
    %p148 = scmp.eq.s32.totalorder %s32, 1
    %p149 = scmp.ne.s32.totalorder %s144, %s146
    %p150 = scmp.eq.s32.totalorder %s32, 0
    %p151 = por %p149, %p150
    %p152 = scmp.ne.s32.totalorder %s144, %s146
    %p153 = scmp.eq.s32.totalorder %s37, 1
    %p154 = por %p152, %p153
    %p155 = scmp.ne.s32.totalorder %s146, %s147
    %p156 = scmp.eq.s32.totalorder %s37, 0
    %p157 = por %p155, %p156
    %p158 = scmp.ne.s32.totalorder %s146, %s147
    %p159 = scmp.eq.s32.totalorder %s38, 1
    %p160 = por %p158, %p159
    %p162 = scmp.ne.s32.totalorder %s147, %s161
    %p163 = scmp.eq.s32.totalorder %s38, 0
    %p164 = por %p162, %p163
    %s166 = sadd.s32 %s165, 1
    %p169 = scmp.eq.s32.totalorder %s32, 1
    %p170 = scmp.ne.s32.totalorder %s165, %s167
    %p171 = scmp.eq.s32.totalorder %s32, 0
    %p172 = por %p170, %p171
    %p173 = scmp.ne.s32.totalorder %s165, %s167
    %p174 = scmp.eq.s32.totalorder %s37, 1
    %p175 = por %p173, %p174
    %p176 = scmp.ne.s32.totalorder %s167, %s168
    %p177 = scmp.eq.s32.totalorder %s37, 0
    %p178 = por %p176, %p177
    %p179 = scmp.ne.s32.totalorder %s167, %s168
    %p180 = scmp.eq.s32.totalorder %s38, 1
    %p181 = por %p179, %p180
    %p183 = scmp.ne.s32.totalorder %s168, %s182
    %p184 = scmp.eq.s32.totalorder %s38, 0
    %p185 = por %p183, %p184
    %s187 = sadd.s32 %s186, 1
    %p190 = scmp.eq.s32.totalorder %s32, 1
    %p191 = scmp.ne.s32.totalorder %s186, %s188
    %p192 = scmp.eq.s32.totalorder %s32, 0
    %p193 = por %p191, %p192
    %p194 = scmp.ne.s32.totalorder %s186, %s188
    %p195 = scmp.eq.s32.totalorder %s37, 1
    %p196 = por %p194, %p195
    %p197 = scmp.ne.s32.totalorder %s188, %s189
    %p198 = scmp.eq.s32.totalorder %s37, 0
    %p199 = por %p197, %p198
    %p200 = scmp.ne.s32.totalorder %s188, %s189
    %p201 = scmp.eq.s32.totalorder %s38, 1
    %p202 = por %p200, %p201
    %p204 = scmp.ne.s32.totalorder %s189, %s203
    %p205 = scmp.eq.s32.totalorder %s38, 0
    %p206 = por %p204, %p205
    %s208 = sadd.s32 %s207, 1
    %p211 = scmp.eq.s32.totalorder %s32, 1
    %p212 = scmp.ne.s32.totalorder %s207, %s209
    %p213 = scmp.eq.s32.totalorder %s32, 0
    %p214 = por %p212, %p213
    %p215 = scmp.ne.s32.totalorder %s207, %s209
    %p216 = scmp.eq.s32.totalorder %s37, 1
    %p217 = por %p215, %p216
    %p218 = scmp.ne.s32.totalorder %s209, %s210
    %p219 = scmp.eq.s32.totalorder %s37, 0
    %p220 = por %p218, %p219
    %p221 = scmp.ne.s32.totalorder %s209, %s210
    %p222 = scmp.eq.s32.totalorder %s38, 1
    %p223 = por %p221, %p222
    %p225 = scmp.ne.s32.totalorder %s210, %s224
    %p226 = scmp.eq.s32.totalorder %s38, 0
    %p227 = por %p225, %p226
    %s229 = sadd.s32 %s228, 1
    %p232 = scmp.eq.s32.totalorder %s32, 1
    %p233 = scmp.ne.s32.totalorder %s228, %s230
    %p234 = scmp.eq.s32.totalorder %s32, 0
    %p235 = por %p233, %p234
    %p236 = scmp.ne.s32.totalorder %s228, %s230
    %p237 = scmp.eq.s32.totalorder %s37, 1
    %p238 = por %p236, %p237
    %p239 = scmp.ne.s32.totalorder %s230, %s231
    %p240 = scmp.eq.s32.totalorder %s37, 0
    %p241 = por %p239, %p240
    %p242 = scmp.ne.s32.totalorder %s230, %s231
    %p243 = scmp.eq.s32.totalorder %s38, 1
    %p244 = por %p242, %p243
    %p246 = scmp.ne.s32.totalorder %s231, %s245
    %p247 = scmp.eq.s32.totalorder %s38, 0
    %p248 = por %p246, %p247
    %s250 = sadd.s32 %s249, 1
    %p253 = scmp.eq.s32.totalorder %s32, 1
    %p254 = scmp.ne.s32.totalorder %s249, %s251
    %p255 = scmp.eq.s32.totalorder %s32, 0
    %p256 = por %p254, %p255
    %p257 = scmp.ne.s32.totalorder %s249, %s251
    %p258 = scmp.eq.s32.totalorder %s37, 1
    %p259 = por %p257, %p258
    %p260 = scmp.ne.s32.totalorder %s251, %s252
    %p261 = scmp.eq.s32.totalorder %s37, 0
    %p262 = por %p260, %p261
    %p263 = scmp.ne.s32.totalorder %s251, %s252
    %p264 = scmp.eq.s32.totalorder %s38, 1
    %p265 = por %p263, %p264
    %p267 = scmp.ne.s32.totalorder %s252, %s266
    %p268 = scmp.eq.s32.totalorder %s38, 0
    %p269 = por %p267, %p268
    %s271 = sadd.s32 %s270, 1
    %p274 = scmp.eq.s32.totalorder %s32, 1
    %p275 = scmp.ne.s32.totalorder %s270, %s272
    %p276 = scmp.eq.s32.totalorder %s32, 0
    %p277 = por %p275, %p276
    %p278 = scmp.ne.s32.totalorder %s270, %s272
    %p279 = scmp.eq.s32.totalorder %s37, 1
    %p280 = por %p278, %p279
    %p281 = scmp.ne.s32.totalorder %s272, %s273
    %p282 = scmp.eq.s32.totalorder %s37, 0
    %p283 = por %p281, %p282
    %p284 = scmp.ne.s32.totalorder %s272, %s273
    %p285 = scmp.eq.s32.totalorder %s38, 1
    %p286 = por %p284, %p285
    %p288 = scmp.ne.s32.totalorder %s273, %s287
    %p289 = scmp.eq.s32.totalorder %s38, 0
    %p290 = por %p288, %p289
    %s292 = sadd.s32 %s291, 1
    %p295 = scmp.eq.s32.totalorder %s32, 1
    %p296 = scmp.ne.s32.totalorder %s291, %s293
    %p297 = scmp.eq.s32.totalorder %s32, 0
    %p298 = por %p296, %p297
    %p299 = scmp.ne.s32.totalorder %s291, %s293
    %p300 = scmp.eq.s32.totalorder %s37, 1
    %p301 = por %p299, %p300
    %p302 = scmp.ne.s32.totalorder %s293, %s294
    %p303 = scmp.eq.s32.totalorder %s37, 0
    %p304 = por %p302, %p303
    %p305 = scmp.ne.s32.totalorder %s293, %s294
    %p306 = scmp.eq.s32.totalorder %s38, 1
    %p307 = por %p305, %p306
    %p309 = scmp.ne.s32.totalorder %s294, %s308
    %p310 = scmp.eq.s32.totalorder %s38, 0
    %p311 = por %p309, %p310
    %s313 = sadd.s32 %s312, 1
    %p316 = scmp.eq.s32.totalorder %s32, 1
    %p317 = scmp.ne.s32.totalorder %s312, %s314
    %p318 = scmp.eq.s32.totalorder %s32, 0
    %p319 = por %p317, %p318
    %p320 = scmp.ne.s32.totalorder %s312, %s314
    %p321 = scmp.eq.s32.totalorder %s37, 1
    %p322 = por %p320, %p321
    %p323 = scmp.ne.s32.totalorder %s314, %s315
    %p324 = scmp.eq.s32.totalorder %s37, 0
    %p325 = por %p323, %p324
    %p326 = scmp.ne.s32.totalorder %s314, %s315
    %p327 = scmp.eq.s32.totalorder %s38, 1
    %p328 = por %p326, %p327
    %p330 = scmp.ne.s32.totalorder %s315, %s329
    %p331 = scmp.eq.s32.totalorder %s38, 0
    %p332 = por %p330, %p331
    %s334 = sadd.s32 %s333, 1
    %p337 = scmp.eq.s32.totalorder %s32, 1
    %p338 = scmp.ne.s32.totalorder %s333, %s335
    %p339 = scmp.eq.s32.totalorder %s32, 0
    %p340 = por %p338, %p339
    %p341 = scmp.ne.s32.totalorder %s333, %s335
    %p342 = scmp.eq.s32.totalorder %s37, 1
    %p343 = por %p341, %p342
    %p344 = scmp.ne.s32.totalorder %s335, %s336
    %p345 = scmp.eq.s32.totalorder %s37, 0
    %p346 = por %p344, %p345
    %p347 = scmp.ne.s32.totalorder %s335, %s336
    %p348 = scmp.eq.s32.totalorder %s38, 1
    %p349 = por %p347, %p348
    %p351 = scmp.ne.s32.totalorder %s336, %s350
    %p352 = scmp.eq.s32.totalorder %s38, 0
    %p353 = por %p351, %p352
    %s355 = sadd.s32 %s354, 1
    %p358 = scmp.eq.s32.totalorder %s32, 1
    %p359 = scmp.ne.s32.totalorder %s354, %s356
    %p360 = scmp.eq.s32.totalorder %s32, 0
    %p361 = por %p359, %p360
    %p362 = scmp.ne.s32.totalorder %s354, %s356
    %p363 = scmp.eq.s32.totalorder %s37, 1
    %p364 = por %p362, %p363
    %p365 = scmp.ne.s32.totalorder %s356, %s357
    %p366 = scmp.eq.s32.totalorder %s37, 0
    %p367 = por %p365, %p366
    %p368 = scmp.ne.s32.totalorder %s356, %s357
    %p369 = scmp.eq.s32.totalorder %s38, 1
    %p370 = por %p368, %p369
    %p372 = scmp.ne.s32.totalorder %s357, %s371
    %p373 = scmp.eq.s32.totalorder %s38, 0
    %p374 = por %p372, %p373
    %s376 = sadd.s32 %s375, 1
    %p379 = scmp.eq.s32.totalorder %s32, 1
    %p380 = scmp.ne.s32.totalorder %s375, %s377
    %p381 = scmp.eq.s32.totalorder %s32, 0
    %p382 = por %p380, %p381
    %p383 = scmp.ne.s32.totalorder %s375, %s377
    %p384 = scmp.eq.s32.totalorder %s37, 1
    %p385 = por %p383, %p384
    %p386 = scmp.ne.s32.totalorder %s377, %s378
    %p387 = scmp.eq.s32.totalorder %s37, 0
    %p388 = por %p386, %p387
    %p389 = scmp.ne.s32.totalorder %s377, %s378
    %p390 = scmp.eq.s32.totalorder %s38, 1
    %p391 = por %p389, %p390
    %p393 = scmp.ne.s32.totalorder %s378, %s392
    %p394 = scmp.eq.s32.totalorder %s38, 0
    %p395 = por %p393, %p394
    %s397 = sadd.s32 %s396, 1
    %p400 = scmp.eq.s32.totalorder %s32, 1
    %p401 = scmp.ne.s32.totalorder %s396, %s398
    %p402 = scmp.eq.s32.totalorder %s32, 0
    %p403 = por %p401, %p402
    %p404 = scmp.ne.s32.totalorder %s396, %s398
    %p405 = scmp.eq.s32.totalorder %s37, 1
    %p406 = por %p404, %p405
    %p407 = scmp.ne.s32.totalorder %s398, %s399
    %p408 = scmp.eq.s32.totalorder %s37, 0
    %p409 = por %p407, %p408
    %p410 = scmp.ne.s32.totalorder %s398, %s399
    %p411 = scmp.eq.s32.totalorder %s38, 1
    %p412 = por %p410, %p411
    %p414 = scmp.ne.s32.totalorder %s399, %s413
    %p415 = scmp.eq.s32.totalorder %s38, 0
    %p416 = por %p414, %p415
    %s418 = sadd.s32 %s417, 1
    %p421 = scmp.eq.s32.totalorder %s32, 1
    %p422 = scmp.ne.s32.totalorder %s417, %s419
    %p423 = scmp.eq.s32.totalorder %s32, 0
    %p424 = por %p422, %p423
    %p425 = scmp.ne.s32.totalorder %s417, %s419
    %p426 = scmp.eq.s32.totalorder %s37, 1
    %p427 = por %p425, %p426
    %p428 = scmp.ne.s32.totalorder %s419, %s420
    %p429 = scmp.eq.s32.totalorder %s37, 0
    %p430 = por %p428, %p429
    %p431 = scmp.ne.s32.totalorder %s419, %s420
    %p432 = scmp.eq.s32.totalorder %s38, 1
    %p433 = por %p431, %p432
    %p435 = scmp.ne.s32.totalorder %s420, %s434
    %p436 = scmp.eq.s32.totalorder %s38, 0
    %p437 = por %p435, %p436
    %s439 = sadd.s32 %s438, 1
    %p442 = scmp.eq.s32.totalorder %s32, 1
    %p443 = scmp.ne.s32.totalorder %s438, %s440
    %p444 = scmp.eq.s32.totalorder %s32, 0
    %p445 = por %p443, %p444
    %p446 = scmp.ne.s32.totalorder %s438, %s440
    %p447 = scmp.eq.s32.totalorder %s37, 1
    %p448 = por %p446, %p447
    %p449 = scmp.ne.s32.totalorder %s440, %s441
    %p450 = scmp.eq.s32.totalorder %s37, 0
    %p451 = por %p449, %p450
    %p452 = scmp.ne.s32.totalorder %s440, %s441
    %p453 = scmp.eq.s32.totalorder %s38, 1
    %p454 = por %p452, %p453
    %p456 = scmp.ne.s32.totalorder %s441, %s455
    %p457 = scmp.eq.s32.totalorder %s38, 0
    %p458 = por %p456, %p457
    %s460 = sadd.s32 %s459, 1
    %p463 = scmp.eq.s32.totalorder %s32, 1
    %p464 = scmp.ne.s32.totalorder %s459, %s461
    %p465 = scmp.eq.s32.totalorder %s32, 0
    %p466 = por %p464, %p465
    %p467 = scmp.ne.s32.totalorder %s459, %s461
    %p468 = scmp.eq.s32.totalorder %s37, 1
    %p469 = por %p467, %p468
    %p470 = scmp.ne.s32.totalorder %s461, %s462
    %p471 = scmp.eq.s32.totalorder %s37, 0
    %p472 = por %p470, %p471
    %p473 = scmp.ne.s32.totalorder %s461, %s462
    %p474 = scmp.eq.s32.totalorder %s38, 1
    %p475 = por %p473, %p474
    %p477 = scmp.ne.s32.totalorder %s462, %s476
    %p478 = scmp.eq.s32.totalorder %s38, 0
    %p479 = por %p477, %p478
    %s481 = sadd.s32 %s480, 1
    %p484 = scmp.eq.s32.totalorder %s32, 1
    %p485 = scmp.ne.s32.totalorder %s480, %s482
    %p486 = scmp.eq.s32.totalorder %s32, 0
    %p487 = por %p485, %p486
    %p488 = scmp.ne.s32.totalorder %s480, %s482
    %p489 = scmp.eq.s32.totalorder %s37, 1
    %p490 = por %p488, %p489
    %p491 = scmp.ne.s32.totalorder %s482, %s483
    %p492 = scmp.eq.s32.totalorder %s37, 0
    %p493 = por %p491, %p492
    %p494 = scmp.ne.s32.totalorder %s482, %s483
    %p495 = scmp.eq.s32.totalorder %s38, 1
    %p496 = por %p494, %p495
    %p498 = scmp.ne.s32.totalorder %s483, %s497
    %p499 = scmp.eq.s32.totalorder %s38, 0
    %p500 = por %p498, %p499
    %s502 = sadd.s32 %s501, 1
    %p505 = scmp.eq.s32.totalorder %s32, 1
    %p506 = scmp.ne.s32.totalorder %s501, %s503
    %p507 = scmp.eq.s32.totalorder %s32, 0
    %p508 = por %p506, %p507
    %p509 = scmp.ne.s32.totalorder %s501, %s503
    %p510 = scmp.eq.s32.totalorder %s37, 1
    %p511 = por %p509, %p510
    %p512 = scmp.ne.s32.totalorder %s503, %s504
    %p513 = scmp.eq.s32.totalorder %s37, 0
    %p514 = por %p512, %p513
    %p515 = scmp.ne.s32.totalorder %s503, %s504
    %p516 = scmp.eq.s32.totalorder %s38, 1
    %p517 = por %p515, %p516
    %p519 = scmp.ne.s32.totalorder %s504, %s518
    %p520 = scmp.eq.s32.totalorder %s38, 0
    %p521 = por %p519, %p520
    %s523 = sadd.s32 %s522, 1
    %p526 = scmp.eq.s32.totalorder %s32, 1
    %p527 = scmp.ne.s32.totalorder %s522, %s524
    %p528 = scmp.eq.s32.totalorder %s32, 0
    %p529 = por %p527, %p528
    %p530 = scmp.ne.s32.totalorder %s522, %s524
    %p531 = scmp.eq.s32.totalorder %s37, 1
    %p532 = por %p530, %p531
    %p533 = scmp.ne.s32.totalorder %s524, %s525
    %p534 = scmp.eq.s32.totalorder %s37, 0
    %p535 = por %p533, %p534
    %p536 = scmp.ne.s32.totalorder %s524, %s525
    %p537 = scmp.eq.s32.totalorder %s38, 1
    %p538 = por %p536, %p537
    %p540 = scmp.ne.s32.totalorder %s525, %s539
    %p541 = scmp.eq.s32.totalorder %s38, 0
    %p542 = por %p540, %p541
    %s544 = sadd.s32 %s543, 1
    %p547 = scmp.eq.s32.totalorder %s32, 1
    %p548 = scmp.ne.s32.totalorder %s543, %s545
    %p549 = scmp.eq.s32.totalorder %s32, 0
    %p550 = por %p548, %p549
    %p551 = scmp.ne.s32.totalorder %s543, %s545
    %p552 = scmp.eq.s32.totalorder %s37, 1
    %p553 = por %p551, %p552
    %p554 = scmp.ne.s32.totalorder %s545, %s546
    %p555 = scmp.eq.s32.totalorder %s37, 0
    %p556 = por %p554, %p555
    %p557 = scmp.ne.s32.totalorder %s545, %s546
    %p558 = scmp.eq.s32.totalorder %s38, 1
    %p559 = por %p557, %p558
    %p561 = scmp.ne.s32.totalorder %s546, %s560
    %p562 = scmp.eq.s32.totalorder %s38, 0
    %p563 = por %p561, %p562
    %s564 = ssub.s32 %s32, %s39
    %p565 = scmp.eq.s32.totalorder %s564, 0
    %s567 = sadd.s32 %s566, 1
    %s568 = scalar_select %p565, %s566, %s567
    %p571 = pneg %p565
    %p572 = scmp.eq.s32.totalorder %s32, 1
    %p573 = por %p571, %p572
    %p574 = scmp.ne.s32.totalorder %s566, %s569
    %p575 = scmp.eq.s32.totalorder %s32, 0
    %p576 = por %p574, %p575
    %p577 = scmp.ne.s32.totalorder %s566, %s569
    %p578 = scmp.eq.s32.totalorder %s37, 1
    %p579 = por %p577, %p578
    %p580 = scmp.ne.s32.totalorder %s569, %s570
    %p581 = scmp.eq.s32.totalorder %s37, 0
    %p582 = por %p580, %p581
    %p583 = scmp.ne.s32.totalorder %s569, %s570
    %p584 = scmp.eq.s32.totalorder %s38, 1
    %p585 = por %p583, %p584
    %p587 = scmp.ne.s32.totalorder %s570, %s586
    %p588 = scmp.eq.s32.totalorder %s38, 0
    %p589 = por %p587, %p588
    %s590 = ssub.s32 %s32, %s39
    %p591 = scmp.eq.s32.totalorder %s590, 0
    %s593 = sadd.s32 %s592, 1
    %s594 = scalar_select %p591, %s592, %s593
    %p597 = pneg %p591
    %p598 = scmp.eq.s32.totalorder %s32, 1
    %p599 = por %p597, %p598
    %p600 = scmp.ne.s32.totalorder %s592, %s595
    %p601 = scmp.eq.s32.totalorder %s32, 0
    %p602 = por %p600, %p601
    %p603 = scmp.ne.s32.totalorder %s592, %s595
    %p604 = scmp.eq.s32.totalorder %s37, 1
    %p605 = por %p603, %p604
    %p606 = scmp.ne.s32.totalorder %s595, %s596
    %p607 = scmp.eq.s32.totalorder %s37, 0
    %p608 = por %p606, %p607
    %p609 = scmp.ne.s32.totalorder %s595, %s596
    %p610 = scmp.eq.s32.totalorder %s38, 1
    %p611 = por %p609, %p610
    %p613 = scmp.ne.s32.totalorder %s596, %s612
    %p614 = scmp.eq.s32.totalorder %s38, 0
    %p615 = por %p613, %p614
    %p616 = scmp.le.s32.totalorder 1, %s32
    %p617 = scmp.lt.s32.totalorder %s32, 3
    %p618 = pnand %p616, %p617
    %p619 = pneg %p618
    // Predicated region
    $region9: #{multimodal_forward.1} parent=5 // pred_check
      _
    $region10: #{multimodal_forward.1} parent=5 // pred_check_branch
      %621 = sbr.rel (%p618) target = $region12
    $region11: #{multimodal_forward.1} parent=5 // pred_region
      %s622 = ssub.s32 %s32, 1
      // Predicated region
      $region13: #{multimodal_forward.1} parent=11 // pred_check
        %p623 = pneg %p157
      $region14: #{multimodal_forward.1} parent=11 // pred_check_branch
        %625 = sbr.rel (%p623) target = $region16
      $region15: #{multimodal_forward.1} parent=11 // pred_region
        _
      $region16: #{multimodal_forward.1} parent=11 // pred_fallthru
        _
      // Predicated region
      $region17: #{multimodal_forward.1} parent=11 // pred_check
        %p626 = pneg %p178
      $region18: #{multimodal_forward.1} parent=11 // pred_check_branch
        %628 = sbr.rel (%p626) target = $region20
      $region19: #{multimodal_forward.1} parent=11 // pred_region
        _
      $region20: #{multimodal_forward.1} parent=11 // pred_fallthru
        _
      // Predicated region
      $region21: #{multimodal_forward.1} parent=11 // pred_check
        %p629 = pneg %p199
      $region22: #{multimodal_forward.1} parent=11 // pred_check_branch
        %631 = sbr.rel (%p629) target = $region24
      $region23: #{multimodal_forward.1} parent=11 // pred_region
        _
      $region24: #{multimodal_forward.1} parent=11 // pred_fallthru
        _
      // Predicated region
      $region25: #{multimodal_forward.1} parent=11 // pred_check
        %p632 = pneg %p220
      $region26: #{multimodal_forward.1} parent=11 // pred_check_branch
        %634 = sbr.rel (%p632) target = $region28
      $region27: #{multimodal_forward.1} parent=11 // pred_region
        _
      $region28: #{multimodal_forward.1} parent=11 // pred_fallthru
        _
      // Predicated region
      $region29: #{multimodal_forward.1} parent=11 // pred_check
        %p635 = pneg %p241
      $region30: #{multimodal_forward.1} parent=11 // pred_check_branch
        %637 = sbr.rel (%p635) target = $region32
      $region31: #{multimodal_forward.1} parent=11 // pred_region
        _
      $region32: #{multimodal_forward.1} parent=11 // pred_fallthru
        _
      // Predicated region
      $region33: #{multimodal_forward.1} parent=11 // pred_check
        %p638 = pneg %p262
      $region34: #{multimodal_forward.1} parent=11 // pred_check_branch
        %640 = sbr.rel (%p638) target = $region36
      $region35: #{multimodal_forward.1} parent=11 // pred_region
        _
      $region36: #{multimodal_forward.1} parent=11 // pred_fallthru
        _
      // Predicated region
      $region37: #{multimodal_forward.1} parent=11 // pred_check
        %p641 = pneg %p283
      $region38: #{multimodal_forward.1} parent=11 // pred_check_branch
        %643 = sbr.rel (%p641) target = $region40
      $region39: #{multimodal_forward.1} parent=11 // pred_region
        _
      $region40: #{multimodal_forward.1} parent=11 // pred_fallthru
        _
      // Predicated region
      $region41: #{multimodal_forward.1} parent=11 // pred_check
        %p644 = pneg %p304
      $region42: #{multimodal_forward.1} parent=11 // pred_check_branch
        %646 = sbr.rel (%p644) target = $region44
      $region43: #{multimodal_forward.1} parent=11 // pred_region
        _
      $region44: #{multimodal_forward.1} parent=11 // pred_fallthru
        _
      // Predicated region
      $region45: #{multimodal_forward.1} parent=11 // pred_check
        %p647 = pneg %p325
      $region46: #{multimodal_forward.1} parent=11 // pred_check_branch
        %649 = sbr.rel (%p647) target = $region48
      $region47: #{multimodal_forward.1} parent=11 // pred_region
        _
      $region48: #{multimodal_forward.1} parent=11 // pred_fallthru
        _
      // Predicated region
      $region49: #{multimodal_forward.1} parent=11 // pred_check
        %p650 = pneg %p346
      $region50: #{multimodal_forward.1} parent=11 // pred_check_branch
        %652 = sbr.rel (%p650) target = $region52
      $region51: #{multimodal_forward.1} parent=11 // pred_region
        _
      $region52: #{multimodal_forward.1} parent=11 // pred_fallthru
        _
      // Predicated region
      $region53: #{multimodal_forward.1} parent=11 // pred_check
        %p653 = pneg %p367
      $region54: #{multimodal_forward.1} parent=11 // pred_check_branch
        %655 = sbr.rel (%p653) target = $region56
      $region55: #{multimodal_forward.1} parent=11 // pred_region
        _
      $region56: #{multimodal_forward.1} parent=11 // pred_fallthru
        _
      // Predicated region
      $region57: #{multimodal_forward.1} parent=11 // pred_check
        %p656 = pneg %p388
      $region58: #{multimodal_forward.1} parent=11 // pred_check_branch
        %658 = sbr.rel (%p656) target = $region60
      $region59: #{multimodal_forward.1} parent=11 // pred_region
        _
      $region60: #{multimodal_forward.1} parent=11 // pred_fallthru
        _
      // Predicated region
      $region61: #{multimodal_forward.1} parent=11 // pred_check
        %p659 = pneg %p409
      $region62: #{multimodal_forward.1} parent=11 // pred_check_branch
        %661 = sbr.rel (%p659) target = $region64
      $region63: #{multimodal_forward.1} parent=11 // pred_region
        _
      $region64: #{multimodal_forward.1} parent=11 // pred_fallthru
        _
      // Predicated region
      $region65: #{multimodal_forward.1} parent=11 // pred_check
        %p662 = pneg %p430
      $region66: #{multimodal_forward.1} parent=11 // pred_check_branch
        %664 = sbr.rel (%p662) target = $region68
      $region67: #{multimodal_forward.1} parent=11 // pred_region
        _
      $region68: #{multimodal_forward.1} parent=11 // pred_fallthru
        _
      // Predicated region
      $region69: #{multimodal_forward.1} parent=11 // pred_check
        %p665 = pneg %p451
      $region70: #{multimodal_forward.1} parent=11 // pred_check_branch
        %667 = sbr.rel (%p665) target = $region72
      $region71: #{multimodal_forward.1} parent=11 // pred_region
        _
      $region72: #{multimodal_forward.1} parent=11 // pred_fallthru
        _
      // Predicated region
      $region73: #{multimodal_forward.1} parent=11 // pred_check
        %p668 = pneg %p472
      $region74: #{multimodal_forward.1} parent=11 // pred_check_branch
        %670 = sbr.rel (%p668) target = $region76
      $region75: #{multimodal_forward.1} parent=11 // pred_region
        _
      $region76: #{multimodal_forward.1} parent=11 // pred_fallthru
        _
      // Predicated region
      $region77: #{multimodal_forward.1} parent=11 // pred_check
        %p671 = pneg %p493
      $region78: #{multimodal_forward.1} parent=11 // pred_check_branch
        %673 = sbr.rel (%p671) target = $region80
      $region79: #{multimodal_forward.1} parent=11 // pred_region
        _
      $region80: #{multimodal_forward.1} parent=11 // pred_fallthru
        _
      // Predicated region
      $region81: #{multimodal_forward.1} parent=11 // pred_check
        %p674 = pneg %p514
      $region82: #{multimodal_forward.1} parent=11 // pred_check_branch
        %676 = sbr.rel (%p674) target = $region84
      $region83: #{multimodal_forward.1} parent=11 // pred_region
        _
      $region84: #{multimodal_forward.1} parent=11 // pred_fallthru
        _
      // Predicated region
      $region85: #{multimodal_forward.1} parent=11 // pred_check
        %p677 = pneg %p535
      $region86: #{multimodal_forward.1} parent=11 // pred_check_branch
        %679 = sbr.rel (%p677) target = $region88
      $region87: #{multimodal_forward.1} parent=11 // pred_region
        _
      $region88: #{multimodal_forward.1} parent=11 // pred_fallthru
        _
      // Predicated region
      $region89: #{multimodal_forward.1} parent=11 // pred_check
        %p680 = pneg %p556
      $region90: #{multimodal_forward.1} parent=11 // pred_check_branch
        %682 = sbr.rel (%p680) target = $region92
      $region91: #{multimodal_forward.1} parent=11 // pred_region
        _
      $region92: #{multimodal_forward.1} parent=11 // pred_fallthru
        _
    $region12: #{multimodal_forward.1} parent=5 // pred_fallthru
      _
    %p683 = scmp.lt.s32.totalorder %s32, 2
    // Predicated region
    $region93: #{multimodal_forward.1} parent=5 // pred_check
      %p684 = pneg %p683
    $region94: #{multimodal_forward.1} parent=5 // pred_check_branch
      %686 = sbr.rel (%p684) target = $region96
    $region95: #{multimodal_forward.1} parent=5 // pred_region
      // Predicated region
      $region97: #{multimodal_forward.1} parent=95 // pred_check
        %p687 = pneg %p52
      $region98: #{multimodal_forward.1} parent=95 // pred_check_branch
        %689 = sbr.rel (%p687) target = $region100
      $region99: #{multimodal_forward.1} parent=95 // pred_region
        %p690 = scmp.lt.s32.totalorder %s32, 1
        %s691 = scalar_select %p690, %s32, 1
        %s692 = smul.addr %s691, 2
        %s693 = smul.addr %s692, 8
        %s694 = scalar_lea.vmem %s0, %s693
      $region100: #{multimodal_forward.1} parent=95 // pred_fallthru
        _
      // Predicated region
      $region101: #{multimodal_forward.1} parent=95 // pred_check
        %p695 = pneg %p78
      $region102: #{multimodal_forward.1} parent=95 // pred_check_branch
        %697 = sbr.rel (%p695) target = $region104
      $region103: #{multimodal_forward.1} parent=95 // pred_region
        %p698 = scmp.lt.s32.totalorder %s32, 1
        %s699 = scalar_select %p698, %s32, 1
        %s700 = smul.addr %s699, 6
        %s701 = smul.addr %s700, 8
        %s702 = scalar_lea.vmem %s1, %s701
      $region104: #{multimodal_forward.1} parent=95 // pred_fallthru
        _
      // Predicated region
      $region105: #{multimodal_forward.1} parent=95 // pred_check
        %p703 = pneg %p104
      $region106: #{multimodal_forward.1} parent=95 // pred_check_branch
        %705 = sbr.rel (%p703) target = $region108
      $region107: #{multimodal_forward.1} parent=95 // pred_region
        %p706 = scmp.lt.s32.totalorder %s32, 1
        %s707 = scalar_select %p706, %s32, 1
        %s708 = scalar_lea.vmem %s2, %s707
      $region108: #{multimodal_forward.1} parent=95 // pred_fallthru
        _
      // Predicated region
      $region109: #{multimodal_forward.1} parent=95 // pred_check
        %p709 = pneg %p130
      $region110: #{multimodal_forward.1} parent=95 // pred_check_branch
        %711 = sbr.rel (%p709) target = $region112
      $region111: #{multimodal_forward.1} parent=95 // pred_region
        %p712 = scmp.lt.s32.totalorder %s32, 1
        %s713 = scalar_select %p712, %s32, 1
        %s714 = smul.addr %s713, 6
        %s715 = smul.addr %s714, 8
        %s716 = scalar_lea.vmem %s3, %s715
      $region112: #{multimodal_forward.1} parent=95 // pred_fallthru
        _
    $region96: #{multimodal_forward.1} parent=5 // pred_fallthru
      _
    %p717 = scmp.le.s32.totalorder 1, %s32
    %p718 = scmp.lt.s32.totalorder %s32, 3
    %p719 = pnand %p717, %p718
    %p720 = pneg %p719
    // Predicated region
    $region113: #{multimodal_forward.1} parent=5 // pred_check
      _
    $region114: #{multimodal_forward.1} parent=5 // pred_check_branch
      %722 = sbr.rel (%p719) target = $region116
    $region115: #{multimodal_forward.1} parent=5 // pred_region
      %s723 = ssub.s32 %s32, 1
      %p724 = scmp.lt.s32.totalorder %s37, 1
      %s725 = scalar_select %p724, %s37, 1
      %s726 = smul.addr %s725, 2
      %s727 = smul.addr %s726, 8
      %s728 = scalar_lea.vmem %s0, %s727
      %p729 = pneg %p58
      %p730 = pneg %p55
      %p731 = scmp.lt.s32.totalorder %s37, 1
      %s732 = scalar_select %p731, %s37, 1
      %s733 = smul.addr %s732, 6
      %s734 = smul.addr %s733, 8
      %s735 = scalar_lea.vmem %s1, %s734
      %p736 = pneg %p84
      %p737 = pneg %p81
      %p738 = scmp.lt.s32.totalorder %s37, 1
      %s739 = scalar_select %p738, %s37, 1
      %s740 = scalar_lea.vmem %s2, %s739
      %p741 = pneg %p110
      %p742 = pneg %p107
      %p743 = scmp.lt.s32.totalorder %s37, 1
      %s744 = scalar_select %p743, %s37, 1
      %s745 = smul.addr %s744, 6
      %s746 = smul.addr %s745, 8
      %s747 = scalar_lea.vmem %s3, %s746
      %p748 = pneg %p136
      %p749 = pneg %p133
      %p750 = pneg %p157
      %p751 = pneg %p154
      %p752 = pneg %p178
      %p753 = pneg %p175
      %p754 = pneg %p199
      %p755 = pneg %p196
      %p756 = pneg %p220
      %p757 = pneg %p217
      %p758 = pneg %p241
      %p759 = pneg %p238
      %p760 = pneg %p262
      %p761 = pneg %p259
      %p762 = pneg %p283
      %p763 = pneg %p280
      %p764 = pneg %p304
      %p765 = pneg %p301
      %p766 = pneg %p325
      %p767 = pneg %p322
      %p768 = pneg %p346
      %p769 = pneg %p343
      %p770 = pneg %p367
      %p771 = pneg %p364
      %p772 = pneg %p388
      %p773 = pneg %p385
      %p774 = pneg %p409
      %p775 = pneg %p406
      %p776 = pneg %p430
      %p777 = pneg %p427
      %p778 = pneg %p451
      %p779 = pneg %p448
      %p780 = pneg %p472
      %p781 = pneg %p469
      %p782 = pneg %p493
      %p783 = pneg %p490
      %p784 = pneg %p514
      %p785 = pneg %p511
      %p786 = pneg %p535
      %p787 = pneg %p532
      %p788 = pneg %p556
      %p789 = pneg %p553
      %p790 = pneg %p582
      %p791 = pneg %p579
      %p792 = scmp.lt.s32.totalorder %s37, 1
      %s793 = scalar_select %p792, %s37, 1
      %s794 = smul.addr %s793, 6
      %s795 = smul.addr %s794, 8
      %s796 = scalar_lea.vmem %s24, %s795
      %p797 = pneg %p608
      %p798 = pneg %p605
      %p799 = scmp.lt.s32.totalorder %s37, 1
      %s800 = scalar_select %p799, %s37, 1
      %s801 = scalar_lea.vmem %s25, %s800
      %p802 = scmp.lt.s32.totalorder %s37, 1
      %s803 = scalar_select %p802, %s37, 1
      %s804 = smul.addr %s803, 2
      %s805 = smul.addr %s804, 8
      %s806 = scalar_lea.vmem %s0, %s805
      %p807 = scmp.lt.s32.totalorder %s37, 1
      %s808 = scalar_select %p807, %s37, 1
      %s809 = smul.addr %s808, 6
      %s810 = smul.addr %s809, 8
      %s811 = scalar_lea.vmem %s1, %s810
      %p812 = scmp.lt.s32.totalorder %s37, 1
      %s813 = scalar_select %p812, %s37, 1
      %s814 = scalar_lea.vmem %s2, %s813
      %p815 = scmp.lt.s32.totalorder %s37, 1
      %s816 = scalar_select %p815, %s37, 1
      %s817 = smul.addr %s816, 6
      %s818 = smul.addr %s817, 8
      %s819 = scalar_lea.vmem %s3, %s818
      %p820 = scmp.lt.s32.totalorder %s37, 1
      %s821 = scalar_select %p820, %s37, 1
      %s822 = smul.addr %s821, 6
      %s823 = smul.addr %s822, 8
      %s824 = scalar_lea.vmem %s24, %s823
      %p825 = scmp.lt.s32.totalorder %s37, 1
      %s826 = scalar_select %p825, %s37, 1
      %s827 = scalar_lea.vmem %s25, %s826
      %v829 = vld [vmem:[%s806] sm:$0xff]
      %v830 = vld [vmem:[%s806 + $0x8] sm:$0xff]
      %v831 = vpack.c.bf16 %v830, %v829
      %v832 = vld [vmem:[%s4] sm:$0xf]
      %v833 = vld [vmem:[%s4 + $0x4] sm:$0xf]
      %v834 = vld [vmem:[%s4 + $0x8] sm:$0xf]
      %v835 = vld [vmem:[%s4 + $0xc] sm:$0xf]
      %v836 = vld [vmem:[%s4 + $0x10] sm:$0xf]
      %v837 = vld [vmem:[%s4 + $0x14] sm:$0xf]
      %v838 = vld [vmem:[%s4 + $0x18] sm:$0xf]
      %v839 = vld [vmem:[%s4 + $0x1c] sm:$0xf]
      %v840 = vld [vmem:[%s5] sm:$0x1]
      %v842 = vperm.slane %v840, 0
      %v852 = vunpack.c.l.b16 %v832
      %v853 = vunpack.c.l.b16 %v833
      %v854 = vunpack.c.l.b16 %v834
      %v855 = vunpack.c.l.b16 %v835
      %v856 = vunpack.c.l.b16 %v836
      %v857 = vunpack.c.l.b16 %v837
      %v858 = vunpack.c.l.b16 %v838
      %v859 = vunpack.c.l.b16 %v839
      %v860 = vpack.c.b16 %v853, %v852
      %v861 = vpack.c.b16 %v855, %v854
      %v862 = vpack.c.b16 %v857, %v856
      %v863 = vpack.c.b16 %v859, %v858
      %vm868 = vcmask 523264
      %v870 = vsel %vm868, %v831, 0
      %872 = vmatpush.bf16.msra.mxu0 0
      %873 = vmatpush.bf16.msra.mxu0 0
      %874 = vmatpush.bf16.msra.mxu0 0
      %875 = vmatpush.bf16.msra.mxu0 0
      %876 = vmatpush.bf16.msra.mxu0 %v863
      %877 = vmatpush.bf16.msra.mxu0 %v862
      %878 = vmatpush.bf16.msra.mxu0 %v861
      %879 = vmatpush.bf16.msra.mxu0 %v860
      %880 = vmatmul.bf16.gmra.mxu0 %v870
      %v881 = vpop.f32.mrf.mxu0
      %v882 = vadd.f32 %v842, %v881
      %v883 = vpop.f32.mrf.mxu0
      %v884 = vadd.f32 %v842, %v883
      %885 = vdwg.mxu0
      %v886 = vmul.f32 %v882, %v882
      %v887 = vmul.f32 %v884, %v884
      %v888 = vmul.f32 %v882, %v886
      %v889 = vmul.f32 %v884, %v887
      %v890 = vmul.f32 %v888, 0.044715
      %v891 = vmul.f32 %v889, 0.044715
      %v892 = vadd.f32 %v882, %v890
      %v893 = vadd.f32 %v884, %v891
      %v894 = vmul.f32 %v892, 0.7978846
      %v895 = vmul.f32 %v893, 0.7978846
      %v896 = vtanh.pop %v894
      %v897 = vtanh.pop %v895
      %v898 = vadd.f32 %v896, 1.0
      %v899 = vadd.f32 %v897, 1.0
      %v900 = vmul.f32 %v898, 0.5
      %v901 = vmul.f32 %v899, 0.5
      %v902 = vmul.f32 %v882, %v900
      %v903 = vmul.f32 %v884, %v901
      %v904 = vpack.c.bf16 %v903, %v902
      %v905 = vld [vmem:[%s6] sm:$0xf]
      %v906 = vld [vmem:[%s6 + $0x4] sm:$0xf]
      %v907 = vld [vmem:[%s6 + $0x8] sm:$0xf]
      %v908 = vld [vmem:[%s6 + $0xc] sm:$0xf]
      %v909 = vld [vmem:[%s6 + $0x10] sm:$0xf]
      %v910 = vld [vmem:[%s6 + $0x14] sm:$0xf]
      %v911 = vld [vmem:[%s6 + $0x18] sm:$0xf]
      %v912 = vld [vmem:[%s6 + $0x1c] sm:$0xf]
      %v913 = vld [vmem:[%s6 + $0x20] sm:$0xf]
      %v914 = vld [vmem:[%s6 + $0x24] sm:$0xf]
      %v915 = vld [vmem:[%s6 + $0x28] sm:$0xf]
      %v916 = vld [vmem:[%s6 + $0x2c] sm:$0xf]
      %v917 = vld [vmem:[%s6 + $0x30] sm:$0xf]
      %v918 = vld [vmem:[%s6 + $0x34] sm:$0xf]
      %v919 = vld [vmem:[%s6 + $0x38] sm:$0xf]
      %v920 = vld [vmem:[%s6 + $0x3c] sm:$0xf]
      %v921 = vld [vmem:[%s7] sm:$0x1]
      %v923 = vperm.slane %v921, 0
      %v941 = vunpack.c.l.b16 %v905
      %v942 = vunpack.c.l.b16 %v906
      %v943 = vunpack.c.l.b16 %v907
      %v944 = vunpack.c.l.b16 %v908
      %v945 = vunpack.c.l.b16 %v909
      %v946 = vunpack.c.l.b16 %v910
      %v947 = vunpack.c.l.b16 %v911
      %v948 = vunpack.c.l.b16 %v912
      %v949 = vunpack.c.l.b16 %v913
      %v950 = vunpack.c.l.b16 %v914
      %v951 = vunpack.c.l.b16 %v915
      %v952 = vunpack.c.l.b16 %v916
      %v953 = vunpack.c.l.b16 %v917
      %v954 = vunpack.c.l.b16 %v918
      %v955 = vunpack.c.l.b16 %v919
      %v956 = vunpack.c.l.b16 %v920
      %v957 = vpack.c.b16 %v942, %v941
      %v958 = vpack.c.b16 %v944, %v943
      %v959 = vpack.c.b16 %v946, %v945
      %v960 = vpack.c.b16 %v948, %v947
      %v961 = vpack.c.b16 %v950, %v949
      %v962 = vpack.c.b16 %v952, %v951
      %v963 = vpack.c.b16 %v954, %v953
      %v964 = vpack.c.b16 %v956, %v955
      %973 = vmatpush.bf16.msra.mxu0 %v964
      %974 = vmatpush.bf16.msra.mxu0 %v963
      %975 = vmatpush.bf16.msra.mxu0 %v962
      %976 = vmatpush.bf16.msra.mxu0 %v961
      %977 = vmatpush.bf16.msra.mxu0 %v960
      %978 = vmatpush.bf16.msra.mxu0 %v959
      %979 = vmatpush.bf16.msra.mxu0 %v958
      %980 = vmatpush.bf16.msra.mxu0 %v957
      %981 = vmatmul.bf16.gmra.mxu0 %v904
      %v982 = vpop.f32.mrf.mxu0
      %v983 = vadd.f32 %v923, %v982
      %v984 = vpop.f32.mrf.mxu0
      %v985 = vadd.f32 %v923, %v984
      %986 = vdwg.mxu0
      %v987 = vld [vmem:[%s811] sm:$0xff]
      %v988 = vld [vmem:[%s811 + $0x8] sm:$0xff]
      %v989 = vld [vmem:[%s811 + $0x10] sm:$0xff]
      %v990 = vld [vmem:[%s811 + $0x18] sm:$0xff]
      %v991 = vld [vmem:[%s811 + $0x20] sm:$0xff]
      %v992 = vld [vmem:[%s811 + $0x28] sm:$0xff]
      %993 = vst [vmem:[#allocation2] sm:$0xff] %v987
      %994 = vst [vmem:[#allocation2 + $0x8] sm:$0xff] %v988
      %995 = vst [vmem:[#allocation2 + $0x10] sm:$0xff] %v989
      %996 = vst [vmem:[#allocation2 + $0x18] sm:$0xff] %v990
      %997 = vst [vmem:[#allocation2 + $0x20] sm:$0xff] %v991
      %998 = vst [vmem:[#allocation2 + $0x28] sm:$0xff] %v992
      %999 = vst [vmem:[#allocation2 + $0xa] sm:$0xff] %v983
      %1000 = vst [vmem:[#allocation2 + $0x12] sm:$0xff] %v985
      %v1001 = vld [vmem:[#allocation2] sm:$0xff]
      %v1002 = vld [vmem:[#allocation2 + $0x8] sm:$0xff]
      %v1003 = vld [vmem:[#allocation2 + $0x10] sm:$0xff]
      %v1004 = vld [vmem:[#allocation2 + $0x18] sm:$0xff]
      %v1005 = vld [vmem:[#allocation2 + $0x20] sm:$0xff]
      %v1006 = vld [vmem:[#allocation2 + $0x28] sm:$0xff]
      %v1007 = vld [vmem:[%s814] sm:$0x1]
      %1008 = vadd.xlane.f32.xlu0 %v1001
      %v1009 = vpop.xlane.xlu0 %1008
      %1010 = vadd.xlane.f32.xlu0 %v1002
      %v1011 = vpop.xlane.xlu0 %1010
      %1012 = vadd.xlane.f32.xlu0 %v1003
      %v1013 = vpop.xlane.xlu0 %1012
      %1014 = vadd.xlane.f32.xlu0 %v1004
      %v1015 = vpop.xlane.xlu0 %1014
      %1016 = vadd.xlane.f32.xlu0 %v1005
      %v1017 = vpop.xlane.xlu0 %1016
      %1018 = vadd.xlane.f32.xlu0 %v1006
      %v1019 = vpop.xlane.xlu0 %1018
      %v1020 = vrcp.pop 128.0
      %v1021 = vmul.f32 128.0, %v1020
      %v1022 = vsub.f32 1.0, %v1021
      %v1023 = vmul.f32 %v1020, %v1022
      %v1024 = vadd.f32 %v1020, %v1023
      %vm1025 = vweird.f32 %v1020
      %v1026 = vsel %vm1025, %v1020, %v1024
      %v1027 = vmul.f32 %v1009, %v1026
      %v1028 = vmul.f32 %v1011, %v1026
      %v1029 = vmul.f32 %v1013, %v1026
      %v1030 = vmul.f32 %v1015, %v1026
      %v1031 = vmul.f32 %v1017, %v1026
      %v1032 = vmul.f32 %v1019, %v1026
      %v1033 = vsub.f32 %v1001, %v1027
      %v1034 = vsub.f32 %v1002, %v1028
      %v1035 = vsub.f32 %v1003, %v1029
      %v1036 = vsub.f32 %v1004, %v1030
      %v1037 = vsub.f32 %v1005, %v1031
      %v1038 = vsub.f32 %v1006, %v1032
      %v1039 = vmul.f32 %v1033, %v1033
      %v1040 = vmul.f32 %v1034, %v1034
      %v1041 = vmul.f32 %v1035, %v1035
      %v1042 = vmul.f32 %v1036, %v1036
      %v1043 = vmul.f32 %v1037, %v1037
      %v1044 = vmul.f32 %v1038, %v1038
      %1045 = vadd.xlane.f32.xlu0 %v1039
      %v1046 = vpop.xlane.xlu0 %1045
      %1047 = vadd.xlane.f32.xlu0 %v1040
      %v1048 = vpop.xlane.xlu0 %1047
      %1049 = vadd.xlane.f32.xlu0 %v1041
      %v1050 = vpop.xlane.xlu0 %1049
      %1051 = vadd.xlane.f32.xlu0 %v1042
      %v1052 = vpop.xlane.xlu0 %1051
      %1053 = vadd.xlane.f32.xlu0 %v1043
      %v1054 = vpop.xlane.xlu0 %1053
      %1055 = vadd.xlane.f32.xlu0 %v1044
      %v1056 = vpop.xlane.xlu0 %1055
      %v1057 = vmul.f32 %v1046, %v1026
      %v1058 = vmul.f32 %v1048, %v1026
      %v1059 = vmul.f32 %v1050, %v1026
      %v1060 = vmul.f32 %v1052, %v1026
      %v1061 = vmul.f32 %v1054, %v1026
      %v1062 = vmul.f32 %v1056, %v1026
      %v1063 = vadd.f32 %v1057, 1e-05
      %v1064 = vadd.f32 %v1058, 1e-05
      %v1065 = vadd.f32 %v1059, 1e-05
      %v1066 = vadd.f32 %v1060, 1e-05
      %v1067 = vadd.f32 %v1061, 1e-05
      %v1068 = vadd.f32 %v1062, 1e-05
      %v1069 = vrsqrt.pop %v1063
      %v1070 = vmul.f32 %v1069, %v1063
      %v1071 = vmul.f32 %v1070, %v1069
      %v1072 = vmul.f32 0.5, %v1071
      %v1073 = vsub.f32 1.5, %v1072
      %v1074 = vmul.f32 %v1069, %v1073
      %vm1075 = vweird.f32 %v1063
      %vm1076 = vweird.f32 %v1069
      %vm1077 = vmor %vm1075, %vm1076
      %v1078 = vsel %vm1077, %v1069, %v1074
      %v1079 = vrsqrt.pop %v1064
      %v1080 = vmul.f32 %v1079, %v1064
      %v1081 = vmul.f32 %v1080, %v1079
      %v1082 = vmul.f32 0.5, %v1081
      %v1083 = vsub.f32 1.5, %v1082
      %v1084 = vmul.f32 %v1079, %v1083
      %vm1085 = vweird.f32 %v1064
      %vm1086 = vweird.f32 %v1079
      %vm1087 = vmor %vm1085, %vm1086
      %v1088 = vsel %vm1087, %v1079, %v1084
      %v1089 = vrsqrt.pop %v1065
      %v1090 = vmul.f32 %v1089, %v1065
      %v1091 = vmul.f32 %v1090, %v1089
      %v1092 = vmul.f32 0.5, %v1091
      %v1093 = vsub.f32 1.5, %v1092
      %v1094 = vmul.f32 %v1089, %v1093
      %vm1095 = vweird.f32 %v1065
      %vm1096 = vweird.f32 %v1089
      %vm1097 = vmor %vm1095, %vm1096
      %v1098 = vsel %vm1097, %v1089, %v1094
      %v1099 = vrsqrt.pop %v1066
      %v1100 = vmul.f32 %v1099, %v1066
      %v1101 = vmul.f32 %v1100, %v1099
      %v1102 = vmul.f32 0.5, %v1101
      %v1103 = vsub.f32 1.5, %v1102
      %v1104 = vmul.f32 %v1099, %v1103
      %vm1105 = vweird.f32 %v1066
      %vm1106 = vweird.f32 %v1099
      %vm1107 = vmor %vm1105, %vm1106
      %v1108 = vsel %vm1107, %v1099, %v1104
      %v1109 = vrsqrt.pop %v1067
      %v1110 = vmul.f32 %v1109, %v1067
      %v1111 = vmul.f32 %v1110, %v1109
      %v1112 = vmul.f32 0.5, %v1111
      %v1113 = vsub.f32 1.5, %v1112
      %v1114 = vmul.f32 %v1109, %v1113
      %vm1115 = vweird.f32 %v1067
      %vm1116 = vweird.f32 %v1109
      %vm1117 = vmor %vm1115, %vm1116
      %v1118 = vsel %vm1117, %v1109, %v1114
      %v1119 = vrsqrt.pop %v1068
      %v1120 = vmul.f32 %v1119, %v1068
      %v1121 = vmul.f32 %v1120, %v1119
      %v1122 = vmul.f32 0.5, %v1121
      %v1123 = vsub.f32 1.5, %v1122
      %v1124 = vmul.f32 %v1119, %v1123
      %vm1125 = vweird.f32 %v1068
      %vm1126 = vweird.f32 %v1119
      %vm1127 = vmor %vm1125, %vm1126
      %v1128 = vsel %vm1127, %v1119, %v1124
      %v1129 = vmul.f32 %v1033, %v1078
      %v1130 = vmul.f32 %v1034, %v1088
      %v1131 = vmul.f32 %v1035, %v1098
      %v1132 = vmul.f32 %v1036, %v1108
      %v1133 = vmul.f32 %v1037, %v1118
      %v1134 = vmul.f32 %v1038, %v1128
      %v1135 = vld [vmem:[%s8] sm:$0x1]
      %v1137 = vperm.slane %v1135, 0
      %v1139 = vmul.f32 %v1129, %v1137
      %v1140 = vmul.f32 %v1130, %v1137
      %v1141 = vmul.f32 %v1131, %v1137
      %v1142 = vmul.f32 %v1132, %v1137
      %v1143 = vmul.f32 %v1133, %v1137
      %v1144 = vmul.f32 %v1134, %v1137
      %v1145 = vld [vmem:[%s9] sm:$0x1]
      %v1147 = vperm.slane %v1145, 0
      %v1149 = vadd.f32 %v1139, %v1147
      %v1150 = vadd.f32 %v1140, %v1147
      %v1151 = vadd.f32 %v1141, %v1147
      %v1152 = vadd.f32 %v1142, %v1147
      %v1153 = vadd.f32 %v1143, %v1147
      %v1154 = vadd.f32 %v1144, %v1147
      %v1155 = vpack.c.bf16 %v1150, %v1149
      %v1156 = vpack.c.bf16 %v1152, %v1151
      %v1157 = vpack.c.bf16 %v1154, %v1153
      %v1158 = vld [vmem:[%s10] sm:$0xff]
      %v1159 = vld [vmem:[%s10 + $0x8] sm:$0xf]
      %v1160 = vld [vmem:[%s10 + $0xc] sm:$0xff]
      %v1161 = vld [vmem:[%s10 + $0x14] sm:$0xf]
      %v1162 = vld [vmem:[%s10 + $0x18] sm:$0xff]
      %v1163 = vld [vmem:[%s10 + $0x20] sm:$0xf]
      %v1164 = vld [vmem:[%s10 + $0x24] sm:$0xff]
      %v1165 = vld [vmem:[%s10 + $0x2c] sm:$0xf]
      %v1166 = vld [vmem:[%s10 + $0x30] sm:$0xff]
      %v1167 = vld [vmem:[%s10 + $0x38] sm:$0xf]
      %v1168 = vld [vmem:[%s10 + $0x3c] sm:$0xff]
      %v1169 = vld [vmem:[%s10 + $0x44] sm:$0xf]
      %v1170 = vld [vmem:[%s10 + $0x48] sm:$0xff]
      %v1171 = vld [vmem:[%s10 + $0x50] sm:$0xf]
      %v1172 = vld [vmem:[%s10 + $0x54] sm:$0xff]
      %v1173 = vld [vmem:[%s10 + $0x5c] sm:$0xf]
      %v1174 = vld [vmem:[%s10 + $0x60] sm:$0xff]
      %v1175 = vld [vmem:[%s10 + $0x68] sm:$0xf]
      %v1176 = vld [vmem:[%s10 + $0x6c] sm:$0xff]
      %v1177 = vld [vmem:[%s10 + $0x74] sm:$0xf]
      %v1178 = vld [vmem:[%s10 + $0x78] sm:$0xff]
      %v1179 = vld [vmem:[%s10 + $0x80] sm:$0xf]
      %v1180 = vld [vmem:[%s10 + $0x84] sm:$0xff]
      %v1181 = vld [vmem:[%s10 + $0x8c] sm:$0xf]
      %v1182 = vld [vmem:[%s10 + $0x90] sm:$0xff]
      %v1183 = vld [vmem:[%s10 + $0x98] sm:$0xf]
      %v1184 = vld [vmem:[%s10 + $0x9c] sm:$0xff]
      %v1185 = vld [vmem:[%s10 + $0xa4] sm:$0xf]
      %v1186 = vld [vmem:[%s10 + $0xa8] sm:$0xff]
      %v1187 = vld [vmem:[%s10 + $0xb0] sm:$0xf]
      %v1188 = vld [vmem:[%s10 + $0xb4] sm:$0xff]
      %v1189 = vld [vmem:[%s10 + $0xbc] sm:$0xf]
      %v1190 = vld [vmem:[%s11] sm:$0x7]
      %v1192 = vperm.slane %v1190, 0
      %v1193 = vperm.slane %v1190, 1
      %v1194 = vperm.slane %v1190, 2
      %v1230 = vunpack.c.l.b16 %v1158
      %v1231 = vunpack.c.h.b16 %v1158
      %v1232 = vunpack.c.l.b16 %v1159
      %v1233 = vunpack.c.l.b16 %v1160
      %v1234 = vunpack.c.h.b16 %v1160
      %v1235 = vunpack.c.l.b16 %v1161
      %v1236 = vunpack.c.l.b16 %v1162
      %v1237 = vunpack.c.h.b16 %v1162
      %v1238 = vunpack.c.l.b16 %v1163
      %v1239 = vunpack.c.l.b16 %v1164
      %v1240 = vunpack.c.h.b16 %v1164
      %v1241 = vunpack.c.l.b16 %v1165
      %v1242 = vunpack.c.l.b16 %v1166
      %v1243 = vunpack.c.h.b16 %v1166
      %v1244 = vunpack.c.l.b16 %v1167
      %v1245 = vunpack.c.l.b16 %v1168
      %v1246 = vunpack.c.h.b16 %v1168
      %v1247 = vunpack.c.l.b16 %v1169
      %v1248 = vunpack.c.l.b16 %v1170
      %v1249 = vunpack.c.h.b16 %v1170
      %v1250 = vunpack.c.l.b16 %v1171
      %v1251 = vunpack.c.l.b16 %v1172
      %v1252 = vunpack.c.h.b16 %v1172
      %v1253 = vunpack.c.l.b16 %v1173
      %v1254 = vunpack.c.l.b16 %v1174
      %v1255 = vunpack.c.h.b16 %v1174
      %v1256 = vunpack.c.l.b16 %v1175
      %v1257 = vunpack.c.l.b16 %v1176
      %v1258 = vunpack.c.h.b16 %v1176
      %v1259 = vunpack.c.l.b16 %v1177
      %v1260 = vunpack.c.l.b16 %v1178
      %v1261 = vunpack.c.h.b16 %v1178
      %v1262 = vunpack.c.l.b16 %v1179
      %v1263 = vunpack.c.l.b16 %v1180
      %v1264 = vunpack.c.h.b16 %v1180
      %v1265 = vunpack.c.l.b16 %v1181
      %v1266 = vunpack.c.l.b16 %v1182
      %v1267 = vunpack.c.h.b16 %v1182
      %v1268 = vunpack.c.l.b16 %v1183
      %v1269 = vunpack.c.l.b16 %v1184
      %v1270 = vunpack.c.h.b16 %v1184
      %v1271 = vunpack.c.l.b16 %v1185
      %v1272 = vunpack.c.l.b16 %v1186
      %v1273 = vunpack.c.h.b16 %v1186
      %v1274 = vunpack.c.l.b16 %v1187
      %v1275 = vunpack.c.l.b16 %v1188
      %v1276 = vunpack.c.h.b16 %v1188
      %v1277 = vunpack.c.l.b16 %v1189
      %v1278 = vpack.c.b16 %v1233, %v1230
      %v1279 = vpack.c.b16 %v1234, %v1231
      %v1280 = vpack.c.b16 %v1235, %v1232
      %v1281 = vpack.c.b16 %v1239, %v1236
      %v1282 = vpack.c.b16 %v1240, %v1237
      %v1283 = vpack.c.b16 %v1241, %v1238
      %v1284 = vpack.c.b16 %v1245, %v1242
      %v1285 = vpack.c.b16 %v1246, %v1243
      %v1286 = vpack.c.b16 %v1247, %v1244
      %v1287 = vpack.c.b16 %v1251, %v1248
      %v1288 = vpack.c.b16 %v1252, %v1249
      %v1289 = vpack.c.b16 %v1253, %v1250
      %v1290 = vpack.c.b16 %v1257, %v1254
      %v1291 = vpack.c.b16 %v1258, %v1255
      %v1292 = vpack.c.b16 %v1259, %v1256
      %v1293 = vpack.c.b16 %v1263, %v1260
      %v1294 = vpack.c.b16 %v1264, %v1261
      %v1295 = vpack.c.b16 %v1265, %v1262
      %v1296 = vpack.c.b16 %v1269, %v1266
      %v1297 = vpack.c.b16 %v1270, %v1267
      %v1298 = vpack.c.b16 %v1271, %v1268
      %v1299 = vpack.c.b16 %v1275, %v1272
      %v1300 = vpack.c.b16 %v1276, %v1273
      %v1301 = vpack.c.b16 %v1277, %v1274
      %1326 = vmatpush.bf16.msra.mxu0 %v1299
      %1327 = vmatpush.bf16.msra.mxu0 %v1296
      %1328 = vmatpush.bf16.msra.mxu0 %v1293
      %1329 = vmatpush.bf16.msra.mxu0 %v1290
      %1330 = vmatpush.bf16.msra.mxu0 %v1287
      %1331 = vmatpush.bf16.msra.mxu0 %v1284
      %1332 = vmatpush.bf16.msra.mxu0 %v1281
      %1333 = vmatpush.bf16.msra.mxu0 %v1278
      %1334 = vmatmul.bf16.gmra.mxu0 %v1155
      %v1335 = vpop.f32.mrf.mxu0
      %v1336 = vadd.f32 %v1192, %v1335
      %v1337 = vpop.f32.mrf.mxu0
      %v1338 = vadd.f32 %v1192, %v1337
      %1339 = vmatmul.bf16.gmra.mxu0 %v1156
      %v1340 = vpop.f32.mrf.mxu0
      %v1341 = vadd.f32 %v1192, %v1340
      %v1342 = vpop.f32.mrf.mxu0
      %v1343 = vadd.f32 %v1192, %v1342
      %1344 = vmatmul.bf16.gmra.mxu0 %v1157
      %v1345 = vpop.f32.mrf.mxu0
      %v1346 = vadd.f32 %v1192, %v1345
      %v1347 = vpop.f32.mrf.mxu0
      %v1348 = vadd.f32 %v1192, %v1347
      %1349 = vdwg.mxu0
      %1350 = vmatpush.bf16.msra.mxu0 %v1300
      %1351 = vmatpush.bf16.msra.mxu0 %v1297
      %1352 = vmatpush.bf16.msra.mxu0 %v1294
      %1353 = vmatpush.bf16.msra.mxu0 %v1291
      %1354 = vmatpush.bf16.msra.mxu0 %v1288
      %1355 = vmatpush.bf16.msra.mxu0 %v1285
      %1356 = vmatpush.bf16.msra.mxu0 %v1282
      %1357 = vmatpush.bf16.msra.mxu0 %v1279
      %1358 = vmatmul.bf16.gmra.mxu0 %v1155
      %v1359 = vpop.f32.mrf.mxu0
      %v1360 = vadd.f32 %v1193, %v1359
      %v1361 = vpop.f32.mrf.mxu0
      %v1362 = vadd.f32 %v1193, %v1361
      %1363 = vmatmul.bf16.gmra.mxu0 %v1156
      %v1364 = vpop.f32.mrf.mxu0
      %v1365 = vadd.f32 %v1193, %v1364
      %v1366 = vpop.f32.mrf.mxu0
      %v1367 = vadd.f32 %v1193, %v1366
      %1368 = vmatmul.bf16.gmra.mxu0 %v1157
      %v1369 = vpop.f32.mrf.mxu0
      %v1370 = vadd.f32 %v1193, %v1369
      %v1371 = vpop.f32.mrf.mxu0
      %v1372 = vadd.f32 %v1193, %v1371
      %1373 = vdwg.mxu0
      %1374 = vmatpush.bf16.msra.mxu0 %v1301
      %1375 = vmatpush.bf16.msra.mxu0 %v1298
      %1376 = vmatpush.bf16.msra.mxu0 %v1295
      %1377 = vmatpush.bf16.msra.mxu0 %v1292
      %1378 = vmatpush.bf16.msra.mxu0 %v1289
      %1379 = vmatpush.bf16.msra.mxu0 %v1286
      %1380 = vmatpush.bf16.msra.mxu0 %v1283
      %1381 = vmatpush.bf16.msra.mxu0 %v1280
      %1382 = vmatmul.bf16.gmra.mxu0 %v1155
      %v1383 = vpop.f32.mrf.mxu0
      %v1384 = vadd.f32 %v1194, %v1383
      %v1385 = vpop.f32.mrf.mxu0
      %v1386 = vadd.f32 %v1194, %v1385
      %1387 = vmatmul.bf16.gmra.mxu0 %v1156
      %v1388 = vpop.f32.mrf.mxu0
      %v1389 = vadd.f32 %v1194, %v1388
      %v1390 = vpop.f32.mrf.mxu0
      %v1391 = vadd.f32 %v1194, %v1390
      %1392 = vmatmul.bf16.gmra.mxu0 %v1157
      %v1393 = vpop.f32.mrf.mxu0
      %v1394 = vadd.f32 %v1194, %v1393
      %v1395 = vpop.f32.mrf.mxu0
      %v1396 = vadd.f32 %v1194, %v1395
      %1397 = vdwg.mxu0
      %v1398 = vpack.c.bf16 %v1338, %v1336
      %v1399 = vpack.c.bf16 %v1343, %v1341
      %v1400 = vpack.c.bf16 %v1348, %v1346
      %v1401 = vpack.c.bf16 %v1362, %v1360
      %v1402 = vpack.c.bf16 %v1367, %v1365
      %v1403 = vpack.c.bf16 %v1372, %v1370
      %1404 = vmatpush.bf16.xpose.msra.mxu0 0
      %1405 = vmatpush.bf16.xpose.msra.mxu0 0
      %1406 = vmatpush.bf16.xpose.msra.mxu0 0
      %1407 = vmatpush.bf16.xpose.msra.mxu0 0
      %1408 = vmatpush.bf16.xpose.msra.mxu0 0
      %1409 = vmatpush.bf16.xpose.msra.mxu0 %v1403
      %1410 = vmatpush.bf16.xpose.msra.mxu0 %v1402
      %1411 = vmatpush.bf16.xpose.msra.mxu0 %v1401
      %1412 = vmatmul.bf16.gmra.mxu0 %v1398
      %v1413 = vpop.f32.mrf.mxu0
      %v1414 = vadd.f32 0.0, %v1413
      %v1415 = vpop.f32.mrf.mxu0
      %v1416 = vadd.f32 0.0, %v1415
      %1417 = vmatmul.bf16.gmra.mxu0 %v1399
      %v1418 = vpop.f32.mrf.mxu0
      %v1419 = vadd.f32 0.0, %v1418
      %v1420 = vpop.f32.mrf.mxu0
      %v1421 = vadd.f32 0.0, %v1420
      %1422 = vmatmul.bf16.gmra.mxu0 %v1400
      %v1423 = vpop.f32.mrf.mxu0
      %v1424 = vadd.f32 0.0, %v1423
      %v1425 = vpop.f32.mrf.mxu0
      %v1426 = vadd.f32 0.0, %v1425
      %1427 = vdwg.mxu0
      %v1428 = vmul.f32 %v1414, 0.088388346
      %v1429 = vmul.f32 %v1416, 0.088388346
      %v1430 = vmul.f32 %v1419, 0.088388346
      %v1431 = vmul.f32 %v1421, 0.088388346
      %v1432 = vmul.f32 %v1424, 0.088388346
      %v1433 = vmul.f32 %v1426, 0.088388346
      %v1434 = vlaneseq
      %v1435 = vshrl.u32 %v1434, 7
      %v1436 = vadd.s32 %v1435, 8
      %v1437 = vadd.s32 %v1435, 16
      %v1438 = vadd.s32 %v1435, 24
      %v1439 = vadd.s32 %v1435, 32
      %v1440 = vadd.s32 %v1435, 40
      %v1441 = vlaneseq
      %v1442 = vand.u32 %v1441, 127
      %vm1443 = vcmp.le.s32.totalorder %v1442, %v1435
      %vm1444 = vcmp.le.s32.totalorder %v1442, %v1436
      %vm1445 = vcmp.le.s32.totalorder %v1442, %v1437
      %vm1446 = vcmp.le.s32.totalorder %v1442, %v1438
      %vm1447 = vcmp.le.s32.totalorder %v1442, %v1439
      %vm1448 = vcmp.le.s32.totalorder %v1442, %v1440
      %vm1449 = vcmp.gt.f32.partialorder %v1007, 0.5
      %v1450 = vsel %vm1449, 1, 0
      %v1451 = vperm.slane %v1450, 0
      %vm1452 = vcmp.eq.s32.totalorder %v1451, 1
      %vm1453 = vmand %vm1443, %vm1452
      %vm1454 = vmand %vm1444, %vm1452
      %vm1455 = vmand %vm1445, %vm1452
      %vm1456 = vmand %vm1446, %vm1452
      %vm1457 = vmand %vm1447, %vm1452
      %vm1458 = vmand %vm1448, %vm1452
      %v1459 = vsel %vm1453, %v1428, -1e+30
      %v1460 = vsel %vm1454, %v1429, -1e+30
      %v1461 = vsel %vm1455, %v1430, -1e+30
      %v1462 = vsel %vm1456, %v1431, -1e+30
      %v1463 = vsel %vm1457, %v1432, -1e+30
      %v1464 = vsel %vm1458, %v1433, -1e+30
      %vm1465 = vcmask 392192
      %v1466 = vsel %vm1465, %v1459, -inf
      %1467 = vmax.xlane.f32.xlu0 %v1466
      %v1468 = vpop.xlane.xlu0 %1467
      %v1469 = vsel %vm1465, %v1460, -inf
      %1470 = vmax.xlane.f32.xlu0 %v1469
      %v1471 = vpop.xlane.xlu0 %1470
      %v1472 = vsel %vm1465, %v1461, -inf
      %1473 = vmax.xlane.f32.xlu0 %v1472
      %v1474 = vpop.xlane.xlu0 %1473
      %v1475 = vsel %vm1465, %v1462, -inf
      %1476 = vmax.xlane.f32.xlu0 %v1475
      %v1477 = vpop.xlane.xlu0 %1476
      %v1478 = vsel %vm1465, %v1463, -inf
      %1479 = vmax.xlane.f32.xlu0 %v1478
      %v1480 = vpop.xlane.xlu0 %1479
      %v1481 = vsel %vm1465, %v1464, -inf
      %1482 = vmax.xlane.f32.xlu0 %v1481
      %v1483 = vpop.xlane.xlu0 %1482
      %v1484 = vsub.f32 %v1459, %v1468
      %v1485 = vsub.f32 %v1460, %v1471
      %v1486 = vsub.f32 %v1461, %v1474
      %v1487 = vsub.f32 %v1462, %v1477
      %v1488 = vsub.f32 %v1463, %v1480
      %v1489 = vsub.f32 %v1464, %v1483
      %v1490 = vmul.f32 %v1484, 1.442695
      %v1491 = vpow.pop %v1490
      %v1492 = vmul.f32 %v1485, 1.442695
      %v1493 = vpow.pop %v1492
      %v1494 = vmul.f32 %v1486, 1.442695
      %v1495 = vpow.pop %v1494
      %v1496 = vmul.f32 %v1487, 1.442695
      %v1497 = vpow.pop %v1496
      %v1498 = vmul.f32 %v1488, 1.442695
      %v1499 = vpow.pop %v1498
      %v1500 = vmul.f32 %v1489, 1.442695
      %v1501 = vpow.pop %v1500
      %v1502 = vsel %vm1465, %v1491, 0.0
      %1503 = vadd.xlane.f32.xlu0 %v1502
      %v1504 = vpop.xlane.xlu0 %1503
      %v1505 = vsel %vm1465, %v1493, 0.0
      %1506 = vadd.xlane.f32.xlu0 %v1505
      %v1507 = vpop.xlane.xlu0 %1506
      %v1508 = vsel %vm1465, %v1495, 0.0
      %1509 = vadd.xlane.f32.xlu0 %v1508
      %v1510 = vpop.xlane.xlu0 %1509
      %v1511 = vsel %vm1465, %v1497, 0.0
      %1512 = vadd.xlane.f32.xlu0 %v1511
      %v1513 = vpop.xlane.xlu0 %1512
      %v1514 = vsel %vm1465, %v1499, 0.0
      %1515 = vadd.xlane.f32.xlu0 %v1514
      %v1516 = vpop.xlane.xlu0 %1515
      %v1517 = vsel %vm1465, %v1501, 0.0
      %1518 = vadd.xlane.f32.xlu0 %v1517
      %v1519 = vpop.xlane.xlu0 %1518
      %v1520 = vrcp.pop %v1504
      %v1521 = vmul.f32 %v1504, %v1520
      %v1522 = vsub.f32 1.0, %v1521
      %v1523 = vmul.f32 %v1520, %v1522
      %v1524 = vadd.f32 %v1520, %v1523
      %vm1525 = vweird.f32 %v1504
      %vm1526 = vweird.f32 %v1520
      %vm1527 = vmor %vm1525, %vm1526
      %v1528 = vsel %vm1527, %v1520, %v1524
      %v1529 = vand.u32 2147483647, %v1504
      %vm1530 = vcmp.eq.f32.partialorder %v1529, 8.507059e+37
      %v1531 = vand.u32 %v1504, 2147483648
      %v1532 = vor.u32 1.1754944e-38, %v1531
      %v1533 = vsel %vm1530, %v1532, %v1528
      %v1534 = vrcp.pop %v1507
      %v1535 = vmul.f32 %v1507, %v1534
      %v1536 = vsub.f32 1.0, %v1535
      %v1537 = vmul.f32 %v1534, %v1536
      %v1538 = vadd.f32 %v1534, %v1537
      %vm1539 = vweird.f32 %v1507
      %vm1540 = vweird.f32 %v1534
      %vm1541 = vmor %vm1539, %vm1540
      %v1542 = vsel %vm1541, %v1534, %v1538
      %v1543 = vand.u32 2147483647, %v1507
      %vm1544 = vcmp.eq.f32.partialorder %v1543, 8.507059e+37
      %v1545 = vand.u32 %v1507, 2147483648
      %v1546 = vor.u32 1.1754944e-38, %v1545
      %v1547 = vsel %vm1544, %v1546, %v1542
      %v1548 = vrcp.pop %v1510
      %v1549 = vmul.f32 %v1510, %v1548
      %v1550 = vsub.f32 1.0, %v1549
      %v1551 = vmul.f32 %v1548, %v1550
      %v1552 = vadd.f32 %v1548, %v1551
      %vm1553 = vweird.f32 %v1510
      %vm1554 = vweird.f32 %v1548
      %vm1555 = vmor %vm1553, %vm1554
      %v1556 = vsel %vm1555, %v1548, %v1552
      %v1557 = vand.u32 2147483647, %v1510
      %vm1558 = vcmp.eq.f32.partialorder %v1557, 8.507059e+37
      %v1559 = vand.u32 %v1510, 2147483648
      %v1560 = vor.u32 1.1754944e-38, %v1559
      %v1561 = vsel %vm1558, %v1560, %v1556
      %v1562 = vrcp.pop %v1513
      %v1563 = vmul.f32 %v1513, %v1562
      %v1564 = vsub.f32 1.0, %v1563
      %v1565 = vmul.f32 %v1562, %v1564
      %v1566 = vadd.f32 %v1562, %v1565
      %vm1567 = vweird.f32 %v1513
      %vm1568 = vweird.f32 %v1562
      %vm1569 = vmor %vm1567, %vm1568
      %v1570 = vsel %vm1569, %v1562, %v1566
      %v1571 = vand.u32 2147483647, %v1513
      %vm1572 = vcmp.eq.f32.partialorder %v1571, 8.507059e+37
      %v1573 = vand.u32 %v1513, 2147483648
      %v1574 = vor.u32 1.1754944e-38, %v1573
      %v1575 = vsel %vm1572, %v1574, %v1570
      %v1576 = vrcp.pop %v1516
      %v1577 = vmul.f32 %v1516, %v1576
      %v1578 = vsub.f32 1.0, %v1577
      %v1579 = vmul.f32 %v1576, %v1578
      %v1580 = vadd.f32 %v1576, %v1579
      %vm1581 = vweird.f32 %v1516
      %vm1582 = vweird.f32 %v1576
      %vm1583 = vmor %vm1581, %vm1582
      %v1584 = vsel %vm1583, %v1576, %v1580
      %v1585 = vand.u32 2147483647, %v1516
      %vm1586 = vcmp.eq.f32.partialorder %v1585, 8.507059e+37
      %v1587 = vand.u32 %v1516, 2147483648
      %v1588 = vor.u32 1.1754944e-38, %v1587
      %v1589 = vsel %vm1586, %v1588, %v1584
      %v1590 = vrcp.pop %v1519
      %v1591 = vmul.f32 %v1519, %v1590
      %v1592 = vsub.f32 1.0, %v1591
      %v1593 = vmul.f32 %v1590, %v1592
      %v1594 = vadd.f32 %v1590, %v1593
      %vm1595 = vweird.f32 %v1519
      %vm1596 = vweird.f32 %v1590
      %vm1597 = vmor %vm1595, %vm1596
      %v1598 = vsel %vm1597, %v1590, %v1594
      %v1599 = vand.u32 2147483647, %v1519
      %vm1600 = vcmp.eq.f32.partialorder %v1599, 8.507059e+37
      %v1601 = vand.u32 %v1519, 2147483648
      %v1602 = vor.u32 1.1754944e-38, %v1601
      %v1603 = vsel %vm1600, %v1602, %v1598
      %v1604 = vmul.f32 %v1491, %v1533
      %v1605 = vmul.f32 %v1493, %v1547
      %v1606 = vmul.f32 %v1495, %v1561
      %v1607 = vmul.f32 %v1497, %v1575
      %v1608 = vmul.f32 %v1499, %v1589
      %v1609 = vmul.f32 %v1501, %v1603
      %v1610 = vpack.c.bf16 %v1605, %v1604
      %v1611 = vpack.c.bf16 %v1607, %v1606
      %v1612 = vpack.c.bf16 %v1609, %v1608
      %v1613 = vpack.c.bf16 %v1386, %v1384
      %v1614 = vpack.c.bf16 %v1391, %v1389
      %v1615 = vpack.c.bf16 %v1396, %v1394
      %v1617 = vsel %vm1465, %v1610, 0
      %v1620 = vsel %vm1465, %v1611, 0
      %v1623 = vsel %vm1465, %v1612, 0
      %1625 = vmatpush.bf16.msra.mxu0 0
      %1626 = vmatpush.bf16.msra.mxu0 0
      %1627 = vmatpush.bf16.msra.mxu0 0
      %1628 = vmatpush.bf16.msra.mxu0 0
      %1629 = vmatpush.bf16.msra.mxu0 0
      %1630 = vmatpush.bf16.msra.mxu0 %v1615
      %1631 = vmatpush.bf16.msra.mxu0 %v1614
      %1632 = vmatpush.bf16.msra.mxu0 %v1613
      %1633 = vmatmul.bf16.gmra.mxu0 %v1617
      %v1634 = vpop.f32.mrf.mxu0
      %v1635 = vadd.f32 0.0, %v1634
      %v1636 = vpop.f32.mrf.mxu0
      %v1637 = vadd.f32 0.0, %v1636
      %1638 = vmatmul.bf16.gmra.mxu0 %v1620
      %v1639 = vpop.f32.mrf.mxu0
      %v1640 = vadd.f32 0.0, %v1639
      %v1641 = vpop.f32.mrf.mxu0
      %v1642 = vadd.f32 0.0, %v1641
      %1643 = vmatmul.bf16.gmra.mxu0 %v1623
      %v1644 = vpop.f32.mrf.mxu0
      %v1645 = vadd.f32 0.0, %v1644
      %v1646 = vpop.f32.mrf.mxu0
      %v1647 = vadd.f32 0.0, %v1646
      %1648 = vdwg.mxu0
      %v1649 = vpack.c.bf16 %v1637, %v1635
      %v1650 = vpack.c.bf16 %v1642, %v1640
      %v1651 = vpack.c.bf16 %v1647, %v1645
      %v1652 = vld [vmem:[%s12] sm:$0xf]
      %v1653 = vld [vmem:[%s12 + $0x4] sm:$0xf]
      %v1654 = vld [vmem:[%s12 + $0x8] sm:$0xf]
      %v1655 = vld [vmem:[%s12 + $0xc] sm:$0xf]
      %v1656 = vld [vmem:[%s12 + $0x10] sm:$0xf]
      %v1657 = vld [vmem:[%s12 + $0x14] sm:$0xf]
      %v1658 = vld [vmem:[%s12 + $0x18] sm:$0xf]
      %v1659 = vld [vmem:[%s12 + $0x1c] sm:$0xf]
      %v1660 = vld [vmem:[%s12 + $0x20] sm:$0xf]
      %v1661 = vld [vmem:[%s12 + $0x24] sm:$0xf]
      %v1662 = vld [vmem:[%s12 + $0x28] sm:$0xf]
      %v1663 = vld [vmem:[%s12 + $0x2c] sm:$0xf]
      %v1664 = vld [vmem:[%s12 + $0x30] sm:$0xf]
      %v1665 = vld [vmem:[%s12 + $0x34] sm:$0xf]
      %v1666 = vld [vmem:[%s12 + $0x38] sm:$0xf]
      %v1667 = vld [vmem:[%s12 + $0x3c] sm:$0xf]
      %v1668 = vld [vmem:[%s13] sm:$0x1]
      %v1670 = vperm.slane %v1668, 0
      %v1688 = vunpack.c.l.b16 %v1652
      %v1689 = vunpack.c.l.b16 %v1653
      %v1690 = vunpack.c.l.b16 %v1654
      %v1691 = vunpack.c.l.b16 %v1655
      %v1692 = vunpack.c.l.b16 %v1656
      %v1693 = vunpack.c.l.b16 %v1657
      %v1694 = vunpack.c.l.b16 %v1658
      %v1695 = vunpack.c.l.b16 %v1659
      %v1696 = vunpack.c.l.b16 %v1660
      %v1697 = vunpack.c.l.b16 %v1661
      %v1698 = vunpack.c.l.b16 %v1662
      %v1699 = vunpack.c.l.b16 %v1663
      %v1700 = vunpack.c.l.b16 %v1664
      %v1701 = vunpack.c.l.b16 %v1665
      %v1702 = vunpack.c.l.b16 %v1666
      %v1703 = vunpack.c.l.b16 %v1667
      %v1704 = vpack.c.b16 %v1689, %v1688
      %v1705 = vpack.c.b16 %v1691, %v1690
      %v1706 = vpack.c.b16 %v1693, %v1692
      %v1707 = vpack.c.b16 %v1695, %v1694
      %v1708 = vpack.c.b16 %v1697, %v1696
      %v1709 = vpack.c.b16 %v1699, %v1698
      %v1710 = vpack.c.b16 %v1701, %v1700
      %v1711 = vpack.c.b16 %v1703, %v1702
      %1720 = vmatpush.bf16.msra.mxu0 %v1711
      %1721 = vmatpush.bf16.msra.mxu0 %v1710
      %1722 = vmatpush.bf16.msra.mxu0 %v1709
      %1723 = vmatpush.bf16.msra.mxu0 %v1708
      %1724 = vmatpush.bf16.msra.mxu0 %v1707
      %1725 = vmatpush.bf16.msra.mxu0 %v1706
      %1726 = vmatpush.bf16.msra.mxu0 %v1705
      %1727 = vmatpush.bf16.msra.mxu0 %v1704
      %1728 = vmatmul.bf16.gmra.mxu0 %v1649
      %v1729 = vpop.f32.mrf.mxu0
      %v1730 = vadd.f32 %v1670, %v1729
      %v1731 = vpop.f32.mrf.mxu0
      %v1732 = vadd.f32 %v1670, %v1731
      %1733 = vmatmul.bf16.gmra.mxu0 %v1650
      %v1734 = vpop.f32.mrf.mxu0
      %v1735 = vadd.f32 %v1670, %v1734
      %v1736 = vpop.f32.mrf.mxu0
      %v1737 = vadd.f32 %v1670, %v1736
      %1738 = vmatmul.bf16.gmra.mxu0 %v1651
      %v1739 = vpop.f32.mrf.mxu0
      %v1740 = vadd.f32 %v1670, %v1739
      %v1741 = vpop.f32.mrf.mxu0
      %v1742 = vadd.f32 %v1670, %v1741
      %1743 = vdwg.mxu0
      %v1744 = vadd.f32 %v1001, %v1730
      %v1745 = vadd.f32 %v1002, %v1732
      %v1746 = vadd.f32 %v1003, %v1735
      %v1747 = vadd.f32 %v1004, %v1737
      %v1748 = vadd.f32 %v1005, %v1740
      %v1749 = vadd.f32 %v1006, %v1742
      %1750 = vadd.xlane.f32.xlu0 %v1744
      %v1751 = vpop.xlane.xlu0 %1750
      %1752 = vadd.xlane.f32.xlu0 %v1745
      %v1753 = vpop.xlane.xlu0 %1752
      %1754 = vadd.xlane.f32.xlu0 %v1746
      %v1755 = vpop.xlane.xlu0 %1754
      %1756 = vadd.xlane.f32.xlu0 %v1747
      %v1757 = vpop.xlane.xlu0 %1756
      %1758 = vadd.xlane.f32.xlu0 %v1748
      %v1759 = vpop.xlane.xlu0 %1758
      %1760 = vadd.xlane.f32.xlu0 %v1749
      %v1761 = vpop.xlane.xlu0 %1760
      %v1762 = vmul.f32 %v1751, %v1026
      %v1763 = vmul.f32 %v1753, %v1026
      %v1764 = vmul.f32 %v1755, %v1026
      %v1765 = vmul.f32 %v1757, %v1026
      %v1766 = vmul.f32 %v1759, %v1026
      %v1767 = vmul.f32 %v1761, %v1026
      %v1768 = vsub.f32 %v1744, %v1762
      %v1769 = vsub.f32 %v1745, %v1763
      %v1770 = vsub.f32 %v1746, %v1764
      %v1771 = vsub.f32 %v1747, %v1765
      %v1772 = vsub.f32 %v1748, %v1766
      %v1773 = vsub.f32 %v1749, %v1767
      %v1774 = vmul.f32 %v1768, %v1768
      %v1775 = vmul.f32 %v1769, %v1769
      %v1776 = vmul.f32 %v1770, %v1770
      %v1777 = vmul.f32 %v1771, %v1771
      %v1778 = vmul.f32 %v1772, %v1772
      %v1779 = vmul.f32 %v1773, %v1773
      %1780 = vadd.xlane.f32.xlu0 %v1774
      %v1781 = vpop.xlane.xlu0 %1780
      %1782 = vadd.xlane.f32.xlu0 %v1775
      %v1783 = vpop.xlane.xlu0 %1782
      %1784 = vadd.xlane.f32.xlu0 %v1776
      %v1785 = vpop.xlane.xlu0 %1784
      %1786 = vadd.xlane.f32.xlu0 %v1777
      %v1787 = vpop.xlane.xlu0 %1786
      %1788 = vadd.xlane.f32.xlu0 %v1778
      %v1789 = vpop.xlane.xlu0 %1788
      %1790 = vadd.xlane.f32.xlu0 %v1779
      %v1791 = vpop.xlane.xlu0 %1790
      %v1792 = vmul.f32 %v1781, %v1026
      %v1793 = vmul.f32 %v1783, %v1026
      %v1794 = vmul.f32 %v1785, %v1026
      %v1795 = vmul.f32 %v1787, %v1026
      %v1796 = vmul.f32 %v1789, %v1026
      %v1797 = vmul.f32 %v1791, %v1026
      %v1798 = vadd.f32 %v1792, 1e-05
      %v1799 = vadd.f32 %v1793, 1e-05
      %v1800 = vadd.f32 %v1794, 1e-05
      %v1801 = vadd.f32 %v1795, 1e-05
      %v1802 = vadd.f32 %v1796, 1e-05
      %v1803 = vadd.f32 %v1797, 1e-05
      %v1804 = vrsqrt.pop %v1798
      %v1805 = vmul.f32 %v1804, %v1798
      %v1806 = vmul.f32 %v1805, %v1804
      %v1807 = vmul.f32 0.5, %v1806
      %v1808 = vsub.f32 1.5, %v1807
      %v1809 = vmul.f32 %v1804, %v1808
      %vm1810 = vweird.f32 %v1798
      %vm1811 = vweird.f32 %v1804
      %vm1812 = vmor %vm1810, %vm1811
      %v1813 = vsel %vm1812, %v1804, %v1809
      %v1814 = vrsqrt.pop %v1799
      %v1815 = vmul.f32 %v1814, %v1799
      %v1816 = vmul.f32 %v1815, %v1814
      %v1817 = vmul.f32 0.5, %v1816
      %v1818 = vsub.f32 1.5, %v1817
      %v1819 = vmul.f32 %v1814, %v1818
      %vm1820 = vweird.f32 %v1799
      %vm1821 = vweird.f32 %v1814
      %vm1822 = vmor %vm1820, %vm1821
      %v1823 = vsel %vm1822, %v1814, %v1819
      %v1824 = vrsqrt.pop %v1800
      %v1825 = vmul.f32 %v1824, %v1800
      %v1826 = vmul.f32 %v1825, %v1824
      %v1827 = vmul.f32 0.5, %v1826
      %v1828 = vsub.f32 1.5, %v1827
      %v1829 = vmul.f32 %v1824, %v1828
      %vm1830 = vweird.f32 %v1800
      %vm1831 = vweird.f32 %v1824
      %vm1832 = vmor %vm1830, %vm1831
      %v1833 = vsel %vm1832, %v1824, %v1829
      %v1834 = vrsqrt.pop %v1801
      %v1835 = vmul.f32 %v1834, %v1801
      %v1836 = vmul.f32 %v1835, %v1834
      %v1837 = vmul.f32 0.5, %v1836
      %v1838 = vsub.f32 1.5, %v1837
      %v1839 = vmul.f32 %v1834, %v1838
      %vm1840 = vweird.f32 %v1801
      %vm1841 = vweird.f32 %v1834
      %vm1842 = vmor %vm1840, %vm1841
      %v1843 = vsel %vm1842, %v1834, %v1839
      %v1844 = vrsqrt.pop %v1802
      %v1845 = vmul.f32 %v1844, %v1802
      %v1846 = vmul.f32 %v1845, %v1844
      %v1847 = vmul.f32 0.5, %v1846
      %v1848 = vsub.f32 1.5, %v1847
      %v1849 = vmul.f32 %v1844, %v1848
      %vm1850 = vweird.f32 %v1802
      %vm1851 = vweird.f32 %v1844
      %vm1852 = vmor %vm1850, %vm1851
      %v1853 = vsel %vm1852, %v1844, %v1849
      %v1854 = vrsqrt.pop %v1803
      %v1855 = vmul.f32 %v1854, %v1803
      %v1856 = vmul.f32 %v1855, %v1854
      %v1857 = vmul.f32 0.5, %v1856
      %v1858 = vsub.f32 1.5, %v1857
      %v1859 = vmul.f32 %v1854, %v1858
      %vm1860 = vweird.f32 %v1803
      %vm1861 = vweird.f32 %v1854
      %vm1862 = vmor %vm1860, %vm1861
      %v1863 = vsel %vm1862, %v1854, %v1859
      %v1864 = vmul.f32 %v1768, %v1813
      %v1865 = vmul.f32 %v1769, %v1823
      %v1866 = vmul.f32 %v1770, %v1833
      %v1867 = vmul.f32 %v1771, %v1843
      %v1868 = vmul.f32 %v1772, %v1853
      %v1869 = vmul.f32 %v1773, %v1863
      %v1870 = vld [vmem:[%s14] sm:$0x1]
      %v1872 = vperm.slane %v1870, 0
      %v1874 = vmul.f32 %v1864, %v1872
      %v1875 = vmul.f32 %v1865, %v1872
      %v1876 = vmul.f32 %v1866, %v1872
      %v1877 = vmul.f32 %v1867, %v1872
      %v1878 = vmul.f32 %v1868, %v1872
      %v1879 = vmul.f32 %v1869, %v1872
      %v1880 = vld [vmem:[%s15] sm:$0x1]
      %v1882 = vperm.slane %v1880, 0
      %v1884 = vadd.f32 %v1874, %v1882
      %v1885 = vadd.f32 %v1875, %v1882
      %v1886 = vadd.f32 %v1876, %v1882
      %v1887 = vadd.f32 %v1877, %v1882
      %v1888 = vadd.f32 %v1878, %v1882
      %v1889 = vadd.f32 %v1879, %v1882
      %v1890 = vpack.c.bf16 %v1885, %v1884
      %v1891 = vpack.c.bf16 %v1887, %v1886
      %v1892 = vpack.c.bf16 %v1889, %v1888
      %v1893 = vld [vmem:[%s16] sm:$0xff]
      %v1894 = vld [vmem:[%s16 + $0x8] sm:$0xff]
      %v1895 = vld [vmem:[%s16 + $0x10] sm:$0xff]
      %v1896 = vld [vmem:[%s16 + $0x18] sm:$0xff]
      %v1897 = vld [vmem:[%s16 + $0x20] sm:$0xff]
      %v1898 = vld [vmem:[%s16 + $0x28] sm:$0xff]
      %v1899 = vld [vmem:[%s16 + $0x30] sm:$0xff]
      %v1900 = vld [vmem:[%s16 + $0x38] sm:$0xff]
      %v1901 = vld [vmem:[%s16 + $0x40] sm:$0xff]
      %v1902 = vld [vmem:[%s16 + $0x48] sm:$0xff]
      %v1903 = vld [vmem:[%s16 + $0x50] sm:$0xff]
      %v1904 = vld [vmem:[%s16 + $0x58] sm:$0xff]
      %v1905 = vld [vmem:[%s16 + $0x60] sm:$0xff]
      %v1906 = vld [vmem:[%s16 + $0x68] sm:$0xff]
      %v1907 = vld [vmem:[%s16 + $0x70] sm:$0xff]
      %v1908 = vld [vmem:[%s16 + $0x78] sm:$0xff]
      %v1909 = vld [vmem:[%s17] sm:$0x3]
      %v1911 = vperm.slane %v1909, 0
      %v1912 = vperm.slane %v1909, 1
      %v1931 = vunpack.c.l.b16 %v1893
      %v1932 = vunpack.c.h.b16 %v1893
      %v1933 = vunpack.c.l.b16 %v1894
      %v1934 = vunpack.c.h.b16 %v1894
      %v1935 = vunpack.c.l.b16 %v1895
      %v1936 = vunpack.c.h.b16 %v1895
      %v1937 = vunpack.c.l.b16 %v1896
      %v1938 = vunpack.c.h.b16 %v1896
      %v1939 = vunpack.c.l.b16 %v1897
      %v1940 = vunpack.c.h.b16 %v1897
      %v1941 = vunpack.c.l.b16 %v1898
      %v1942 = vunpack.c.h.b16 %v1898
      %v1943 = vunpack.c.l.b16 %v1899
      %v1944 = vunpack.c.h.b16 %v1899
      %v1945 = vunpack.c.l.b16 %v1900
      %v1946 = vunpack.c.h.b16 %v1900
      %v1947 = vunpack.c.l.b16 %v1901
      %v1948 = vunpack.c.h.b16 %v1901
      %v1949 = vunpack.c.l.b16 %v1902
      %v1950 = vunpack.c.h.b16 %v1902
      %v1951 = vunpack.c.l.b16 %v1903
      %v1952 = vunpack.c.h.b16 %v1903
      %v1953 = vunpack.c.l.b16 %v1904
      %v1954 = vunpack.c.h.b16 %v1904
      %v1955 = vunpack.c.l.b16 %v1905
      %v1956 = vunpack.c.h.b16 %v1905
      %v1957 = vunpack.c.l.b16 %v1906
      %v1958 = vunpack.c.h.b16 %v1906
      %v1959 = vunpack.c.l.b16 %v1907
      %v1960 = vunpack.c.h.b16 %v1907
      %v1961 = vunpack.c.l.b16 %v1908
      %v1962 = vunpack.c.h.b16 %v1908
      %v1963 = vpack.c.b16 %v1933, %v1931
      %v1964 = vpack.c.b16 %v1934, %v1932
      %v1965 = vpack.c.b16 %v1937, %v1935
      %v1966 = vpack.c.b16 %v1938, %v1936
      %v1967 = vpack.c.b16 %v1941, %v1939
      %v1968 = vpack.c.b16 %v1942, %v1940
      %v1969 = vpack.c.b16 %v1945, %v1943
      %v1970 = vpack.c.b16 %v1946, %v1944
      %v1971 = vpack.c.b16 %v1949, %v1947
      %v1972 = vpack.c.b16 %v1950, %v1948
      %v1973 = vpack.c.b16 %v1953, %v1951
      %v1974 = vpack.c.b16 %v1954, %v1952
      %v1975 = vpack.c.b16 %v1957, %v1955
      %v1976 = vpack.c.b16 %v1958, %v1956
      %v1977 = vpack.c.b16 %v1961, %v1959
      %v1978 = vpack.c.b16 %v1962, %v1960
      %1995 = vmatpush.bf16.msra.mxu0 %v1977
      %1996 = vmatpush.bf16.msra.mxu0 %v1975
      %1997 = vmatpush.bf16.msra.mxu0 %v1973
      %1998 = vmatpush.bf16.msra.mxu0 %v1971
      %1999 = vmatpush.bf16.msra.mxu0 %v1969
      %2000 = vmatpush.bf16.msra.mxu0 %v1967
      %2001 = vmatpush.bf16.msra.mxu0 %v1965
      %2002 = vmatpush.bf16.msra.mxu0 %v1963
      %2003 = vmatmul.bf16.gmra.mxu0 %v1890
      %v2004 = vpop.f32.mrf.mxu0
      %v2005 = vadd.f32 %v1911, %v2004
      %v2006 = vpop.f32.mrf.mxu0
      %v2007 = vadd.f32 %v1911, %v2006
      %2008 = vmatmul.bf16.gmra.mxu0 %v1891
      %v2009 = vpop.f32.mrf.mxu0
      %v2010 = vadd.f32 %v1911, %v2009
      %v2011 = vpop.f32.mrf.mxu0
      %v2012 = vadd.f32 %v1911, %v2011
      %2013 = vmatmul.bf16.gmra.mxu0 %v1892
      %v2014 = vpop.f32.mrf.mxu0
      %v2015 = vadd.f32 %v1911, %v2014
      %v2016 = vpop.f32.mrf.mxu0
      %v2017 = vadd.f32 %v1911, %v2016
      %2018 = vdwg.mxu0
      %2019 = vmatpush.bf16.msra.mxu0 %v1978
      %2020 = vmatpush.bf16.msra.mxu0 %v1976
      %2021 = vmatpush.bf16.msra.mxu0 %v1974
      %2022 = vmatpush.bf16.msra.mxu0 %v1972
      %2023 = vmatpush.bf16.msra.mxu0 %v1970
      %2024 = vmatpush.bf16.msra.mxu0 %v1968
      %2025 = vmatpush.bf16.msra.mxu0 %v1966
      %2026 = vmatpush.bf16.msra.mxu0 %v1964
      %2027 = vmatmul.bf16.gmra.mxu0 %v1890
      %v2028 = vpop.f32.mrf.mxu0
      %v2029 = vadd.f32 %v1912, %v2028
      %v2030 = vpop.f32.mrf.mxu0
      %v2031 = vadd.f32 %v1912, %v2030
      %2032 = vmatmul.bf16.gmra.mxu0 %v1891
      %v2033 = vpop.f32.mrf.mxu0
      %v2034 = vadd.f32 %v1912, %v2033
      %v2035 = vpop.f32.mrf.mxu0
      %v2036 = vadd.f32 %v1912, %v2035
      %2037 = vmatmul.bf16.gmra.mxu0 %v1892
      %v2038 = vpop.f32.mrf.mxu0
      %v2039 = vadd.f32 %v1912, %v2038
      %v2040 = vpop.f32.mrf.mxu0
      %v2041 = vadd.f32 %v1912, %v2040
      %2042 = vdwg.mxu0
      %v2043 = vmul.f32 %v2005, %v2005
      %v2044 = vmul.f32 %v2029, %v2029
      %v2045 = vmul.f32 %v2007, %v2007
      %v2046 = vmul.f32 %v2031, %v2031
      %v2047 = vmul.f32 %v2010, %v2010
      %v2048 = vmul.f32 %v2034, %v2034
      %v2049 = vmul.f32 %v2012, %v2012
      %v2050 = vmul.f32 %v2036, %v2036
      %v2051 = vmul.f32 %v2015, %v2015
      %v2052 = vmul.f32 %v2039, %v2039
      %v2053 = vmul.f32 %v2017, %v2017
      %v2054 = vmul.f32 %v2041, %v2041
      %v2055 = vmul.f32 %v2005, %v2043
      %v2056 = vmul.f32 %v2029, %v2044
      %v2057 = vmul.f32 %v2007, %v2045
      %v2058 = vmul.f32 %v2031, %v2046
      %v2059 = vmul.f32 %v2010, %v2047
      %v2060 = vmul.f32 %v2034, %v2048
      %v2061 = vmul.f32 %v2012, %v2049
      %v2062 = vmul.f32 %v2036, %v2050
      %v2063 = vmul.f32 %v2015, %v2051
      %v2064 = vmul.f32 %v2039, %v2052
      %v2065 = vmul.f32 %v2017, %v2053
      %v2066 = vmul.f32 %v2041, %v2054
      %v2067 = vmul.f32 %v2055, 0.044715
      %v2068 = vmul.f32 %v2056, 0.044715
      %v2069 = vmul.f32 %v2057, 0.044715
      %v2070 = vmul.f32 %v2058, 0.044715
      %v2071 = vmul.f32 %v2059, 0.044715
      %v2072 = vmul.f32 %v2060, 0.044715
      %v2073 = vmul.f32 %v2061, 0.044715
      %v2074 = vmul.f32 %v2062, 0.044715
      %v2075 = vmul.f32 %v2063, 0.044715
      %v2076 = vmul.f32 %v2064, 0.044715
      %v2077 = vmul.f32 %v2065, 0.044715
      %v2078 = vmul.f32 %v2066, 0.044715
      %v2079 = vadd.f32 %v2005, %v2067
      %v2080 = vadd.f32 %v2029, %v2068
      %v2081 = vadd.f32 %v2007, %v2069
      %v2082 = vadd.f32 %v2031, %v2070
      %v2083 = vadd.f32 %v2010, %v2071
      %v2084 = vadd.f32 %v2034, %v2072
      %v2085 = vadd.f32 %v2012, %v2073
      %v2086 = vadd.f32 %v2036, %v2074
      %v2087 = vadd.f32 %v2015, %v2075
      %v2088 = vadd.f32 %v2039, %v2076
      %v2089 = vadd.f32 %v2017, %v2077
      %v2090 = vadd.f32 %v2041, %v2078
      %v2091 = vmul.f32 %v2079, 0.7978846
      %v2092 = vmul.f32 %v2080, 0.7978846
      %v2093 = vmul.f32 %v2081, 0.7978846
      %v2094 = vmul.f32 %v2082, 0.7978846
      %v2095 = vmul.f32 %v2083, 0.7978846
      %v2096 = vmul.f32 %v2084, 0.7978846
      %v2097 = vmul.f32 %v2085, 0.7978846
      %v2098 = vmul.f32 %v2086, 0.7978846
      %v2099 = vmul.f32 %v2087, 0.7978846
      %v2100 = vmul.f32 %v2088, 0.7978846
      %v2101 = vmul.f32 %v2089, 0.7978846
      %v2102 = vmul.f32 %v2090, 0.7978846
      %v2103 = vtanh.pop %v2091
      %v2104 = vtanh.pop %v2092
      %v2105 = vtanh.pop %v2093
      %v2106 = vtanh.pop %v2094
      %v2107 = vtanh.pop %v2095
      %v2108 = vtanh.pop %v2096
      %v2109 = vtanh.pop %v2097
      %v2110 = vtanh.pop %v2098
      %v2111 = vtanh.pop %v2099
      %v2112 = vtanh.pop %v2100
      %v2113 = vtanh.pop %v2101
      %v2114 = vtanh.pop %v2102
      %v2115 = vadd.f32 %v2103, 1.0
      %v2116 = vadd.f32 %v2104, 1.0
      %v2117 = vadd.f32 %v2105, 1.0
      %v2118 = vadd.f32 %v2106, 1.0
      %v2119 = vadd.f32 %v2107, 1.0
      %v2120 = vadd.f32 %v2108, 1.0
      %v2121 = vadd.f32 %v2109, 1.0
      %v2122 = vadd.f32 %v2110, 1.0
      %v2123 = vadd.f32 %v2111, 1.0
      %v2124 = vadd.f32 %v2112, 1.0
      %v2125 = vadd.f32 %v2113, 1.0
      %v2126 = vadd.f32 %v2114, 1.0
      %v2127 = vmul.f32 %v2115, 0.5
      %v2128 = vmul.f32 %v2116, 0.5
      %v2129 = vmul.f32 %v2117, 0.5
      %v2130 = vmul.f32 %v2118, 0.5
      %v2131 = vmul.f32 %v2119, 0.5
      %v2132 = vmul.f32 %v2120, 0.5
      %v2133 = vmul.f32 %v2121, 0.5
      %v2134 = vmul.f32 %v2122, 0.5
      %v2135 = vmul.f32 %v2123, 0.5
      %v2136 = vmul.f32 %v2124, 0.5
      %v2137 = vmul.f32 %v2125, 0.5
      %v2138 = vmul.f32 %v2126, 0.5
      %v2139 = vmul.f32 %v2005, %v2127
      %v2140 = vmul.f32 %v2029, %v2128
      %v2141 = vmul.f32 %v2007, %v2129
      %v2142 = vmul.f32 %v2031, %v2130
      %v2143 = vmul.f32 %v2010, %v2131
      %v2144 = vmul.f32 %v2034, %v2132
      %v2145 = vmul.f32 %v2012, %v2133
      %v2146 = vmul.f32 %v2036, %v2134
      %v2147 = vmul.f32 %v2015, %v2135
      %v2148 = vmul.f32 %v2039, %v2136
      %v2149 = vmul.f32 %v2017, %v2137
      %v2150 = vmul.f32 %v2041, %v2138
      %v2151 = vpack.c.bf16 %v2141, %v2139
      %v2152 = vpack.c.bf16 %v2142, %v2140
      %v2153 = vpack.c.bf16 %v2145, %v2143
      %v2154 = vpack.c.bf16 %v2146, %v2144
      %v2155 = vpack.c.bf16 %v2149, %v2147
      %v2156 = vpack.c.bf16 %v2150, %v2148
      %v2157 = vld [vmem:[%s18] sm:$0xf]
      %v2158 = vld [vmem:[%s18 + $0x4] sm:$0xf]
      %v2159 = vld [vmem:[%s18 + $0x8] sm:$0xf]
      %v2160 = vld [vmem:[%s18 + $0xc] sm:$0xf]
      %v2161 = vld [vmem:[%s18 + $0x10] sm:$0xf]
      %v2162 = vld [vmem:[%s18 + $0x14] sm:$0xf]
      %v2163 = vld [vmem:[%s18 + $0x18] sm:$0xf]
      %v2164 = vld [vmem:[%s18 + $0x1c] sm:$0xf]
      %v2165 = vld [vmem:[%s18 + $0x20] sm:$0xf]
      %v2166 = vld [vmem:[%s18 + $0x24] sm:$0xf]
      %v2167 = vld [vmem:[%s18 + $0x28] sm:$0xf]
      %v2168 = vld [vmem:[%s18 + $0x2c] sm:$0xf]
      %v2169 = vld [vmem:[%s18 + $0x30] sm:$0xf]
      %v2170 = vld [vmem:[%s18 + $0x34] sm:$0xf]
      %v2171 = vld [vmem:[%s18 + $0x38] sm:$0xf]
      %v2172 = vld [vmem:[%s18 + $0x3c] sm:$0xf]
      %v2173 = vld [vmem:[%s18 + $0x40] sm:$0xf]
      %v2174 = vld [vmem:[%s18 + $0x44] sm:$0xf]
      %v2175 = vld [vmem:[%s18 + $0x48] sm:$0xf]
      %v2176 = vld [vmem:[%s18 + $0x4c] sm:$0xf]
      %v2177 = vld [vmem:[%s18 + $0x50] sm:$0xf]
      %v2178 = vld [vmem:[%s18 + $0x54] sm:$0xf]
      %v2179 = vld [vmem:[%s18 + $0x58] sm:$0xf]
      %v2180 = vld [vmem:[%s18 + $0x5c] sm:$0xf]
      %v2181 = vld [vmem:[%s18 + $0x60] sm:$0xf]
      %v2182 = vld [vmem:[%s18 + $0x64] sm:$0xf]
      %v2183 = vld [vmem:[%s18 + $0x68] sm:$0xf]
      %v2184 = vld [vmem:[%s18 + $0x6c] sm:$0xf]
      %v2185 = vld [vmem:[%s18 + $0x70] sm:$0xf]
      %v2186 = vld [vmem:[%s18 + $0x74] sm:$0xf]
      %v2187 = vld [vmem:[%s18 + $0x78] sm:$0xf]
      %v2188 = vld [vmem:[%s18 + $0x7c] sm:$0xf]
      %v2189 = vld [vmem:[%s19] sm:$0x1]
      %v2191 = vperm.slane %v2189, 0
      %v2225 = vunpack.c.l.b16 %v2157
      %v2226 = vunpack.c.l.b16 %v2158
      %v2227 = vunpack.c.l.b16 %v2159
      %v2228 = vunpack.c.l.b16 %v2160
      %v2229 = vunpack.c.l.b16 %v2161
      %v2230 = vunpack.c.l.b16 %v2162
      %v2231 = vunpack.c.l.b16 %v2163
      %v2232 = vunpack.c.l.b16 %v2164
      %v2233 = vunpack.c.l.b16 %v2165
      %v2234 = vunpack.c.l.b16 %v2166
      %v2235 = vunpack.c.l.b16 %v2167
      %v2236 = vunpack.c.l.b16 %v2168
      %v2237 = vunpack.c.l.b16 %v2169
      %v2238 = vunpack.c.l.b16 %v2170
      %v2239 = vunpack.c.l.b16 %v2171
      %v2240 = vunpack.c.l.b16 %v2172
      %v2241 = vunpack.c.l.b16 %v2173
      %v2242 = vunpack.c.l.b16 %v2174
      %v2243 = vunpack.c.l.b16 %v2175
      %v2244 = vunpack.c.l.b16 %v2176
      %v2245 = vunpack.c.l.b16 %v2177
      %v2246 = vunpack.c.l.b16 %v2178
      %v2247 = vunpack.c.l.b16 %v2179
      %v2248 = vunpack.c.l.b16 %v2180
      %v2249 = vunpack.c.l.b16 %v2181
      %v2250 = vunpack.c.l.b16 %v2182
      %v2251 = vunpack.c.l.b16 %v2183
      %v2252 = vunpack.c.l.b16 %v2184
      %v2253 = vunpack.c.l.b16 %v2185
      %v2254 = vunpack.c.l.b16 %v2186
      %v2255 = vunpack.c.l.b16 %v2187
      %v2256 = vunpack.c.l.b16 %v2188
      %v2257 = vpack.c.b16 %v2226, %v2225
      %v2258 = vpack.c.b16 %v2228, %v2227
      %v2259 = vpack.c.b16 %v2230, %v2229
      %v2260 = vpack.c.b16 %v2232, %v2231
      %v2261 = vpack.c.b16 %v2234, %v2233
      %v2262 = vpack.c.b16 %v2236, %v2235
      %v2263 = vpack.c.b16 %v2238, %v2237
      %v2264 = vpack.c.b16 %v2240, %v2239
      %v2265 = vpack.c.b16 %v2242, %v2241
      %v2266 = vpack.c.b16 %v2244, %v2243
      %v2267 = vpack.c.b16 %v2246, %v2245
      %v2268 = vpack.c.b16 %v2248, %v2247
      %v2269 = vpack.c.b16 %v2250, %v2249
      %v2270 = vpack.c.b16 %v2252, %v2251
      %v2271 = vpack.c.b16 %v2254, %v2253
      %v2272 = vpack.c.b16 %v2256, %v2255
      %2289 = vmatpush.bf16.msra.mxu0 %v2264
      %2290 = vmatpush.bf16.msra.mxu0 %v2263
      %2291 = vmatpush.bf16.msra.mxu0 %v2262
      %2292 = vmatpush.bf16.msra.mxu0 %v2261
      %2293 = vmatpush.bf16.msra.mxu0 %v2260
      %2294 = vmatpush.bf16.msra.mxu0 %v2259
      %2295 = vmatpush.bf16.msra.mxu0 %v2258
      %2296 = vmatpush.bf16.msra.mxu0 %v2257
      %2297 = vmatmul.bf16.gmra.mxu0 %v2151
      %v2298 = vpop.f32.mrf.mxu0
      %v2299 = vadd.f32 %v2191, %v2298
      %v2300 = vpop.f32.mrf.mxu0
      %v2301 = vadd.f32 %v2191, %v2300
      %2302 = vmatmul.bf16.gmra.mxu0 %v2153
      %v2303 = vpop.f32.mrf.mxu0
      %v2304 = vadd.f32 %v2191, %v2303
      %v2305 = vpop.f32.mrf.mxu0
      %v2306 = vadd.f32 %v2191, %v2305
      %2307 = vmatmul.bf16.gmra.mxu0 %v2155
      %v2308 = vpop.f32.mrf.mxu0
      %v2309 = vadd.f32 %v2191, %v2308
      %v2310 = vpop.f32.mrf.mxu0
      %v2311 = vadd.f32 %v2191, %v2310
      %2312 = vdwg.mxu0
      %2313 = vmatpush.bf16.msra.mxu0 %v2272
      %2314 = vmatpush.bf16.msra.mxu0 %v2271
      %2315 = vmatpush.bf16.msra.mxu0 %v2270
      %2316 = vmatpush.bf16.msra.mxu0 %v2269
      %2317 = vmatpush.bf16.msra.mxu0 %v2268
      %2318 = vmatpush.bf16.msra.mxu0 %v2267
      %2319 = vmatpush.bf16.msra.mxu0 %v2266
      %2320 = vmatpush.bf16.msra.mxu0 %v2265
      %2321 = vmatmul.bf16.gmra.mxu0 %v2152
      %v2322 = vpop.f32.mrf.mxu0
      %v2323 = vadd.f32 %v2299, %v2322
      %v2324 = vpop.f32.mrf.mxu0
      %v2325 = vadd.f32 %v2301, %v2324
      %2326 = vmatmul.bf16.gmra.mxu0 %v2154
      %v2327 = vpop.f32.mrf.mxu0
      %v2328 = vadd.f32 %v2304, %v2327
      %v2329 = vpop.f32.mrf.mxu0
      %v2330 = vadd.f32 %v2306, %v2329
      %2331 = vmatmul.bf16.gmra.mxu0 %v2156
      %v2332 = vpop.f32.mrf.mxu0
      %v2333 = vadd.f32 %v2309, %v2332
      %v2334 = vpop.f32.mrf.mxu0
      %v2335 = vadd.f32 %v2311, %v2334
      %2336 = vdwg.mxu0
      %v2337 = vadd.f32 %v1744, %v2323
      %v2338 = vadd.f32 %v1745, %v2325
      %v2339 = vadd.f32 %v1746, %v2328
      %v2340 = vadd.f32 %v1747, %v2330
      %v2341 = vadd.f32 %v1748, %v2333
      %v2342 = vadd.f32 %v1749, %v2335
      %2343 = vadd.xlane.f32.xlu0 %v2337
      %v2344 = vpop.xlane.xlu0 %2343
      %2345 = vadd.xlane.f32.xlu0 %v2338
      %v2346 = vpop.xlane.xlu0 %2345
      %2347 = vadd.xlane.f32.xlu0 %v2339
      %v2348 = vpop.xlane.xlu0 %2347
      %2349 = vadd.xlane.f32.xlu0 %v2340
      %v2350 = vpop.xlane.xlu0 %2349
      %2351 = vadd.xlane.f32.xlu0 %v2341
      %v2352 = vpop.xlane.xlu0 %2351
      %2353 = vadd.xlane.f32.xlu0 %v2342
      %v2354 = vpop.xlane.xlu0 %2353
      %v2355 = vmul.f32 %v2344, %v1026
      %v2356 = vmul.f32 %v2346, %v1026
      %v2357 = vmul.f32 %v2348, %v1026
      %v2358 = vmul.f32 %v2350, %v1026
      %v2359 = vmul.f32 %v2352, %v1026
      %v2360 = vmul.f32 %v2354, %v1026
      %v2361 = vsub.f32 %v2337, %v2355
      %v2362 = vsub.f32 %v2338, %v2356
      %v2363 = vsub.f32 %v2339, %v2357
      %v2364 = vsub.f32 %v2340, %v2358
      %v2365 = vsub.f32 %v2341, %v2359
      %v2366 = vsub.f32 %v2342, %v2360
      %v2367 = vmul.f32 %v2361, %v2361
      %v2368 = vmul.f32 %v2362, %v2362
      %v2369 = vmul.f32 %v2363, %v2363
      %v2370 = vmul.f32 %v2364, %v2364
      %v2371 = vmul.f32 %v2365, %v2365
      %v2372 = vmul.f32 %v2366, %v2366
      %2373 = vadd.xlane.f32.xlu0 %v2367
      %v2374 = vpop.xlane.xlu0 %2373
      %2375 = vadd.xlane.f32.xlu0 %v2368
      %v2376 = vpop.xlane.xlu0 %2375
      %2377 = vadd.xlane.f32.xlu0 %v2369
      %v2378 = vpop.xlane.xlu0 %2377
      %2379 = vadd.xlane.f32.xlu0 %v2370
      %v2380 = vpop.xlane.xlu0 %2379
      %2381 = vadd.xlane.f32.xlu0 %v2371
      %v2382 = vpop.xlane.xlu0 %2381
      %2383 = vadd.xlane.f32.xlu0 %v2372
      %v2384 = vpop.xlane.xlu0 %2383
      %v2385 = vmul.f32 %v2374, %v1026
      %v2386 = vmul.f32 %v2376, %v1026
      %v2387 = vmul.f32 %v2378, %v1026
      %v2388 = vmul.f32 %v2380, %v1026
      %v2389 = vmul.f32 %v2382, %v1026
      %v2390 = vmul.f32 %v2384, %v1026
      %v2391 = vadd.f32 %v2385, 1e-05
      %v2392 = vadd.f32 %v2386, 1e-05
      %v2393 = vadd.f32 %v2387, 1e-05
      %v2394 = vadd.f32 %v2388, 1e-05
      %v2395 = vadd.f32 %v2389, 1e-05
      %v2396 = vadd.f32 %v2390, 1e-05
      %v2397 = vrsqrt.pop %v2391
      %v2398 = vmul.f32 %v2397, %v2391
      %v2399 = vmul.f32 %v2398, %v2397
      %v2400 = vmul.f32 0.5, %v2399
      %v2401 = vsub.f32 1.5, %v2400
      %v2402 = vmul.f32 %v2397, %v2401
      %vm2403 = vweird.f32 %v2391
      %vm2404 = vweird.f32 %v2397
      %vm2405 = vmor %vm2403, %vm2404
      %v2406 = vsel %vm2405, %v2397, %v2402
      %v2407 = vrsqrt.pop %v2392
      %v2408 = vmul.f32 %v2407, %v2392
      %v2409 = vmul.f32 %v2408, %v2407
      %v2410 = vmul.f32 0.5, %v2409
      %v2411 = vsub.f32 1.5, %v2410
      %v2412 = vmul.f32 %v2407, %v2411
      %vm2413 = vweird.f32 %v2392
      %vm2414 = vweird.f32 %v2407
      %vm2415 = vmor %vm2413, %vm2414
      %v2416 = vsel %vm2415, %v2407, %v2412
      %v2417 = vrsqrt.pop %v2393
      %v2418 = vmul.f32 %v2417, %v2393
      %v2419 = vmul.f32 %v2418, %v2417
      %v2420 = vmul.f32 0.5, %v2419
      %v2421 = vsub.f32 1.5, %v2420
      %v2422 = vmul.f32 %v2417, %v2421
      %vm2423 = vweird.f32 %v2393
      %vm2424 = vweird.f32 %v2417
      %vm2425 = vmor %vm2423, %vm2424
      %v2426 = vsel %vm2425, %v2417, %v2422
      %v2427 = vrsqrt.pop %v2394
      %v2428 = vmul.f32 %v2427, %v2394
      %v2429 = vmul.f32 %v2428, %v2427
      %v2430 = vmul.f32 0.5, %v2429
      %v2431 = vsub.f32 1.5, %v2430
      %v2432 = vmul.f32 %v2427, %v2431
      %vm2433 = vweird.f32 %v2394
      %vm2434 = vweird.f32 %v2427
      %vm2435 = vmor %vm2433, %vm2434
      %v2436 = vsel %vm2435, %v2427, %v2432
      %v2437 = vrsqrt.pop %v2395
      %v2438 = vmul.f32 %v2437, %v2395
      %v2439 = vmul.f32 %v2438, %v2437
      %v2440 = vmul.f32 0.5, %v2439
      %v2441 = vsub.f32 1.5, %v2440
      %v2442 = vmul.f32 %v2437, %v2441
      %vm2443 = vweird.f32 %v2395
      %vm2444 = vweird.f32 %v2437
      %vm2445 = vmor %vm2443, %vm2444
      %v2446 = vsel %vm2445, %v2437, %v2442
      %v2447 = vrsqrt.pop %v2396
      %v2448 = vmul.f32 %v2447, %v2396
      %v2449 = vmul.f32 %v2448, %v2447
      %v2450 = vmul.f32 0.5, %v2449
      %v2451 = vsub.f32 1.5, %v2450
      %v2452 = vmul.f32 %v2447, %v2451
      %vm2453 = vweird.f32 %v2396
      %vm2454 = vweird.f32 %v2447
      %vm2455 = vmor %vm2453, %vm2454
      %v2456 = vsel %vm2455, %v2447, %v2452
      %v2457 = vmul.f32 %v2361, %v2406
      %v2458 = vmul.f32 %v2362, %v2416
      %v2459 = vmul.f32 %v2363, %v2426
      %v2460 = vmul.f32 %v2364, %v2436
      %v2461 = vmul.f32 %v2365, %v2446
      %v2462 = vmul.f32 %v2366, %v2456
      %v2463 = vld [vmem:[%s20] sm:$0x1]
      %v2465 = vperm.slane %v2463, 0
      %v2467 = vmul.f32 %v2457, %v2465
      %v2468 = vmul.f32 %v2458, %v2465
      %v2469 = vmul.f32 %v2459, %v2465
      %v2470 = vmul.f32 %v2460, %v2465
      %v2471 = vmul.f32 %v2461, %v2465
      %v2472 = vmul.f32 %v2462, %v2465
      %v2473 = vld [vmem:[%s21] sm:$0x1]
      %v2475 = vperm.slane %v2473, 0
      %v2477 = vadd.f32 %v2467, %v2475
      %v2478 = vadd.f32 %v2468, %v2475
      %v2479 = vadd.f32 %v2469, %v2475
      %v2480 = vadd.f32 %v2470, %v2475
      %v2481 = vadd.f32 %v2471, %v2475
      %v2482 = vadd.f32 %v2472, %v2475
      %v2483 = vpack.c.bf16 %v2478, %v2477
      %v2484 = vpack.c.bf16 %v2480, %v2479
      %v2485 = vpack.c.bf16 %v2482, %v2481
      %v2486 = vld [vmem:[%s22] sm:$0xf]
      %v2487 = vld [vmem:[%s22 + $0x4] sm:$0xf]
      %v2488 = vld [vmem:[%s22 + $0x8] sm:$0xf]
      %v2489 = vld [vmem:[%s22 + $0xc] sm:$0xf]
      %v2490 = vld [vmem:[%s22 + $0x10] sm:$0xf]
      %v2491 = vld [vmem:[%s22 + $0x14] sm:$0xf]
      %v2492 = vld [vmem:[%s22 + $0x18] sm:$0xf]
      %v2493 = vld [vmem:[%s22 + $0x1c] sm:$0xf]
      %v2494 = vld [vmem:[%s22 + $0x20] sm:$0xf]
      %v2495 = vld [vmem:[%s22 + $0x24] sm:$0xf]
      %v2496 = vld [vmem:[%s22 + $0x28] sm:$0xf]
      %v2497 = vld [vmem:[%s22 + $0x2c] sm:$0xf]
      %v2498 = vld [vmem:[%s22 + $0x30] sm:$0xf]
      %v2499 = vld [vmem:[%s22 + $0x34] sm:$0xf]
      %v2500 = vld [vmem:[%s22 + $0x38] sm:$0xf]
      %v2501 = vld [vmem:[%s22 + $0x3c] sm:$0xf]
      %v2502 = vld [vmem:[%s23] sm:$0x1]
      %v2504 = vperm.slane %v2502, 0
      %v2522 = vunpack.c.l.b16 %v2486
      %v2523 = vunpack.c.l.b16 %v2487
      %v2524 = vunpack.c.l.b16 %v2488
      %v2525 = vunpack.c.l.b16 %v2489
      %v2526 = vunpack.c.l.b16 %v2490
      %v2527 = vunpack.c.l.b16 %v2491
      %v2528 = vunpack.c.l.b16 %v2492
      %v2529 = vunpack.c.l.b16 %v2493
      %v2530 = vunpack.c.l.b16 %v2494
      %v2531 = vunpack.c.l.b16 %v2495
      %v2532 = vunpack.c.l.b16 %v2496
      %v2533 = vunpack.c.l.b16 %v2497
      %v2534 = vunpack.c.l.b16 %v2498
      %v2535 = vunpack.c.l.b16 %v2499
      %v2536 = vunpack.c.l.b16 %v2500
      %v2537 = vunpack.c.l.b16 %v2501
      %v2538 = vpack.c.b16 %v2523, %v2522
      %v2539 = vpack.c.b16 %v2525, %v2524
      %v2540 = vpack.c.b16 %v2527, %v2526
      %v2541 = vpack.c.b16 %v2529, %v2528
      %v2542 = vpack.c.b16 %v2531, %v2530
      %v2543 = vpack.c.b16 %v2533, %v2532
      %v2544 = vpack.c.b16 %v2535, %v2534
      %v2545 = vpack.c.b16 %v2537, %v2536
      %2554 = vmatpush.bf16.msra.mxu0 %v2545
      %2555 = vmatpush.bf16.msra.mxu0 %v2544
      %2556 = vmatpush.bf16.msra.mxu0 %v2543
      %2557 = vmatpush.bf16.msra.mxu0 %v2542
      %2558 = vmatpush.bf16.msra.mxu0 %v2541
      %2559 = vmatpush.bf16.msra.mxu0 %v2540
      %2560 = vmatpush.bf16.msra.mxu0 %v2539
      %2561 = vmatpush.bf16.msra.mxu0 %v2538
      %2562 = vmatmul.bf16.gmra.mxu0 %v2483
      %v2563 = vpop.f32.mrf.mxu0
      %v2564 = vadd.f32 %v2504, %v2563
      %v2565 = vpop.f32.mrf.mxu0
      %v2566 = vadd.f32 %v2504, %v2565
      %2567 = vmatmul.bf16.gmra.mxu0 %v2484
      %v2568 = vpop.f32.mrf.mxu0
      %v2569 = vadd.f32 %v2504, %v2568
      %v2570 = vpop.f32.mrf.mxu0
      %v2571 = vadd.f32 %v2504, %v2570
      %2572 = vmatmul.bf16.gmra.mxu0 %v2485
      %v2573 = vpop.f32.mrf.mxu0
      %v2574 = vadd.f32 %v2504, %v2573
      %v2575 = vpop.f32.mrf.mxu0
      %v2576 = vadd.f32 %v2504, %v2575
      %2577 = vdwg.mxu0
      %2578 = vst [vmem:[%s824] sm:$0xff] %v2564
      %2579 = vst [vmem:[%s824 + $0x8] sm:$0xff] %v2566
      %2580 = vst [vmem:[%s824 + $0x10] sm:$0xff] %v2569
      %2581 = vst [vmem:[%s824 + $0x18] sm:$0xff] %v2571
      %2582 = vst [vmem:[%s824 + $0x20] sm:$0xff] %v2574
      %2583 = vst [vmem:[%s824 + $0x28] sm:$0xff] %v2576
      %2584 = vmax.xlane.f32.xlu0 %v2564
      %v2585 = vpop.xlane.xlu0 %2584
      %2586 = vmax.xlane.f32.xlu0 %v2566
      %v2587 = vpop.xlane.xlu0 %2586
      %2588 = vmax.xlane.f32.xlu0 %v2569
      %v2589 = vpop.xlane.xlu0 %2588
      %2590 = vmax.xlane.f32.xlu0 %v2571
      %v2591 = vpop.xlane.xlu0 %2590
      %2592 = vmax.xlane.f32.xlu0 %v2574
      %v2593 = vpop.xlane.xlu0 %2592
      %2594 = vmax.xlane.f32.xlu0 %v2576
      %v2595 = vpop.xlane.xlu0 %2594
      %v2596 = vsub.f32 %v2564, %v2585
      %v2597 = vsub.f32 %v2566, %v2587
      %v2598 = vsub.f32 %v2569, %v2589
      %v2599 = vsub.f32 %v2571, %v2591
      %v2600 = vsub.f32 %v2574, %v2593
      %v2601 = vsub.f32 %v2576, %v2595
      %v2602 = vmul.f32 %v2596, 1.442695
      %v2603 = vpow.pop %v2602
      %v2604 = vmul.f32 %v2597, 1.442695
      %v2605 = vpow.pop %v2604
      %v2606 = vmul.f32 %v2598, 1.442695
      %v2607 = vpow.pop %v2606
      %v2608 = vmul.f32 %v2599, 1.442695
      %v2609 = vpow.pop %v2608
      %v2610 = vmul.f32 %v2600, 1.442695
      %v2611 = vpow.pop %v2610
      %v2612 = vmul.f32 %v2601, 1.442695
      %v2613 = vpow.pop %v2612
      %2614 = vadd.xlane.f32.xlu0 %v2603
      %v2615 = vpop.xlane.xlu0 %2614
      %2616 = vadd.xlane.f32.xlu0 %v2605
      %v2617 = vpop.xlane.xlu0 %2616
      %2618 = vadd.xlane.f32.xlu0 %v2607
      %v2619 = vpop.xlane.xlu0 %2618
      %2620 = vadd.xlane.f32.xlu0 %v2609
      %v2621 = vpop.xlane.xlu0 %2620
      %2622 = vadd.xlane.f32.xlu0 %v2611
      %v2623 = vpop.xlane.xlu0 %2622
      %2624 = vadd.xlane.f32.xlu0 %v2613
      %v2625 = vpop.xlane.xlu0 %2624
      %v2626 = vlog2.pop %v2615
      %v2627 = vmul.f32 %v2626, 0.6931472
      %v2628 = vlog2.pop %v2617
      %v2629 = vmul.f32 %v2628, 0.6931472
      %v2630 = vlog2.pop %v2619
      %v2631 = vmul.f32 %v2630, 0.6931472
      %v2632 = vlog2.pop %v2621
      %v2633 = vmul.f32 %v2632, 0.6931472
      %v2634 = vlog2.pop %v2623
      %v2635 = vmul.f32 %v2634, 0.6931472
      %v2636 = vlog2.pop %v2625
      %v2637 = vmul.f32 %v2636, 0.6931472
      %v2638 = vadd.f32 %v2585, %v2627
      %v2639 = vadd.f32 %v2587, %v2629
      %v2640 = vadd.f32 %v2589, %v2631
      %v2641 = vadd.f32 %v2591, %v2633
      %v2642 = vadd.f32 %v2593, %v2635
      %v2643 = vadd.f32 %v2595, %v2637
      %v2644 = vld [vmem:[%s819] sm:$0xff]
      %v2645 = vld [vmem:[%s819 + $0x8] sm:$0xff]
      %v2646 = vld [vmem:[%s819 + $0x10] sm:$0xff]
      %v2647 = vld [vmem:[%s819 + $0x18] sm:$0xff]
      %v2648 = vld [vmem:[%s819 + $0x20] sm:$0xff]
      %v2649 = vld [vmem:[%s819 + $0x28] sm:$0xff]
      %v2650 = vsub.f32 %v2638, %v2564
      %v2651 = vsub.f32 %v2639, %v2566
      %v2652 = vsub.f32 %v2640, %v2569
      %v2653 = vsub.f32 %v2641, %v2571
      %v2654 = vsub.f32 %v2642, %v2574
      %v2655 = vsub.f32 %v2643, %v2576
      %v2656 = vmul.f32 %v2644, %v2650
      %v2657 = vmul.f32 %v2645, %v2651
      %v2658 = vmul.f32 %v2646, %v2652
      %v2659 = vmul.f32 %v2647, %v2653
      %v2660 = vmul.f32 %v2648, %v2654
      %v2661 = vmul.f32 %v2649, %v2655
      %v2662 = vadd.f32 %v2656, %v2657
      %v2663 = vadd.f32 %v2662, %v2658
      %v2664 = vadd.f32 %v2663, %v2659
      %v2665 = vadd.f32 %v2664, %v2660
      %v2666 = vadd.f32 %v2665, %v2661
      %2667 = vadd.xlane.f32.xlu0 %v2666
      %v2668 = vpop.xlane.xlu0 %2667
      %v2669 = vrot.slane %v2668, 4
      %v2670 = vadd.f32 %v2668, %v2669
      %v2671 = vrot.slane %v2670, 2
      %v2672 = vadd.f32 %v2670, %v2671
      %v2673 = vrot.slane %v2672, 1
      %v2674 = vadd.f32 %v2672, %v2673
      %s2675 = vtos %v2674
      %v2676 = vstv %s2675
      %2677 = vst [vmem:[%s827] sm:$0x1] %v2676
      %p2678 = scmp.lt.s32.totalorder %s37, 1
      %s2679 = scalar_select %p2678, %s37, 1
      %s2680 = smul.addr %s2679, 6
      %s2681 = smul.addr %s2680, 8
      %s2682 = scalar_lea.vmem %s24, %s2681
      %p2683 = scmp.lt.s32.totalorder %s37, 1
      %s2684 = scalar_select %p2683, %s37, 1
      %s2685 = scalar_lea.vmem %s25, %s2684
      // Predicated region
      $region117: #{multimodal_forward.1} parent=115 // pred_check
        %p2686 = pneg %p579
      $region118: #{multimodal_forward.1} parent=115 // pred_check_branch
        %2688 = sbr.rel (%p2686) target = $region120
      $region119: #{multimodal_forward.1} parent=115 // pred_region
        _
      $region120: #{multimodal_forward.1} parent=115 // pred_fallthru
        _
      // Predicated region
      $region121: #{multimodal_forward.1} parent=115 // pred_check
        %p2689 = pneg %p605
      $region122: #{multimodal_forward.1} parent=115 // pred_check_branch
        %2691 = sbr.rel (%p2689) target = $region124
      $region123: #{multimodal_forward.1} parent=115 // pred_region
        _
      $region124: #{multimodal_forward.1} parent=115 // pred_fallthru
        _
    $region116: #{multimodal_forward.1} parent=5 // pred_fallthru
      _
    %p2692 = scmp.le.s32.totalorder 2, %s32
    // Predicated region
    $region125: #{multimodal_forward.1} parent=5 // pred_check
      %p2693 = pneg %p2692
    $region126: #{multimodal_forward.1} parent=5 // pred_check_branch
      %2695 = sbr.rel (%p2693) target = $region128
    $region127: #{multimodal_forward.1} parent=5 // pred_region
      %s2696 = ssub.s32 %s32, 2
      // Predicated region
      $region129: #{multimodal_forward.1} parent=127 // pred_check
        %p2697 = pneg %p585
      $region130: #{multimodal_forward.1} parent=127 // pred_check_branch
        %2699 = sbr.rel (%p2697) target = $region132
      $region131: #{multimodal_forward.1} parent=127 // pred_region
        %p2700 = scmp.lt.s32.totalorder %s38, 1
        %s2701 = scalar_select %p2700, %s38, 1
        %s2702 = smul.addr %s2701, 6
        %s2703 = smul.addr %s2702, 8
        %s2704 = scalar_lea.vmem %s24, %s2703
      $region132: #{multimodal_forward.1} parent=127 // pred_fallthru
        _
      // Predicated region
      $region133: #{multimodal_forward.1} parent=127 // pred_check
        %p2705 = pneg %p611
      $region134: #{multimodal_forward.1} parent=127 // pred_check_branch
        %2707 = sbr.rel (%p2705) target = $region136
      $region135: #{multimodal_forward.1} parent=127 // pred_region
        %p2708 = scmp.lt.s32.totalorder %s38, 1
        %s2709 = scalar_select %p2708, %s38, 1
        %s2710 = scalar_lea.vmem %s25, %s2709
      $region136: #{multimodal_forward.1} parent=127 // pred_fallthru
        _
    $region128: #{multimodal_forward.1} parent=5 // pred_fallthru
      _
  $region6: #{multimodal_forward.1} parent=0 // loop_footer
    %s36 = sadd.s32 1, %s32
  $region7: #{multimodal_forward.1} parent=0 // loop_footer_branch
    %31 = sbr.rel target = $region3
  $region8: #{multimodal_forward.1} parent=0 // loop_exit
    _

</llo_original>
